<compile_context>
chip_gen: v6e
topology: v6e:2x2x1
jax: 0.10.0
libtpu: 0.0.40
codegen_flags: <defaults>
</compile_context>

<pallas_src>
import functools

import jax
import jax.numpy as jnp
from jax.experimental import pallas as pl
from jax.experimental.pallas import tpu as pltpu


_TM = 512                       # row tile (sublane axis); multiple of 16 for bf16 tiles
_LANE = 128                     # lane width: Cout and K padded to multiples of this
_EPS = 1e-5
_NEG_SLOPE = 0.2
_Y_SCRATCH_BUDGET = 8 * 1024 * 1024   # max bytes of resident f32 conv-output scratch


def _round_up(x, m):
    return (x + m - 1) // m * m


# ---------------------------------------------------------------------------
# Kernels
# ---------------------------------------------------------------------------
def _fused_conv_bn_act_kernel(p_ref, w_ref, gamma_ref, beta_ref, o_ref,
                              y_scr, sum_scr, ssq_scr, scale_scr, shift_scr,
                              *, nrows, eps, neg_slope, activate):
    """Whole normalized layer in one call; grid = (phase, row_tile).

    phase 0: y = patches @ W (f32), kept resident in y_scr; accumulate
             per-channel sum / sum-of-squares into VMEM scratch.
    phase 1, tile 0: finalize batch stats (biased variance) and fold the BN
             affine into a per-channel scale/shift.
    phase 1: apply scale/shift + LeakyReLU to the resident f32 tiles, store.
    """
    phase = pl.program_id(0)
    i = pl.program_id(1)

    @pl.when(phase == 0)
    def _matmul_and_stats():
        @pl.when(i == 0)
        def _init():
            sum_scr[...] = jnp.zeros_like(sum_scr)
            ssq_scr[...] = jnp.zeros_like(ssq_scr)

        y = jnp.dot(p_ref[...], w_ref[...], preferred_element_type=jnp.float32)
        y_scr[i] = y
        sum_scr[...] += jnp.sum(y, axis=0, keepdims=True)
        ssq_scr[...] += jnp.sum(y * y, axis=0, keepdims=True)

    @pl.when(jnp.logical_and(phase == 1, i == 0))
    def _finalize_stats():
        # Training-mode batch stats, biased variance.  E[x^2]-E[x]^2 in f32 is
        # an accepted tolerance for this discriminator.
        inv_n = 1.0 / nrows
        mean = sum_scr[...] * inv_n
        var = jnp.maximum(ssq_scr[...] * inv_n - mean * mean, 0.0)
        scale = gamma_ref[...] * jax.lax.rsqrt(var + eps)
        scale_scr[...] = scale
        shift_scr[...] = beta_ref[...] - mean * scale

    @pl.when(phase == 1)
    def _normalize_activate():
        x = y_scr[i] * scale_scr[...] + shift_scr[...]
        if activate:
            x = jnp.where(x > 0, x, neg_slope * x)
        o_ref[...] = x.astype(o_ref.dtype)


def _matmul_bias_act_kernel(p_ref, w_ref, b_ref, o_ref, *, activate, neg_slope):
    """Un-normalized layer: matmul + bias (+ LeakyReLU)."""
    y = jnp.dot(p_ref[...], w_ref[...], preferred_element_type=jnp.float32)
    y = y + b_ref[...]
    if activate:
        y = jnp.where(y > 0, y, neg_slope * y)
    o_ref[...] = y.astype(o_ref.dtype)


def _matmul_stats_kernel(p_ref, w_ref, y_ref, sum_ref, ssq_ref):
    """Fallback (large R) pass 1: matmul + per-channel sum/ssq through HBM."""
    i = pl.program_id(0)
    y = jnp.dot(p_ref[...], w_ref[...], preferred_element_type=jnp.float32)
    y_ref[...] = y.astype(y_ref.dtype)

    @pl.when(i == 0)
    def _init():
        sum_ref[...] = jnp.zeros_like(sum_ref)
        ssq_ref[...] = jnp.zeros_like(ssq_ref)

    sum_ref[...] += jnp.sum(y, axis=0, keepdims=True)
    ssq_ref[...] += jnp.sum(y * y, axis=0, keepdims=True)


def _bn_affine_act_kernel(y_ref, scale_ref, shift_ref, o_ref, *, activate,
                          neg_slope):
    """Fallback (large R) pass 2: pre-folded BN affine + LeakyReLU."""
    x = y_ref[...].astype(jnp.float32) * scale_ref[...] + shift_ref[...]
    if activate:
        x = jnp.where(x > 0, x, neg_slope * x)
    o_ref[...] = x.astype(o_ref.dtype)


# ---------------------------------------------------------------------------
# JAX-side glue
# ---------------------------------------------------------------------------
def _im2col_nhwc(x, stride):
    """x: (N, H, W, C) -> (N*Ho*Wo, 16*C); feature order (kh, kw, C). 4x4, pad=1."""
    N, H, W, C = x.shape
    xp = jnp.pad(x, ((0, 0), (1, 1), (1, 1), (0, 0)))
    Hp, Wp = H + 2, W + 2
    Ho = (Hp - 4) // stride + 1
    Wo = (Wp - 4) // stride + 1
    cols = []
    for kh in range(4):
        for kw in range(4):
            sl = xp[:, kh: kh + stride * (Ho - 1) + 1: stride,
                       kw: kw + stride * (Wo - 1) + 1: stride, :]
            cols.append(sl)
    patches = jnp.concatenate(cols, axis=-1)                    # (N, Ho, Wo, 16*C)
    return patches.reshape(N * Ho * Wo, 16 * C), Ho, Wo


def conv_layer(x_nhwc, w, b, gamma, beta, *, stride, normalize, activate,
               out_dtype=jnp.bfloat16, eps=_EPS, neg_slope=_NEG_SLOPE):
    N = x_nhwc.shape[0]
    Cout = w.shape[0]
    Cpad = _round_up(Cout, _LANE)

    patches, Ho, Wo = _im2col_nhwc(x_nhwc, stride)
    R, K = patches.shape
    Kpad = _round_up(K, _LANE)

    tm = min(_TM, _round_up(R, 16))
    Rpad = _round_up(R, tm)
    nt = Rpad // tm
    if Rpad != R or Kpad != K:
        patches = jnp.pad(patches, ((0, Rpad - R), (0, Kpad - K)))  # zero rows/cols: inert
    patches = patches.astype(jnp.bfloat16)

    # PyTorch weight (Cout, Cin, kh, kw) -> rows ordered (kh, kw, Cin);
    # zero-padded to (Kpad, Cpad) so loads/stores are lane-dense.
    wmat = jnp.transpose(w, (2, 3, 1, 0)).reshape(K, Cout)
    wmat = jnp.pad(wmat, ((0, Kpad - K), (0, Cpad - Cout))).astype(jnp.bfloat16)

    if normalize:
        # Conv bias dropped: exactly cancelled by the batch-mean subtraction.
        gamma_p = jnp.pad(gamma.reshape(1, Cout).astype(jnp.float32),
                          ((0, 0), (0, Cpad - Cout)))
        beta_p = jnp.pad(beta.reshape(1, Cout).astype(jnp.float32),
                         ((0, 0), (0, Cpad - Cout)))

        if Rpad * Cpad * 4 <= _Y_SCRATCH_BUDGET:
            # Fused single-call path: the f32 conv output stays resident in VMEM.
            p_spec = pl.BlockSpec(
                (tm, Kpad), lambda p, i: (i * (1 - p) + (nt - 1) * p, 0))
            w_spec = pl.BlockSpec((Kpad, Cpad), lambda p, i: (0, 0))
            row_spec = pl.BlockSpec((1, Cpad), lambda p, i: (0, 0))
            o_spec = pl.BlockSpec((tm, Cpad), lambda p, i: (i * p, 0))
            out = pl.pallas_call(
                functools.partial(_fused_conv_bn_act_kernel, nrows=R, eps=eps,
                                  neg_slope=neg_slope, activate=activate),
                out_shape=jax.ShapeDtypeStruct((Rpad, Cpad), out_dtype),
                grid=(2, nt),
                in_specs=[p_spec, w_spec, row_spec, row_spec],
                out_specs=o_spec,
                scratch_shapes=[
                    pltpu.VMEM((nt, tm, Cpad), jnp.float32),   # resident conv out
                    pltpu.VMEM((1, Cpad), jnp.float32),        # sum
                    pltpu.VMEM((1, Cpad), jnp.float32),        # sum of squares
                    pltpu.VMEM((1, Cpad), jnp.float32),        # folded scale
                    pltpu.VMEM((1, Cpad), jnp.float32),        # folded shift
                ],
                compiler_params=pltpu.CompilerParams(
                    dimension_semantics=("arbitrary", "arbitrary")),
            )(patches, wmat, gamma_p, beta_p)
        else:
            # Fallback for very large R: two passes bouncing y through HBM.
            p_spec = pl.BlockSpec((tm, Kpad), lambda i: (i, 0))
            w_spec = pl.BlockSpec((Kpad, Cpad), lambda i: (0, 0))
            t_spec = pl.BlockSpec((tm, Cpad), lambda i: (i, 0))
            row_spec = pl.BlockSpec((1, Cpad), lambda i: (0, 0))
            y, csum, cssq = pl.pallas_call(
                _matmul_stats_kernel,
                out_shape=(jax.ShapeDtypeStruct((Rpad, Cpad), jnp.bfloat16),
                           jax.ShapeDtypeStruct((1, Cpad), jnp.float32),
                           jax.ShapeDtypeStruct((1, Cpad), jnp.float32)),
                grid=(nt,),
                in_specs=[p_spec, w_spec],
                out_specs=(t_spec, row_spec, row_spec),
                compiler_params=pltpu.CompilerParams(
                    dimension_semantics=("arbitrary",)),
            )(patches, wmat)
            mean = csum / R
            var = jnp.maximum(cssq / R - jnp.square(mean), 0.0)
            scale = gamma_p * jax.lax.rsqrt(var + eps)
            shift = beta_p - mean * scale
            out = pl.pallas_call(
                functools.partial(_bn_affine_act_kernel, activate=activate,
                                  neg_slope=neg_slope),
                out_shape=jax.ShapeDtypeStruct((Rpad, Cpad), out_dtype),
                grid=(nt,),
                in_specs=[t_spec, row_spec, row_spec],
                out_specs=t_spec,
                compiler_params=pltpu.CompilerParams(
                    dimension_semantics=("parallel",)),
            )(y, scale, shift)
    else:
        p_spec = pl.BlockSpec((tm, Kpad), lambda i: (i, 0))
        w_spec = pl.BlockSpec((Kpad, Cpad), lambda i: (0, 0))
        t_spec = pl.BlockSpec((tm, Cpad), lambda i: (i, 0))
        row_spec = pl.BlockSpec((1, Cpad), lambda i: (0, 0))
        bmat = jnp.pad(b.reshape(1, Cout).astype(jnp.float32),
                       ((0, 0), (0, Cpad - Cout)))
        out = pl.pallas_call(
            functools.partial(_matmul_bias_act_kernel, activate=activate,
                              neg_slope=neg_slope),
            out_shape=jax.ShapeDtypeStruct((Rpad, Cpad), out_dtype),
            grid=(nt,),
            in_specs=[p_spec, w_spec, row_spec],
            out_specs=t_spec,
            compiler_params=pltpu.CompilerParams(
                dimension_semantics=("parallel",)),
        )(patches, wmat, bmat)

    return out[:R, :Cout].reshape(N, Ho, Wo, Cout)


def init_params(key, input_nc=3, ndf=8, n_layers=3):
    """Deterministic synthetic parameters mirroring the PyTorch module shapes."""
    cfg = [(input_nc, ndf, 2, False, True)]                     # first block, no norm
    nf_mult = 1
    for n in range(1, n_layers):
        nf_prev, nf_mult = nf_mult, min(2 ** n, 8)
        cfg.append((ndf * nf_prev, ndf * nf_mult, 2, True, True))
    nf_prev, nf_mult = nf_mult, min(2 ** n_layers, 8)
    cfg.append((ndf * nf_prev, ndf * nf_mult, 1, True, True))   # stride-1 block
    cfg.append((ndf * nf_mult, 1, 1, False, False))             # final Conv2d -> 1 channel
    # use_sigmoid=False by default -> no sigmoid at the end.

    params = []
    for (cin, cout, stride, norm, act) in cfg:
        key, kw, kb = jax.random.split(key, 3)
        fan_in = cin * 4 * 4
        bound = 1.0 / (fan_in ** 0.5)
        params.append(dict(
            w=jax.random.uniform(kw, (cout, cin, 4, 4), jnp.float32, -bound, bound),
            b=jax.random.uniform(kb, (cout,), jnp.float32, -bound, bound),
            gamma=jnp.ones((cout,), jnp.float32),
            beta=jnp.zeros((cout,), jnp.float32),
            stride=stride, normalize=norm, activate=act))
    return params


def patchgan_forward(x_nchw, params):
    # Activations carried channel-last in bf16 between layers (intentional
    # tolerance vs. a float32 PyTorch reference).
    x = jnp.transpose(x_nchw, (0, 2, 3, 1)).astype(jnp.bfloat16)   # NCHW -> NHWC once
    for li, p in enumerate(params):
        last = li == len(params) - 1
        x = conv_layer(x, p['w'], p['b'], p['gamma'], p['beta'],
                       stride=p['stride'], normalize=p['normalize'],
                       activate=p['activate'],
                       out_dtype=jnp.float32 if last else jnp.bfloat16)
    return jnp.transpose(x, (0, 3, 1, 2))                          # NHWC -> NCHW at exit


if __name__ == "__main__":
    key = jax.random.PRNGKey(0)
    kx, kp = jax.random.split(key)

    # Small but architecture-consistent sizes: input_nc=3, ndf=8, n_layers=3.
    # 32x32 input -> spatial path 32 -> 16 -> 8 -> 4 -> 3 -> 2.
    x = jax.random.normal(kx, (2, 3, 32, 32), jnp.float32)
    params = init_params(kp, input_nc=3, ndf=8, n_layers=3)

    fwd = jax.jit(lambda inp: patchgan_forward(inp, params))
    out = jax.block_until_ready(fwd(x))
    assert out.shape == (2, 1, 2, 2), out.shape
    assert out.dtype == jnp.float32, out.dtype
    print("KERNEL_OK")
</pallas_src>

<mosaic_0001>
module attributes {stable_mosaic.version = 11 : i64} {
  func.func @_matmul_bias_act_kernel(%arg0: i32, %arg1: memref<512x128xbf16, #tpu.memory_space<vmem>>, %arg2: memref<128x128xbf16, #tpu.memory_space<vmem>>, %arg3: memref<1x128xf32, #tpu.memory_space<vmem>>, %arg4: memref<512x128xbf16, #tpu.memory_space<vmem>>) attributes {dimension_semantics = [#tpu.dimension_semantics<parallel>], iteration_bounds = array<i64: 1>, scalar_prefetch = 0 : i64, scratch_operands = 0 : i64, tpu.core_type = #tpu.core_type<tc>, window_params = [{transform_indices = @transform_0, window_bounds = array<i64: 512, 128>}, {pipeline_mode = #tpu.pipeline_mode<synchronous>, transform_indices = @transform_1, window_bounds = array<i64: 128, 128>}, {pipeline_mode = #tpu.pipeline_mode<synchronous>, transform_indices = @transform_2, window_bounds = array<i64: 1, 128>}, {transform_indices = @transform_3, window_bounds = array<i64: 512, 128>}]} {
    %c0 = arith.constant 0 : index
    %c0_0 = arith.constant 0 : index
    %0 = vector.load %arg1[%c0, %c0_0] : memref<512x128xbf16, #tpu.memory_space<vmem>>, vector<512x128xbf16>
    %c0_1 = arith.constant 0 : index
    %c0_2 = arith.constant 0 : index
    %1 = vector.load %arg2[%c0_1, %c0_2] : memref<128x128xbf16, #tpu.memory_space<vmem>>, vector<128x128xbf16>
    %cst = arith.constant dense<0.000000e+00> : vector<512x128xf32>
    %2 = tpu.matmul %0, %1, %cst {dimension_numbers = #tpu.dot_dimension_numbers<[1], [0], [0], [1], [0, 0, 1, 1], [], []>} : vector<512x128xbf16>, vector<128x128xbf16>, vector<512x128xf32> -> vector<512x128xf32>
    %c0_3 = arith.constant 0 : index
    %c0_4 = arith.constant 0 : index
    %3 = vector.load %arg3[%c0_3, %c0_4] : memref<1x128xf32, #tpu.memory_space<vmem>>, vector<1x128xf32>
    %4 = vector.broadcast %3 : vector<1x128xf32> to vector<512x128xf32>
    %5 = arith.addf %2, %4 : vector<512x128xf32>
    %cst_5 = arith.constant 0.000000e+00 : f32
    %6 = vector.broadcast %cst_5 : f32 to vector<512x128xf32>
    %7 = arith.cmpf ogt, %5, %6 : vector<512x128xf32>
    %cst_6 = arith.constant 2.000000e-01 : f32
    %8 = vector.broadcast %cst_6 : f32 to vector<512x128xf32>
    %9 = arith.mulf %8, %5 : vector<512x128xf32>
    %10 = arith.select %7, %5, %9 : vector<512x128xi1>, vector<512x128xf32>
    %11 = arith.truncf %10 : vector<512x128xf32> to vector<512x128xbf16>
    %c0_7 = arith.constant 0 : index
    %c0_8 = arith.constant 0 : index
    %12 = vector.load %arg4[%c0_7, %c0_8] : memref<512x128xbf16, #tpu.memory_space<vmem>>, vector<512x128xbf16>
    tpu.vector_store %arg4[%c0_7, %c0_8], %11 {strides = array<i32>} : memref<512x128xbf16, #tpu.memory_space<vmem>>, vector<512x128xbf16>,
    return
  }
  func.func @transform_0(%arg0: i32) -> (i32, i32) {
    %c0_i32 = arith.constant 0 : i32
    %c0_i32_0 = arith.constant 0 : i32
    return %arg0, %c0_i32 : i32, i32
  }
  func.func @transform_1(%arg0: i32) -> (i32, i32) {
    %c0_i32 = arith.constant 0 : i32
    %c0_i32_0 = arith.constant 0 : i32
    %c0_i32_1 = arith.constant 0 : i32
    return %c0_i32, %c0_i32_0 : i32, i32
  }
  func.func @transform_2(%arg0: i32) -> (i32, i32) {
    %c0_i32 = arith.constant 0 : i32
    %c0_i32_0 = arith.constant 0 : i32
    %c0_i32_1 = arith.constant 0 : i32
    return %c0_i32, %c0_i32_0 : i32, i32
  }
  func.func @transform_3(%arg0: i32) -> (i32, i32) {
    %c0_i32 = arith.constant 0 : i32
    %c0_i32_0 = arith.constant 0 : i32
    return %arg0, %c0_i32 : i32, i32
  }
}

module attributes {stable_mosaic.version = 11 : i64} {
  func.func @_fused_conv_bn_act_kernel(%arg0: i32, %arg1: i32, %arg2: memref<128x128xbf16, #tpu.memory_space<vmem>>, %arg3: memref<128x128xbf16, #tpu.memory_space<vmem>>, %arg4: memref<1x128xf32, #tpu.memory_space<vmem>>, %arg5: memref<1x128xf32, #tpu.memory_space<vmem>>, %arg6: memref<128x128xbf16, #tpu.memory_space<vmem>>, %arg7: memref<1x128x128xf32, #tpu.memory_space<vmem>>, %arg8: memref<1x128xf32, #tpu.memory_space<vmem>>, %arg9: memref<1x128xf32, #tpu.memory_space<vmem>>, %arg10: memref<1x128xf32, #tpu.memory_space<vmem>>, %arg11: memref<1x128xf32, #tpu.memory_space<vmem>>) attributes {dimension_semantics = [#tpu.dimension_semantics<arbitrary>, #tpu.dimension_semantics<arbitrary>], iteration_bounds = array<i64: 2, 1>, scalar_prefetch = 0 : i64, scratch_operands = 5 : i64, tpu.core_type = #tpu.core_type<tc>, window_params = [{transform_indices = @transform_0, window_bounds = array<i64: 128, 128>}, {pipeline_mode = #tpu.pipeline_mode<synchronous>, transform_indices = @transform_1, window_bounds = array<i64: 128, 128>}, {pipeline_mode = #tpu.pipeline_mode<synchronous>, transform_indices = @transform_2, window_bounds = array<i64: 1, 128>}, {pipeline_mode = #tpu.pipeline_mode<synchronous>, transform_indices = @transform_3, window_bounds = array<i64: 1, 128>}, {transform_indices = @transform_4, window_bounds = array<i64: 128, 128>}]} {
    %c0_i32 = arith.constant 0 : i32
    %0 = arith.cmpi eq, %arg0, %c0_i32 : i32
    %1 = arith.extui %0 : i1 to i32
    %c0_i32_0 = arith.constant 0 : i32
    %2 = arith.cmpi ne, %1, %c0_i32_0 : i32
    scf.if %2 {
      %c0_i32_5 = arith.constant 0 : i32
      %11 = arith.cmpi eq, %arg1, %c0_i32_5 : i32
      %12 = arith.extui %11 : i1 to i32
      %c0_i32_6 = arith.constant 0 : i32
      %13 = arith.cmpi ne, %12, %c0_i32_6 : i32
      scf.if %13 {
        %cst_22 = arith.constant 0.000000e+00 : f32
        %32 = vector.broadcast %cst_22 : f32 to vector<1x128xf32>
        %c0_23 = arith.constant 0 : index
        %c0_24 = arith.constant 0 : index
        %33 = vector.load %arg8[%c0_23, %c0_24] : memref<1x128xf32, #tpu.memory_space<vmem>>, vector<1x128xf32>
        tpu.vector_store %arg8[%c0_23, %c0_24], %32 {strides = array<i32>} : memref<1x128xf32, #tpu.memory_space<vmem>>, vector<1x128xf32>,
        %cst_25 = arith.constant 0.000000e+00 : f32
        %34 = vector.broadcast %cst_25 : f32 to vector<1x128xf32>
        %c0_26 = arith.constant 0 : index
        %c0_27 = arith.constant 0 : index
        %35 = vector.load %arg9[%c0_26, %c0_27] : memref<1x128xf32, #tpu.memory_space<vmem>>, vector<1x128xf32>
        tpu.vector_store %arg9[%c0_26, %c0_27], %34 {strides = array<i32>} : memref<1x128xf32, #tpu.memory_space<vmem>>, vector<1x128xf32>,
      } else {
      }
      %c0 = arith.constant 0 : index
      %c0_7 = arith.constant 0 : index
      %14 = vector.load %arg2[%c0, %c0_7] : memref<128x128xbf16, #tpu.memory_space<vmem>>, vector<128x128xbf16>
      %c0_8 = arith.constant 0 : index
      %c0_9 = arith.constant 0 : index
      %15 = vector.load %arg3[%c0_8, %c0_9] : memref<128x128xbf16, #tpu.memory_space<vmem>>, vector<128x128xbf16>
      %cst = arith.constant dense<0.000000e+00> : vector<128x128xf32>
      %16 = tpu.matmul %14, %15, %cst {dimension_numbers = #tpu.dot_dimension_numbers<[1], [0], [0], [1], [0, 0, 1, 1], [], []>} : vector<128x128xbf16>, vector<128x128xbf16>, vector<128x128xf32> -> vector<128x128xf32>
      %17 = arith.index_cast %arg1 : i32 to index
      %c0_10 = arith.constant 0 : index
      %c0_11 = arith.constant 0 : index
      %18 = vector.load %arg7[%17, %c0_10, %c0_11] : memref<1x128x128xf32, #tpu.memory_space<vmem>>, vector<1x128x128xf32>
      %19 = vector.shape_cast %18 : vector<1x128x128xf32> to vector<128x128xf32>
      %20 = vector.shape_cast %16 : vector<128x128xf32> to vector<1x128x128xf32>
      tpu.vector_store %arg7[%17, %c0_10, %c0_11], %20 {strides = array<i32>} : memref<1x128x128xf32, #tpu.memory_space<vmem>>, vector<1x128x128xf32>,
      %c0_12 = arith.constant 0 : index
      %c0_13 = arith.constant 0 : index
      %21 = vector.load %arg8[%c0_12, %c0_13] : memref<1x128xf32, #tpu.memory_space<vmem>>, vector<1x128xf32>
      %cst_14 = arith.constant dense<0.000000e+00> : vector<128xf32>
      %22 = vector.multi_reduction <add>, %16, %cst_14 [0] : vector<128x128xf32> to vector<128xf32>
      %23 = vector.shape_cast %22 : vector<128xf32> to vector<1x128xf32>
      %24 = arith.addf %21, %23 : vector<1x128xf32>
      %c0_15 = arith.constant 0 : index
      %c0_16 = arith.constant 0 : index
      %25 = vector.load %arg8[%c0_15, %c0_16] : memref<1x128xf32, #tpu.memory_space<vmem>>, vector<1x128xf32>
      tpu.vector_store %arg8[%c0_15, %c0_16], %24 {strides = array<i32>} : memref<1x128xf32, #tpu.memory_space<vmem>>, vector<1x128xf32>,
      %c0_17 = arith.constant 0 : index
      %c0_18 = arith.constant 0 : index
      %26 = vector.load %arg9[%c0_17, %c0_18] : memref<1x128xf32, #tpu.memory_space<vmem>>, vector<1x128xf32>
      %27 = arith.mulf %16, %16 : vector<128x128xf32>
      %cst_19 = arith.constant dense<0.000000e+00> : vector<128xf32>
      %28 = vector.multi_reduction <add>, %27, %cst_19 [0] : vector<128x128xf32> to vector<128xf32>
      %29 = vector.shape_cast %28 : vector<128xf32> to vector<1x128xf32>
      %30 = arith.addf %26, %29 : vector<1x128xf32>
      %c0_20 = arith.constant 0 : index
      %c0_21 = arith.constant 0 : index
      %31 = vector.load %arg9[%c0_20, %c0_21] : memref<1x128xf32, #tpu.memory_space<vmem>>, vector<1x128xf32>
      tpu.vector_store %arg9[%c0_20, %c0_21], %30 {strides = array<i32>} : memref<1x128xf32, #tpu.memory_space<vmem>>, vector<1x128xf32>,
    } else {
    }
    %c1_i32 = arith.constant 1 : i32
    %3 = arith.cmpi eq, %arg0, %c1_i32 : i32
    %c0_i32_1 = arith.constant 0 : i32
    %4 = arith.cmpi eq, %arg1, %c0_i32_1 : i32
    %5 = arith.andi %3, %4 : i1
    %6 = arith.extui %5 : i1 to i32
    %c0_i32_2 = arith.constant 0 : i32
    %7 = arith.cmpi ne, %6, %c0_i32_2 : i32
    scf.if %7 {
      %c0 = arith.constant 0 : index
      %c0_5 = arith.constant 0 : index
      %11 = vector.load %arg8[%c0, %c0_5] : memref<1x128xf32, #tpu.memory_space<vmem>>, vector<1x128xf32>
      %cst = arith.constant 7.812500e-03 : f32
      %12 = vector.broadcast %cst : f32 to vector<1x128xf32>
      %13 = arith.mulf %11, %12 : vector<1x128xf32>
      %c0_6 = arith.constant 0 : index
      %c0_7 = arith.constant 0 : index
      %14 = vector.load %arg9[%c0_6, %c0_7] : memref<1x128xf32, #tpu.memory_space<vmem>>, vector<1x128xf32>
      %cst_8 = arith.constant 7.812500e-03 : f32
      %15 = vector.broadcast %cst_8 : f32 to vector<1x128xf32>
      %16 = arith.mulf %14, %15 : vector<1x128xf32>
      %17 = arith.mulf %13, %13 : vector<1x128xf32>
      %18 = arith.subf %16, %17 : vector<1x128xf32>
      %cst_9 = arith.constant 0.000000e+00 : f32
      %19 = vector.broadcast %cst_9 : f32 to vector<1x128xf32>
      %20 = arith.maximumf %18, %19 : vector<1x128xf32>
      %c0_10 = arith.constant 0 : index
      %c0_11 = arith.constant 0 : index
      %21 = vector.load %arg4[%c0_10, %c0_11] : memref<1x128xf32, #tpu.memory_space<vmem>>, vector<1x128xf32>
      %cst_12 = arith.constant 9.99999974E-6 : f32
      %22 = vector.broadcast %cst_12 : f32 to vector<1x128xf32>
      %23 = arith.addf %20, %22 : vector<1x128xf32>
      %24 = math.rsqrt %23 : vector<1x128xf32>
      %25 = arith.mulf %21, %24 : vector<1x128xf32>
      %c0_13 = arith.constant 0 : index
      %c0_14 = arith.constant 0 : index
      %26 = vector.load %arg10[%c0_13, %c0_14] : memref<1x128xf32, #tpu.memory_space<vmem>>, vector<1x128xf32>
      tpu.vector_store %arg10[%c0_13, %c0_14], %25 {strides = array<i32>} : memref<1x128xf32, #tpu.memory_space<vmem>>, vector<1x128xf32>,
      %c0_15 = arith.constant 0 : index
      %c0_16 = arith.constant 0 : index
      %27 = vector.load %arg5[%c0_15, %c0_16] : memref<1x128xf32, #tpu.memory_space<vmem>>, vector<1x128xf32>
      %28 = arith.mulf %13, %25 : vector<1x128xf32>
      %29 = arith.subf %27, %28 : vector<1x128xf32>
      %c0_17 = arith.constant 0 : index
      %c0_18 = arith.constant 0 : index
      %30 = vector.load %arg11[%c0_17, %c0_18] : memref<1x128xf32, #tpu.memory_space<vmem>>, vector<1x128xf32>
      tpu.vector_store %arg11[%c0_17, %c0_18], %29 {strides = array<i32>} : memref<1x128xf32, #tpu.memory_space<vmem>>, vector<1x128xf32>,
    } else {
    }
    %c1_i32_3 = arith.constant 1 : i32
    %8 = arith.cmpi eq, %arg0, %c1_i32_3 : i32
    %9 = arith.extui %8 : i1 to i32
    %c0_i32_4 = arith.constant 0 : i32
    %10 = arith.cmpi ne, %9, %c0_i32_4 : i32
    scf.if %10 {
      %11 = arith.index_cast %arg1 : i32 to index
      %c0 = arith.constant 0 : index
      %c0_5 = arith.constant 0 : index
      %12 = vector.load %arg7[%11, %c0, %c0_5] : memref<1x128x128xf32, #tpu.memory_space<vmem>>, vector<1x128x128xf32>
      %13 = vector.shape_cast %12 : vector<1x128x128xf32> to vector<128x128xf32>
      %c0_6 = arith.constant 0 : index
      %c0_7 = arith.constant 0 : index
      %14 = vector.load %arg10[%c0_6, %c0_7] : memref<1x128xf32, #tpu.memory_space<vmem>>, vector<1x128xf32>
      %15 = vector.broadcast %14 : vector<1x128xf32> to vector<128x128xf32>
      %16 = arith.mulf %13, %15 : vector<128x128xf32>
      %c0_8 = arith.constant 0 : index
      %c0_9 = arith.constant 0 : index
      %17 = vector.load %arg11[%c0_8, %c0_9] : memref<1x128xf32, #tpu.memory_space<vmem>>, vector<1x128xf32>
      %18 = vector.broadcast %17 : vector<1x128xf32> to vector<128x128xf32>
      %19 = arith.addf %16, %18 : vector<128x128xf32>
      %cst = arith.constant 0.000000e+00 : f32
      %20 = vector.broadcast %cst : f32 to vector<128x128xf32>
      %21 = arith.cmpf ogt, %19, %20 : vector<128x128xf32>
      %cst_10 = arith.constant 2.000000e-01 : f32
      %22 = vector.broadcast %cst_10 : f32 to vector<128x128xf32>
      %23 = arith.mulf %22, %19 : vector<128x128xf32>
      %24 = arith.select %21, %19, %23 : vector<128x128xi1>, vector<128x128xf32>
      %25 = arith.truncf %24 : vector<128x128xf32> to vector<128x128xbf16>
      %c0_11 = arith.constant 0 : index
      %c0_12 = arith.constant 0 : index
      %26 = vector.load %arg6[%c0_11, %c0_12] : memref<128x128xbf16, #tpu.memory_space<vmem>>, vector<128x128xbf16>
      tpu.vector_store %arg6[%c0_11, %c0_12], %25 {strides = array<i32>} : memref<128x128xbf16, #tpu.memory_space<vmem>>, vector<128x128xbf16>,
    } else {
    }
    return
  }
  func.func @transform_0(%arg0: i32, %arg1: i32) -> (i32, i32) {
    %c1_i32 = arith.constant 1 : i32
    %0 = arith.subi %c1_i32, %arg0 : i32
    %1 = arith.muli %arg1, %0 : i32
    %c0_i32 = arith.constant 0 : i32
    %2 = arith.muli %c0_i32, %arg0 : i32
    %3 = arith.addi %1, %2 : i32
    %c0_i32_0 = arith.constant 0 : i32
    %c0_i32_1 = arith.constant 0 : i32
    return %3, %c0_i32_0 : i32, i32
  }
  func.func @transform_1(%arg0: i32, %arg1: i32) -> (i32, i32) {
    %c0_i32 = arith.constant 0 : i32
    %c0_i32_0 = arith.constant 0 : i32
    %c0_i32_1 = arith.constant 0 : i32
    return %c0_i32, %c0_i32_0 : i32, i32
  }
  func.func @transform_2(%arg0: i32, %arg1: i32) -> (i32, i32) {
    %c0_i32 = arith.constant 0 : i32
    %c0_i32_0 = arith.constant 0 : i32
    %c0_i32_1 = arith.constant 0 : i32
    return %c0_i32, %c0_i32_0 : i32, i32
  }
  func.func @transform_3(%arg0: i32, %arg1: i32) -> (i32, i32) {
    %c0_i32 = arith.constant 0 : i32
    %c0_i32_0 = arith.constant 0 : i32
    %c0_i32_1 = arith.constant 0 : i32
    return %c0_i32, %c0_i32_0 : i32, i32
  }
  func.func @transform_4(%arg0: i32, %arg1: i32) -> (i32, i32) {
    %0 = arith.muli %arg1, %arg0 : i32
    %c0_i32 = arith.constant 0 : i32
    %c0_i32_0 = arith.constant 0 : i32
    return %0, %c0_i32 : i32, i32
  }
}

module attributes {stable_mosaic.version = 11 : i64} {
  func.func @_fused_conv_bn_act_kernel(%arg0: i32, %arg1: i32, %arg2: memref<32x256xbf16, #tpu.memory_space<vmem>>, %arg3: memref<256x128xbf16, #tpu.memory_space<vmem>>, %arg4: memref<1x128xf32, #tpu.memory_space<vmem>>, %arg5: memref<1x128xf32, #tpu.memory_space<vmem>>, %arg6: memref<32x128xbf16, #tpu.memory_space<vmem>>, %arg7: memref<1x32x128xf32, #tpu.memory_space<vmem>>, %arg8: memref<1x128xf32, #tpu.memory_space<vmem>>, %arg9: memref<1x128xf32, #tpu.memory_space<vmem>>, %arg10: memref<1x128xf32, #tpu.memory_space<vmem>>, %arg11: memref<1x128xf32, #tpu.memory_space<vmem>>) attributes {dimension_semantics = [#tpu.dimension_semantics<arbitrary>, #tpu.dimension_semantics<arbitrary>], iteration_bounds = array<i64: 2, 1>, scalar_prefetch = 0 : i64, scratch_operands = 5 : i64, tpu.core_type = #tpu.core_type<tc>, window_params = [{transform_indices = @transform_0, window_bounds = array<i64: 32, 256>}, {pipeline_mode = #tpu.pipeline_mode<synchronous>, transform_indices = @transform_1, window_bounds = array<i64: 256, 128>}, {pipeline_mode = #tpu.pipeline_mode<synchronous>, transform_indices = @transform_2, window_bounds = array<i64: 1, 128>}, {pipeline_mode = #tpu.pipeline_mode<synchronous>, transform_indices = @transform_3, window_bounds = array<i64: 1, 128>}, {transform_indices = @transform_4, window_bounds = array<i64: 32, 128>}]} {
    %c0_i32 = arith.constant 0 : i32
    %0 = arith.cmpi eq, %arg0, %c0_i32 : i32
    %1 = arith.extui %0 : i1 to i32
    %c0_i32_0 = arith.constant 0 : i32
    %2 = arith.cmpi ne, %1, %c0_i32_0 : i32
    scf.if %2 {
      %c0_i32_5 = arith.constant 0 : i32
      %11 = arith.cmpi eq, %arg1, %c0_i32_5 : i32
      %12 = arith.extui %11 : i1 to i32
      %c0_i32_6 = arith.constant 0 : i32
      %13 = arith.cmpi ne, %12, %c0_i32_6 : i32
      scf.if %13 {
        %cst_22 = arith.constant 0.000000e+00 : f32
        %32 = vector.broadcast %cst_22 : f32 to vector<1x128xf32>
        %c0_23 = arith.constant 0 : index
        %c0_24 = arith.constant 0 : index
        %33 = vector.load %arg8[%c0_23, %c0_24] : memref<1x128xf32, #tpu.memory_space<vmem>>, vector<1x128xf32>
        tpu.vector_store %arg8[%c0_23, %c0_24], %32 {strides = array<i32>} : memref<1x128xf32, #tpu.memory_space<vmem>>, vector<1x128xf32>,
        %cst_25 = arith.constant 0.000000e+00 : f32
        %34 = vector.broadcast %cst_25 : f32 to vector<1x128xf32>
        %c0_26 = arith.constant 0 : index
        %c0_27 = arith.constant 0 : index
        %35 = vector.load %arg9[%c0_26, %c0_27] : memref<1x128xf32, #tpu.memory_space<vmem>>, vector<1x128xf32>
        tpu.vector_store %arg9[%c0_26, %c0_27], %34 {strides = array<i32>} : memref<1x128xf32, #tpu.memory_space<vmem>>, vector<1x128xf32>,
      } else {
      }
      %c0 = arith.constant 0 : index
      %c0_7 = arith.constant 0 : index
      %14 = vector.load %arg2[%c0, %c0_7] : memref<32x256xbf16, #tpu.memory_space<vmem>>, vector<32x256xbf16>
      %c0_8 = arith.constant 0 : index
      %c0_9 = arith.constant 0 : index
      %15 = vector.load %arg3[%c0_8, %c0_9] : memref<256x128xbf16, #tpu.memory_space<vmem>>, vector<256x128xbf16>
      %cst = arith.constant dense<0.000000e+00> : vector<32x128xf32>
      %16 = tpu.matmul %14, %15, %cst {dimension_numbers = #tpu.dot_dimension_numbers<[1], [0], [0], [1], [0, 0, 1, 1], [], []>} : vector<32x256xbf16>, vector<256x128xbf16>, vector<32x128xf32> -> vector<32x128xf32>
      %17 = arith.index_cast %arg1 : i32 to index
      %c0_10 = arith.constant 0 : index
      %c0_11 = arith.constant 0 : index
      %18 = vector.load %arg7[%17, %c0_10, %c0_11] : memref<1x32x128xf32, #tpu.memory_space<vmem>>, vector<1x32x128xf32>
      %19 = vector.shape_cast %18 : vector<1x32x128xf32> to vector<32x128xf32>
      %20 = vector.shape_cast %16 : vector<32x128xf32> to vector<1x32x128xf32>
      tpu.vector_store %arg7[%17, %c0_10, %c0_11], %20 {strides = array<i32>} : memref<1x32x128xf32, #tpu.memory_space<vmem>>, vector<1x32x128xf32>,
      %c0_12 = arith.constant 0 : index
      %c0_13 = arith.constant 0 : index
      %21 = vector.load %arg8[%c0_12, %c0_13] : memref<1x128xf32, #tpu.memory_space<vmem>>, vector<1x128xf32>
      %cst_14 = arith.constant dense<0.000000e+00> : vector<128xf32>
      %22 = vector.multi_reduction <add>, %16, %cst_14 [0] : vector<32x128xf32> to vector<128xf32>
      %23 = vector.shape_cast %22 : vector<128xf32> to vector<1x128xf32>
      %24 = arith.addf %21, %23 : vector<1x128xf32>
      %c0_15 = arith.constant 0 : index
      %c0_16 = arith.constant 0 : index
      %25 = vector.load %arg8[%c0_15, %c0_16] : memref<1x128xf32, #tpu.memory_space<vmem>>, vector<1x128xf32>
      tpu.vector_store %arg8[%c0_15, %c0_16], %24 {strides = array<i32>} : memref<1x128xf32, #tpu.memory_space<vmem>>, vector<1x128xf32>,
      %c0_17 = arith.constant 0 : index
      %c0_18 = arith.constant 0 : index
      %26 = vector.load %arg9[%c0_17, %c0_18] : memref<1x128xf32, #tpu.memory_space<vmem>>, vector<1x128xf32>
      %27 = arith.mulf %16, %16 : vector<32x128xf32>
      %cst_19 = arith.constant dense<0.000000e+00> : vector<128xf32>
      %28 = vector.multi_reduction <add>, %27, %cst_19 [0] : vector<32x128xf32> to vector<128xf32>
      %29 = vector.shape_cast %28 : vector<128xf32> to vector<1x128xf32>
      %30 = arith.addf %26, %29 : vector<1x128xf32>
      %c0_20 = arith.constant 0 : index
      %c0_21 = arith.constant 0 : index
      %31 = vector.load %arg9[%c0_20, %c0_21] : memref<1x128xf32, #tpu.memory_space<vmem>>, vector<1x128xf32>
      tpu.vector_store %arg9[%c0_20, %c0_21], %30 {strides = array<i32>} : memref<1x128xf32, #tpu.memory_space<vmem>>, vector<1x128xf32>,
    } else {
    }
    %c1_i32 = arith.constant 1 : i32
    %3 = arith.cmpi eq, %arg0, %c1_i32 : i32
    %c0_i32_1 = arith.constant 0 : i32
    %4 = arith.cmpi eq, %arg1, %c0_i32_1 : i32
    %5 = arith.andi %3, %4 : i1
    %6 = arith.extui %5 : i1 to i32
    %c0_i32_2 = arith.constant 0 : i32
    %7 = arith.cmpi ne, %6, %c0_i32_2 : i32
    scf.if %7 {
      %c0 = arith.constant 0 : index
      %c0_5 = arith.constant 0 : index
      %11 = vector.load %arg8[%c0, %c0_5] : memref<1x128xf32, #tpu.memory_space<vmem>>, vector<1x128xf32>
      %cst = arith.constant 3.125000e-02 : f32
      %12 = vector.broadcast %cst : f32 to vector<1x128xf32>
      %13 = arith.mulf %11, %12 : vector<1x128xf32>
      %c0_6 = arith.constant 0 : index
      %c0_7 = arith.constant 0 : index
      %14 = vector.load %arg9[%c0_6, %c0_7] : memref<1x128xf32, #tpu.memory_space<vmem>>, vector<1x128xf32>
      %cst_8 = arith.constant 3.125000e-02 : f32
      %15 = vector.broadcast %cst_8 : f32 to vector<1x128xf32>
      %16 = arith.mulf %14, %15 : vector<1x128xf32>
      %17 = arith.mulf %13, %13 : vector<1x128xf32>
      %18 = arith.subf %16, %17 : vector<1x128xf32>
      %cst_9 = arith.constant 0.000000e+00 : f32
      %19 = vector.broadcast %cst_9 : f32 to vector<1x128xf32>
      %20 = arith.maximumf %18, %19 : vector<1x128xf32>
      %c0_10 = arith.constant 0 : index
      %c0_11 = arith.constant 0 : index
      %21 = vector.load %arg4[%c0_10, %c0_11] : memref<1x128xf32, #tpu.memory_space<vmem>>, vector<1x128xf32>
      %cst_12 = arith.constant 9.99999974E-6 : f32
      %22 = vector.broadcast %cst_12 : f32 to vector<1x128xf32>
      %23 = arith.addf %20, %22 : vector<1x128xf32>
      %24 = math.rsqrt %23 : vector<1x128xf32>
      %25 = arith.mulf %21, %24 : vector<1x128xf32>
      %c0_13 = arith.constant 0 : index
      %c0_14 = arith.constant 0 : index
      %26 = vector.load %arg10[%c0_13, %c0_14] : memref<1x128xf32, #tpu.memory_space<vmem>>, vector<1x128xf32>
      tpu.vector_store %arg10[%c0_13, %c0_14], %25 {strides = array<i32>} : memref<1x128xf32, #tpu.memory_space<vmem>>, vector<1x128xf32>,
      %c0_15 = arith.constant 0 : index
      %c0_16 = arith.constant 0 : index
      %27 = vector.load %arg5[%c0_15, %c0_16] : memref<1x128xf32, #tpu.memory_space<vmem>>, vector<1x128xf32>
      %28 = arith.mulf %13, %25 : vector<1x128xf32>
      %29 = arith.subf %27, %28 : vector<1x128xf32>
      %c0_17 = arith.constant 0 : index
      %c0_18 = arith.constant 0 : index
      %30 = vector.load %arg11[%c0_17, %c0_18] : memref<1x128xf32, #tpu.memory_space<vmem>>, vector<1x128xf32>
      tpu.vector_store %arg11[%c0_17, %c0_18], %29 {strides = array<i32>} : memref<1x128xf32, #tpu.memory_space<vmem>>, vector<1x128xf32>,
    } else {
    }
    %c1_i32_3 = arith.constant 1 : i32
    %8 = arith.cmpi eq, %arg0, %c1_i32_3 : i32
    %9 = arith.extui %8 : i1 to i32
    %c0_i32_4 = arith.constant 0 : i32
    %10 = arith.cmpi ne, %9, %c0_i32_4 : i32
    scf.if %10 {
      %11 = arith.index_cast %arg1 : i32 to index
      %c0 = arith.constant 0 : index
      %c0_5 = arith.constant 0 : index
      %12 = vector.load %arg7[%11, %c0, %c0_5] : memref<1x32x128xf32, #tpu.memory_space<vmem>>, vector<1x32x128xf32>
      %13 = vector.shape_cast %12 : vector<1x32x128xf32> to vector<32x128xf32>
      %c0_6 = arith.constant 0 : index
      %c0_7 = arith.constant 0 : index
      %14 = vector.load %arg10[%c0_6, %c0_7] : memref<1x128xf32, #tpu.memory_space<vmem>>, vector<1x128xf32>
      %15 = vector.broadcast %14 : vector<1x128xf32> to vector<32x128xf32>
      %16 = arith.mulf %13, %15 : vector<32x128xf32>
      %c0_8 = arith.constant 0 : index
      %c0_9 = arith.constant 0 : index
      %17 = vector.load %arg11[%c0_8, %c0_9] : memref<1x128xf32, #tpu.memory_space<vmem>>, vector<1x128xf32>
      %18 = vector.broadcast %17 : vector<1x128xf32> to vector<32x128xf32>
      %19 = arith.addf %16, %18 : vector<32x128xf32>
      %cst = arith.constant 0.000000e+00 : f32
      %20 = vector.broadcast %cst : f32 to vector<32x128xf32>
      %21 = arith.cmpf ogt, %19, %20 : vector<32x128xf32>
      %cst_10 = arith.constant 2.000000e-01 : f32
      %22 = vector.broadcast %cst_10 : f32 to vector<32x128xf32>
      %23 = arith.mulf %22, %19 : vector<32x128xf32>
      %24 = arith.select %21, %19, %23 : vector<32x128xi1>, vector<32x128xf32>
      %25 = arith.truncf %24 : vector<32x128xf32> to vector<32x128xbf16>
      %c0_11 = arith.constant 0 : index
      %c0_12 = arith.constant 0 : index
      %26 = vector.load %arg6[%c0_11, %c0_12] : memref<32x128xbf16, #tpu.memory_space<vmem>>, vector<32x128xbf16>
      tpu.vector_store %arg6[%c0_11, %c0_12], %25 {strides = array<i32>} : memref<32x128xbf16, #tpu.memory_space<vmem>>, vector<32x128xbf16>,
    } else {
    }
    return
  }
  func.func @transform_0(%arg0: i32, %arg1: i32) -> (i32, i32) {
    %c1_i32 = arith.constant 1 : i32
    %0 = arith.subi %c1_i32, %arg0 : i32
    %1 = arith.muli %arg1, %0 : i32
    %c0_i32 = arith.constant 0 : i32
    %2 = arith.muli %c0_i32, %arg0 : i32
    %3 = arith.addi %1, %2 : i32
    %c0_i32_0 = arith.constant 0 : i32
    %c0_i32_1 = arith.constant 0 : i32
    return %3, %c0_i32_0 : i32, i32
  }
  func.func @transform_1(%arg0: i32, %arg1: i32) -> (i32, i32) {
    %c0_i32 = arith.constant 0 : i32
    %c0_i32_0 = arith.constant 0 : i32
    %c0_i32_1 = arith.constant 0 : i32
    return %c0_i32, %c0_i32_0 : i32, i32
  }
  func.func @transform_2(%arg0: i32, %arg1: i32) -> (i32, i32) {
    %c0_i32 = arith.constant 0 : i32
    %c0_i32_0 = arith.constant 0 : i32
    %c0_i32_1 = arith.constant 0 : i32
    return %c0_i32, %c0_i32_0 : i32, i32
  }
  func.func @transform_3(%arg0: i32, %arg1: i32) -> (i32, i32) {
    %c0_i32 = arith.constant 0 : i32
    %c0_i32_0 = arith.constant 0 : i32
    %c0_i32_1 = arith.constant 0 : i32
    return %c0_i32, %c0_i32_0 : i32, i32
  }
  func.func @transform_4(%arg0: i32, %arg1: i32) -> (i32, i32) {
    %0 = arith.muli %arg1, %arg0 : i32
    %c0_i32 = arith.constant 0 : i32
    %c0_i32_0 = arith.constant 0 : i32
    return %0, %c0_i32 : i32, i32
  }
}

module attributes {stable_mosaic.version = 11 : i64} {
  func.func @_fused_conv_bn_act_kernel(%arg0: i32, %arg1: i32, %arg2: memref<32x512xbf16, #tpu.memory_space<vmem>>, %arg3: memref<512x128xbf16, #tpu.memory_space<vmem>>, %arg4: memref<1x128xf32, #tpu.memory_space<vmem>>, %arg5: memref<1x128xf32, #tpu.memory_space<vmem>>, %arg6: memref<32x128xbf16, #tpu.memory_space<vmem>>, %arg7: memref<1x32x128xf32, #tpu.memory_space<vmem>>, %arg8: memref<1x128xf32, #tpu.memory_space<vmem>>, %arg9: memref<1x128xf32, #tpu.memory_space<vmem>>, %arg10: memref<1x128xf32, #tpu.memory_space<vmem>>, %arg11: memref<1x128xf32, #tpu.memory_space<vmem>>) attributes {dimension_semantics = [#tpu.dimension_semantics<arbitrary>, #tpu.dimension_semantics<arbitrary>], iteration_bounds = array<i64: 2, 1>, scalar_prefetch = 0 : i64, scratch_operands = 5 : i64, tpu.core_type = #tpu.core_type<tc>, window_params = [{transform_indices = @transform_0, window_bounds = array<i64: 32, 512>}, {pipeline_mode = #tpu.pipeline_mode<synchronous>, transform_indices = @transform_1, window_bounds = array<i64: 512, 128>}, {pipeline_mode = #tpu.pipeline_mode<synchronous>, transform_indices = @transform_2, window_bounds = array<i64: 1, 128>}, {pipeline_mode = #tpu.pipeline_mode<synchronous>, transform_indices = @transform_3, window_bounds = array<i64: 1, 128>}, {transform_indices = @transform_4, window_bounds = array<i64: 32, 128>}]} {
    %c0_i32 = arith.constant 0 : i32
    %0 = arith.cmpi eq, %arg0, %c0_i32 : i32
    %1 = arith.extui %0 : i1 to i32
    %c0_i32_0 = arith.constant 0 : i32
    %2 = arith.cmpi ne, %1, %c0_i32_0 : i32
    scf.if %2 {
      %c0_i32_5 = arith.constant 0 : i32
      %11 = arith.cmpi eq, %arg1, %c0_i32_5 : i32
      %12 = arith.extui %11 : i1 to i32
      %c0_i32_6 = arith.constant 0 : i32
      %13 = arith.cmpi ne, %12, %c0_i32_6 : i32
      scf.if %13 {
        %cst_22 = arith.constant 0.000000e+00 : f32
        %32 = vector.broadcast %cst_22 : f32 to vector<1x128xf32>
        %c0_23 = arith.constant 0 : index
        %c0_24 = arith.constant 0 : index
        %33 = vector.load %arg8[%c0_23, %c0_24] : memref<1x128xf32, #tpu.memory_space<vmem>>, vector<1x128xf32>
        tpu.vector_store %arg8[%c0_23, %c0_24], %32 {strides = array<i32>} : memref<1x128xf32, #tpu.memory_space<vmem>>, vector<1x128xf32>,
        %cst_25 = arith.constant 0.000000e+00 : f32
        %34 = vector.broadcast %cst_25 : f32 to vector<1x128xf32>
        %c0_26 = arith.constant 0 : index
        %c0_27 = arith.constant 0 : index
        %35 = vector.load %arg9[%c0_26, %c0_27] : memref<1x128xf32, #tpu.memory_space<vmem>>, vector<1x128xf32>
        tpu.vector_store %arg9[%c0_26, %c0_27], %34 {strides = array<i32>} : memref<1x128xf32, #tpu.memory_space<vmem>>, vector<1x128xf32>,
      } else {
      }
      %c0 = arith.constant 0 : index
      %c0_7 = arith.constant 0 : index
      %14 = vector.load %arg2[%c0, %c0_7] : memref<32x512xbf16, #tpu.memory_space<vmem>>, vector<32x512xbf16>
      %c0_8 = arith.constant 0 : index
      %c0_9 = arith.constant 0 : index
      %15 = vector.load %arg3[%c0_8, %c0_9] : memref<512x128xbf16, #tpu.memory_space<vmem>>, vector<512x128xbf16>
      %cst = arith.constant dense<0.000000e+00> : vector<32x128xf32>
      %16 = tpu.matmul %14, %15, %cst {dimension_numbers = #tpu.dot_dimension_numbers<[1], [0], [0], [1], [0, 0, 1, 1], [], []>} : vector<32x512xbf16>, vector<512x128xbf16>, vector<32x128xf32> -> vector<32x128xf32>
      %17 = arith.index_cast %arg1 : i32 to index
      %c0_10 = arith.constant 0 : index
      %c0_11 = arith.constant 0 : index
      %18 = vector.load %arg7[%17, %c0_10, %c0_11] : memref<1x32x128xf32, #tpu.memory_space<vmem>>, vector<1x32x128xf32>
      %19 = vector.shape_cast %18 : vector<1x32x128xf32> to vector<32x128xf32>
      %20 = vector.shape_cast %16 : vector<32x128xf32> to vector<1x32x128xf32>
      tpu.vector_store %arg7[%17, %c0_10, %c0_11], %20 {strides = array<i32>} : memref<1x32x128xf32, #tpu.memory_space<vmem>>, vector<1x32x128xf32>,
      %c0_12 = arith.constant 0 : index
      %c0_13 = arith.constant 0 : index
      %21 = vector.load %arg8[%c0_12, %c0_13] : memref<1x128xf32, #tpu.memory_space<vmem>>, vector<1x128xf32>
      %cst_14 = arith.constant dense<0.000000e+00> : vector<128xf32>
      %22 = vector.multi_reduction <add>, %16, %cst_14 [0] : vector<32x128xf32> to vector<128xf32>
      %23 = vector.shape_cast %22 : vector<128xf32> to vector<1x128xf32>
      %24 = arith.addf %21, %23 : vector<1x128xf32>
      %c0_15 = arith.constant 0 : index
      %c0_16 = arith.constant 0 : index
      %25 = vector.load %arg8[%c0_15, %c0_16] : memref<1x128xf32, #tpu.memory_space<vmem>>, vector<1x128xf32>
      tpu.vector_store %arg8[%c0_15, %c0_16], %24 {strides = array<i32>} : memref<1x128xf32, #tpu.memory_space<vmem>>, vector<1x128xf32>,
      %c0_17 = arith.constant 0 : index
      %c0_18 = arith.constant 0 : index
      %26 = vector.load %arg9[%c0_17, %c0_18] : memref<1x128xf32, #tpu.memory_space<vmem>>, vector<1x128xf32>
      %27 = arith.mulf %16, %16 : vector<32x128xf32>
      %cst_19 = arith.constant dense<0.000000e+00> : vector<128xf32>
      %28 = vector.multi_reduction <add>, %27, %cst_19 [0] : vector<32x128xf32> to vector<128xf32>
      %29 = vector.shape_cast %28 : vector<128xf32> to vector<1x128xf32>
      %30 = arith.addf %26, %29 : vector<1x128xf32>
      %c0_20 = arith.constant 0 : index
      %c0_21 = arith.constant 0 : index
      %31 = vector.load %arg9[%c0_20, %c0_21] : memref<1x128xf32, #tpu.memory_space<vmem>>, vector<1x128xf32>
      tpu.vector_store %arg9[%c0_20, %c0_21], %30 {strides = array<i32>} : memref<1x128xf32, #tpu.memory_space<vmem>>, vector<1x128xf32>,
    } else {
    }
    %c1_i32 = arith.constant 1 : i32
    %3 = arith.cmpi eq, %arg0, %c1_i32 : i32
    %c0_i32_1 = arith.constant 0 : i32
    %4 = arith.cmpi eq, %arg1, %c0_i32_1 : i32
    %5 = arith.andi %3, %4 : i1
    %6 = arith.extui %5 : i1 to i32
    %c0_i32_2 = arith.constant 0 : i32
    %7 = arith.cmpi ne, %6, %c0_i32_2 : i32
    scf.if %7 {
      %c0 = arith.constant 0 : index
      %c0_5 = arith.constant 0 : index
      %11 = vector.load %arg8[%c0, %c0_5] : memref<1x128xf32, #tpu.memory_space<vmem>>, vector<1x128xf32>
      %cst = arith.constant 0.055555556 : f32
      %12 = vector.broadcast %cst : f32 to vector<1x128xf32>
      %13 = arith.mulf %11, %12 : vector<1x128xf32>
      %c0_6 = arith.constant 0 : index
      %c0_7 = arith.constant 0 : index
      %14 = vector.load %arg9[%c0_6, %c0_7] : memref<1x128xf32, #tpu.memory_space<vmem>>, vector<1x128xf32>
      %cst_8 = arith.constant 0.055555556 : f32
      %15 = vector.broadcast %cst_8 : f32 to vector<1x128xf32>
      %16 = arith.mulf %14, %15 : vector<1x128xf32>
      %17 = arith.mulf %13, %13 : vector<1x128xf32>
      %18 = arith.subf %16, %17 : vector<1x128xf32>
      %cst_9 = arith.constant 0.000000e+00 : f32
      %19 = vector.broadcast %cst_9 : f32 to vector<1x128xf32>
      %20 = arith.maximumf %18, %19 : vector<1x128xf32>
      %c0_10 = arith.constant 0 : index
      %c0_11 = arith.constant 0 : index
      %21 = vector.load %arg4[%c0_10, %c0_11] : memref<1x128xf32, #tpu.memory_space<vmem>>, vector<1x128xf32>
      %cst_12 = arith.constant 9.99999974E-6 : f32
      %22 = vector.broadcast %cst_12 : f32 to vector<1x128xf32>
      %23 = arith.addf %20, %22 : vector<1x128xf32>
      %24 = math.rsqrt %23 : vector<1x128xf32>
      %25 = arith.mulf %21, %24 : vector<1x128xf32>
      %c0_13 = arith.constant 0 : index
      %c0_14 = arith.constant 0 : index
      %26 = vector.load %arg10[%c0_13, %c0_14] : memref<1x128xf32, #tpu.memory_space<vmem>>, vector<1x128xf32>
      tpu.vector_store %arg10[%c0_13, %c0_14], %25 {strides = array<i32>} : memref<1x128xf32, #tpu.memory_space<vmem>>, vector<1x128xf32>,
      %c0_15 = arith.constant 0 : index
      %c0_16 = arith.constant 0 : index
      %27 = vector.load %arg5[%c0_15, %c0_16] : memref<1x128xf32, #tpu.memory_space<vmem>>, vector<1x128xf32>
      %28 = arith.mulf %13, %25 : vector<1x128xf32>
      %29 = arith.subf %27, %28 : vector<1x128xf32>
      %c0_17 = arith.constant 0 : index
      %c0_18 = arith.constant 0 : index
      %30 = vector.load %arg11[%c0_17, %c0_18] : memref<1x128xf32, #tpu.memory_space<vmem>>, vector<1x128xf32>
      tpu.vector_store %arg11[%c0_17, %c0_18], %29 {strides = array<i32>} : memref<1x128xf32, #tpu.memory_space<vmem>>, vector<1x128xf32>,
    } else {
    }
    %c1_i32_3 = arith.constant 1 : i32
    %8 = arith.cmpi eq, %arg0, %c1_i32_3 : i32
    %9 = arith.extui %8 : i1 to i32
    %c0_i32_4 = arith.constant 0 : i32
    %10 = arith.cmpi ne, %9, %c0_i32_4 : i32
    scf.if %10 {
      %11 = arith.index_cast %arg1 : i32 to index
      %c0 = arith.constant 0 : index
      %c0_5 = arith.constant 0 : index
      %12 = vector.load %arg7[%11, %c0, %c0_5] : memref<1x32x128xf32, #tpu.memory_space<vmem>>, vector<1x32x128xf32>
      %13 = vector.shape_cast %12 : vector<1x32x128xf32> to vector<32x128xf32>
      %c0_6 = arith.constant 0 : index
      %c0_7 = arith.constant 0 : index
      %14 = vector.load %arg10[%c0_6, %c0_7] : memref<1x128xf32, #tpu.memory_space<vmem>>, vector<1x128xf32>
      %15 = vector.broadcast %14 : vector<1x128xf32> to vector<32x128xf32>
      %16 = arith.mulf %13, %15 : vector<32x128xf32>
      %c0_8 = arith.constant 0 : index
      %c0_9 = arith.constant 0 : index
      %17 = vector.load %arg11[%c0_8, %c0_9] : memref<1x128xf32, #tpu.memory_space<vmem>>, vector<1x128xf32>
      %18 = vector.broadcast %17 : vector<1x128xf32> to vector<32x128xf32>
      %19 = arith.addf %16, %18 : vector<32x128xf32>
      %cst = arith.constant 0.000000e+00 : f32
      %20 = vector.broadcast %cst : f32 to vector<32x128xf32>
      %21 = arith.cmpf ogt, %19, %20 : vector<32x128xf32>
      %cst_10 = arith.constant 2.000000e-01 : f32
      %22 = vector.broadcast %cst_10 : f32 to vector<32x128xf32>
      %23 = arith.mulf %22, %19 : vector<32x128xf32>
      %24 = arith.select %21, %19, %23 : vector<32x128xi1>, vector<32x128xf32>
      %25 = arith.truncf %24 : vector<32x128xf32> to vector<32x128xbf16>
      %c0_11 = arith.constant 0 : index
      %c0_12 = arith.constant 0 : index
      %26 = vector.load %arg6[%c0_11, %c0_12] : memref<32x128xbf16, #tpu.memory_space<vmem>>, vector<32x128xbf16>
      tpu.vector_store %arg6[%c0_11, %c0_12], %25 {strides = array<i32>} : memref<32x128xbf16, #tpu.memory_space<vmem>>, vector<32x128xbf16>,
    } else {
    }
    return
  }
  func.func @transform_0(%arg0: i32, %arg1: i32) -> (i32, i32) {
    %c1_i32 = arith.constant 1 : i32
    %0 = arith.subi %c1_i32, %arg0 : i32
    %1 = arith.muli %arg1, %0 : i32
    %c0_i32 = arith.constant 0 : i32
    %2 = arith.muli %c0_i32, %arg0 : i32
    %3 = arith.addi %1, %2 : i32
    %c0_i32_0 = arith.constant 0 : i32
    %c0_i32_1 = arith.constant 0 : i32
    return %3, %c0_i32_0 : i32, i32
  }
  func.func @transform_1(%arg0: i32, %arg1: i32) -> (i32, i32) {
    %c0_i32 = arith.constant 0 : i32
    %c0_i32_0 = arith.constant 0 : i32
    %c0_i32_1 = arith.constant 0 : i32
    return %c0_i32, %c0_i32_0 : i32, i32
  }
  func.func @transform_2(%arg0: i32, %arg1: i32) -> (i32, i32) {
    %c0_i32 = arith.constant 0 : i32
    %c0_i32_0 = arith.constant 0 : i32
    %c0_i32_1 = arith.constant 0 : i32
    return %c0_i32, %c0_i32_0 : i32, i32
  }
  func.func @transform_3(%arg0: i32, %arg1: i32) -> (i32, i32) {
    %c0_i32 = arith.constant 0 : i32
    %c0_i32_0 = arith.constant 0 : i32
    %c0_i32_1 = arith.constant 0 : i32
    return %c0_i32, %c0_i32_0 : i32, i32
  }
  func.func @transform_4(%arg0: i32, %arg1: i32) -> (i32, i32) {
    %0 = arith.muli %arg1, %arg0 : i32
    %c0_i32 = arith.constant 0 : i32
    %c0_i32_0 = arith.constant 0 : i32
    return %0, %c0_i32 : i32, i32
  }
}

module attributes {stable_mosaic.version = 11 : i64} {
  func.func @_matmul_bias_act_kernel(%arg0: i32, %arg1: memref<16x1024xbf16, #tpu.memory_space<vmem>>, %arg2: memref<1024x128xbf16, #tpu.memory_space<vmem>>, %arg3: memref<1x128xf32, #tpu.memory_space<vmem>>, %arg4: memref<16x128xf32, #tpu.memory_space<vmem>>) attributes {dimension_semantics = [#tpu.dimension_semantics<parallel>], iteration_bounds = array<i64: 1>, scalar_prefetch = 0 : i64, scratch_operands = 0 : i64, tpu.core_type = #tpu.core_type<tc>, window_params = [{transform_indices = @transform_0, window_bounds = array<i64: 16, 1024>}, {pipeline_mode = #tpu.pipeline_mode<synchronous>, transform_indices = @transform_1, window_bounds = array<i64: 1024, 128>}, {pipeline_mode = #tpu.pipeline_mode<synchronous>, transform_indices = @transform_2, window_bounds = array<i64: 1, 128>}, {transform_indices = @transform_3, window_bounds = array<i64: 16, 128>}]} {
    %c0 = arith.constant 0 : index
    %c0_0 = arith.constant 0 : index
    %0 = vector.load %arg1[%c0, %c0_0] : memref<16x1024xbf16, #tpu.memory_space<vmem>>, vector<16x1024xbf16>
    %c0_1 = arith.constant 0 : index
    %c0_2 = arith.constant 0 : index
    %1 = vector.load %arg2[%c0_1, %c0_2] : memref<1024x128xbf16, #tpu.memory_space<vmem>>, vector<1024x128xbf16>
    %cst = arith.constant dense<0.000000e+00> : vector<16x128xf32>
    %2 = tpu.matmul %0, %1, %cst {dimension_numbers = #tpu.dot_dimension_numbers<[1], [0], [0], [1], [0, 0, 1, 1], [], []>} : vector<16x1024xbf16>, vector<1024x128xbf16>, vector<16x128xf32> -> vector<16x128xf32>
    %c0_3 = arith.constant 0 : index
    %c0_4 = arith.constant 0 : index
    %3 = vector.load %arg3[%c0_3, %c0_4] : memref<1x128xf32, #tpu.memory_space<vmem>>, vector<1x128xf32>
    %4 = vector.broadcast %3 : vector<1x128xf32> to vector<16x128xf32>
    %5 = arith.addf %2, %4 : vector<16x128xf32>
    %c0_5 = arith.constant 0 : index
    %c0_6 = arith.constant 0 : index
    %6 = vector.load %arg4[%c0_5, %c0_6] : memref<16x128xf32, #tpu.memory_space<vmem>>, vector<16x128xf32>
    tpu.vector_store %arg4[%c0_5, %c0_6], %5 {strides = array<i32>} : memref<16x128xf32, #tpu.memory_space<vmem>>, vector<16x128xf32>,
    return
  }
  func.func @transform_0(%arg0: i32) -> (i32, i32) {
    %c0_i32 = arith.constant 0 : i32
    %c0_i32_0 = arith.constant 0 : i32
    return %arg0, %c0_i32 : i32, i32
  }
  func.func @transform_1(%arg0: i32) -> (i32, i32) {
    %c0_i32 = arith.constant 0 : i32
    %c0_i32_0 = arith.constant 0 : i32
    %c0_i32_1 = arith.constant 0 : i32
    return %c0_i32, %c0_i32_0 : i32, i32
  }
  func.func @transform_2(%arg0: i32) -> (i32, i32) {
    %c0_i32 = arith.constant 0 : i32
    %c0_i32_0 = arith.constant 0 : i32
    %c0_i32_1 = arith.constant 0 : i32
    return %c0_i32, %c0_i32_0 : i32, i32
  }
  func.func @transform_3(%arg0: i32) -> (i32, i32) {
    %c0_i32 = arith.constant 0 : i32
    %c0_i32_0 = arith.constant 0 : i32
    return %arg0, %c0_i32 : i32, i32
  }
}

</mosaic_0001>

<llo_original>
// kernel: _lambda_.5
$region0: #{_lambda_.5}
  #allocation0 [shape = 'u32[]', space=smem, size = 0x4, offset = 0x4, fixed_abs, tag = 'smem constant byte address 0x4 - core index']
  #allocation1 [shape = 'u32[144,128]{1,0:T(1,128)}', space=vmem, size = 0x12000, scoped, tag = 'internal scratch']
  %s0 = inlined_call_operand.vmem [shape: bf16[512,128], index: 0, kind: input, shape index: {}]
  %s1 = inlined_call_operand.vmem [shape: bf16[128,128], index: 1, kind: input, shape index: {}]
  %s2 = inlined_call_operand.vmem [shape: f32[1,128], index: 2, kind: input, shape index: {}]
  %s3 = inlined_call_operand.vmem [shape: bf16[512,128], index: 3, kind: output, shape index: {}]
  %s4 = sld [smem:[#allocation0]]
  $region22: #{_lambda_.5} parent=0
    _
  %s6 = ssub.s32 1, %s4
  %s7 = scalar_select 0, %s6, %s4
  // Predicated region
  $region2: #{_lambda_.5} parent=0 // pred_check
    _
  $region3: #{_lambda_.5} parent=0 // pred_check_branch
    %9 = sbr.rel (0) target = $region5
  $region4: #{_lambda_.5} parent=0 // pred_region
    _
  $region5: #{_lambda_.5} parent=0 // pred_fallthru
    _
  // Predicated region
  $region6: #{_lambda_.5} parent=0 // pred_check
    _
  $region7: #{_lambda_.5} parent=0 // pred_check_branch
    %11 = sbr.rel (0) target = $region9
  $region8: #{_lambda_.5} parent=0 // pred_region
    _
  $region9: #{_lambda_.5} parent=0 // pred_fallthru
    _
  // Predicated region
  $region10: #{_lambda_.5} parent=0 // pred_check
    _
  $region11: #{_lambda_.5} parent=0 // pred_check_branch
    %13 = sbr.rel (0) target = $region13
  $region12: #{_lambda_.5} parent=0 // pred_region
    _
  $region13: #{_lambda_.5} parent=0 // pred_fallthru
    _
  %v15 = vld [vmem:[%s0] sm:$0xf]
  %v16 = vld [vmem:[%s0 + $0x4] sm:$0xf]
  %v17 = vld [vmem:[%s0 + $0x8] sm:$0xf]
  %v18 = vld [vmem:[%s0 + $0xc] sm:$0xf]
  %v19 = vld [vmem:[%s0 + $0x10] sm:$0xf]
  %v20 = vld [vmem:[%s0 + $0x14] sm:$0xf]
  %v21 = vld [vmem:[%s0 + $0x18] sm:$0xf]
  %v22 = vld [vmem:[%s0 + $0x1c] sm:$0xf]
  %v23 = vld [vmem:[%s0 + $0x20] sm:$0xf]
  %v24 = vld [vmem:[%s0 + $0x24] sm:$0xf]
  %v25 = vld [vmem:[%s0 + $0x28] sm:$0xf]
  %v26 = vld [vmem:[%s0 + $0x2c] sm:$0xf]
  %v27 = vld [vmem:[%s0 + $0x30] sm:$0xf]
  %v28 = vld [vmem:[%s0 + $0x34] sm:$0xf]
  %v29 = vld [vmem:[%s0 + $0x38] sm:$0xf]
  %v30 = vld [vmem:[%s0 + $0x3c] sm:$0xf]
  %v31 = vld [vmem:[%s0 + $0x40] sm:$0xf]
  %v32 = vld [vmem:[%s0 + $0x44] sm:$0xf]
  %v33 = vld [vmem:[%s0 + $0x48] sm:$0xf]
  %v34 = vld [vmem:[%s0 + $0x4c] sm:$0xf]
  %v35 = vld [vmem:[%s0 + $0x50] sm:$0xf]
  %v36 = vld [vmem:[%s0 + $0x54] sm:$0xf]
  %v37 = vld [vmem:[%s0 + $0x58] sm:$0xf]
  %v38 = vld [vmem:[%s0 + $0x5c] sm:$0xf]
  %v39 = vld [vmem:[%s0 + $0x60] sm:$0xf]
  %v40 = vld [vmem:[%s0 + $0x64] sm:$0xf]
  %v41 = vld [vmem:[%s0 + $0x68] sm:$0xf]
  %v42 = vld [vmem:[%s0 + $0x6c] sm:$0xf]
  %v43 = vld [vmem:[%s0 + $0x70] sm:$0xf]
  %v44 = vld [vmem:[%s0 + $0x74] sm:$0xf]
  %v45 = vld [vmem:[%s0 + $0x78] sm:$0xf]
  %v46 = vld [vmem:[%s0 + $0x7c] sm:$0xf]
  %v47 = vld [vmem:[%s0 + $0x80] sm:$0xf]
  %v48 = vld [vmem:[%s0 + $0x84] sm:$0xf]
  %v49 = vld [vmem:[%s0 + $0x88] sm:$0xf]
  %v50 = vld [vmem:[%s0 + $0x8c] sm:$0xf]
  %v51 = vld [vmem:[%s0 + $0x90] sm:$0xf]
  %v52 = vld [vmem:[%s0 + $0x94] sm:$0xf]
  %v53 = vld [vmem:[%s0 + $0x98] sm:$0xf]
  %v54 = vld [vmem:[%s0 + $0x9c] sm:$0xf]
  %v55 = vld [vmem:[%s0 + $0xa0] sm:$0xf]
  %v56 = vld [vmem:[%s0 + $0xa4] sm:$0xf]
  %v57 = vld [vmem:[%s0 + $0xa8] sm:$0xf]
  %v58 = vld [vmem:[%s0 + $0xac] sm:$0xf]
  %v59 = vld [vmem:[%s0 + $0xb0] sm:$0xf]
  %v60 = vld [vmem:[%s0 + $0xb4] sm:$0xf]
  %v61 = vld [vmem:[%s0 + $0xb8] sm:$0xf]
  %v62 = vld [vmem:[%s0 + $0xbc] sm:$0xf]
  %v63 = vld [vmem:[%s0 + $0xc0] sm:$0xf]
  %v64 = vld [vmem:[%s0 + $0xc4] sm:$0xf]
  %v65 = vld [vmem:[%s0 + $0xc8] sm:$0xf]
  %v66 = vld [vmem:[%s0 + $0xcc] sm:$0xf]
  %v67 = vld [vmem:[%s0 + $0xd0] sm:$0xf]
  %v68 = vld [vmem:[%s0 + $0xd4] sm:$0xf]
  %v69 = vld [vmem:[%s0 + $0xd8] sm:$0xf]
  %v70 = vld [vmem:[%s0 + $0xdc] sm:$0xf]
  %v71 = vld [vmem:[%s0 + $0xe0] sm:$0xf]
  %v72 = vld [vmem:[%s0 + $0xe4] sm:$0xf]
  %v73 = vld [vmem:[%s0 + $0xe8] sm:$0xf]
  %v74 = vld [vmem:[%s0 + $0xec] sm:$0xf]
  %v75 = vld [vmem:[%s0 + $0xf0] sm:$0xf]
  %v76 = vld [vmem:[%s0 + $0xf4] sm:$0xf]
  %v77 = vld [vmem:[%s0 + $0xf8] sm:$0xf]
  %v78 = vld [vmem:[%s0 + $0xfc] sm:$0xf]
  %v79 = vld [vmem:[%s1] sm:$0xf]
  %v80 = vld [vmem:[%s1 + $0x4] sm:$0xf]
  %v81 = vld [vmem:[%s1 + $0x8] sm:$0xf]
  %v82 = vld [vmem:[%s1 + $0xc] sm:$0xf]
  %v83 = vld [vmem:[%s1 + $0x10] sm:$0xf]
  %v84 = vld [vmem:[%s1 + $0x14] sm:$0xf]
  %v85 = vld [vmem:[%s1 + $0x18] sm:$0xf]
  %v86 = vld [vmem:[%s1 + $0x1c] sm:$0xf]
  %v87 = vld [vmem:[%s1 + $0x20] sm:$0xf]
  %v88 = vld [vmem:[%s1 + $0x24] sm:$0xf]
  %v89 = vld [vmem:[%s1 + $0x28] sm:$0xf]
  %v90 = vld [vmem:[%s1 + $0x2c] sm:$0xf]
  %v91 = vld [vmem:[%s1 + $0x30] sm:$0xf]
  %v92 = vld [vmem:[%s1 + $0x34] sm:$0xf]
  %v93 = vld [vmem:[%s1 + $0x38] sm:$0xf]
  %v94 = vld [vmem:[%s1 + $0x3c] sm:$0xf]
  %v95 = vld [vmem:[%s2] sm:$0x1]
  %v97 = vlaneseq
  %v98 = vshrl.u32 %v97, 7
  %v99 = vsub.s32 0, %v98
  %v100 = vrot.slane %v95, %v99
  %v166 = vunpack.c.l.b16 %v15
  %v167 = vunpack.c.l.b16 %v16
  %v168 = vunpack.c.l.b16 %v17
  %v169 = vunpack.c.l.b16 %v18
  %v170 = vunpack.c.l.b16 %v19
  %v171 = vunpack.c.l.b16 %v20
  %v172 = vunpack.c.l.b16 %v21
  %v173 = vunpack.c.l.b16 %v22
  %v174 = vunpack.c.l.b16 %v23
  %v175 = vunpack.c.l.b16 %v24
  %v176 = vunpack.c.l.b16 %v25
  %v177 = vunpack.c.l.b16 %v26
  %v178 = vunpack.c.l.b16 %v27
  %v179 = vunpack.c.l.b16 %v28
  %v180 = vunpack.c.l.b16 %v29
  %v181 = vunpack.c.l.b16 %v30
  %v182 = vunpack.c.l.b16 %v31
  %v183 = vunpack.c.l.b16 %v32
  %v184 = vunpack.c.l.b16 %v33
  %v185 = vunpack.c.l.b16 %v34
  %v186 = vunpack.c.l.b16 %v35
  %v187 = vunpack.c.l.b16 %v36
  %v188 = vunpack.c.l.b16 %v37
  %v189 = vunpack.c.l.b16 %v38
  %v190 = vunpack.c.l.b16 %v39
  %v191 = vunpack.c.l.b16 %v40
  %v192 = vunpack.c.l.b16 %v41
  %v193 = vunpack.c.l.b16 %v42
  %v194 = vunpack.c.l.b16 %v43
  %v195 = vunpack.c.l.b16 %v44
  %v196 = vunpack.c.l.b16 %v45
  %v197 = vunpack.c.l.b16 %v46
  %v198 = vunpack.c.l.b16 %v47
  %v199 = vunpack.c.l.b16 %v48
  %v200 = vunpack.c.l.b16 %v49
  %v201 = vunpack.c.l.b16 %v50
  %v202 = vunpack.c.l.b16 %v51
  %v203 = vunpack.c.l.b16 %v52
  %v204 = vunpack.c.l.b16 %v53
  %v205 = vunpack.c.l.b16 %v54
  %v206 = vunpack.c.l.b16 %v55
  %v207 = vunpack.c.l.b16 %v56
  %v208 = vunpack.c.l.b16 %v57
  %v209 = vunpack.c.l.b16 %v58
  %v210 = vunpack.c.l.b16 %v59
  %v211 = vunpack.c.l.b16 %v60
  %v212 = vunpack.c.l.b16 %v61
  %v213 = vunpack.c.l.b16 %v62
  %v214 = vunpack.c.l.b16 %v63
  %v215 = vunpack.c.l.b16 %v64
  %v216 = vunpack.c.l.b16 %v65
  %v217 = vunpack.c.l.b16 %v66
  %v218 = vunpack.c.l.b16 %v67
  %v219 = vunpack.c.l.b16 %v68
  %v220 = vunpack.c.l.b16 %v69
  %v221 = vunpack.c.l.b16 %v70
  %v222 = vunpack.c.l.b16 %v71
  %v223 = vunpack.c.l.b16 %v72
  %v224 = vunpack.c.l.b16 %v73
  %v225 = vunpack.c.l.b16 %v74
  %v226 = vunpack.c.l.b16 %v75
  %v227 = vunpack.c.l.b16 %v76
  %v228 = vunpack.c.l.b16 %v77
  %v229 = vunpack.c.l.b16 %v78
  %v230 = vpack.c.b16 %v167, %v166
  %v231 = vpack.c.b16 %v169, %v168
  %v232 = vpack.c.b16 %v171, %v170
  %v233 = vpack.c.b16 %v173, %v172
  %v234 = vpack.c.b16 %v175, %v174
  %v235 = vpack.c.b16 %v177, %v176
  %v236 = vpack.c.b16 %v179, %v178
  %v237 = vpack.c.b16 %v181, %v180
  %v238 = vpack.c.b16 %v183, %v182
  %v239 = vpack.c.b16 %v185, %v184
  %v240 = vpack.c.b16 %v187, %v186
  %v241 = vpack.c.b16 %v189, %v188
  %v242 = vpack.c.b16 %v191, %v190
  %v243 = vpack.c.b16 %v193, %v192
  %v244 = vpack.c.b16 %v195, %v194
  %v245 = vpack.c.b16 %v197, %v196
  %v246 = vpack.c.b16 %v199, %v198
  %v247 = vpack.c.b16 %v201, %v200
  %v248 = vpack.c.b16 %v203, %v202
  %v249 = vpack.c.b16 %v205, %v204
  %v250 = vpack.c.b16 %v207, %v206
  %v251 = vpack.c.b16 %v209, %v208
  %v252 = vpack.c.b16 %v211, %v210
  %v253 = vpack.c.b16 %v213, %v212
  %v254 = vpack.c.b16 %v215, %v214
  %v255 = vpack.c.b16 %v217, %v216
  %v256 = vpack.c.b16 %v219, %v218
  %v257 = vpack.c.b16 %v221, %v220
  %v258 = vpack.c.b16 %v223, %v222
  %v259 = vpack.c.b16 %v225, %v224
  %v260 = vpack.c.b16 %v227, %v226
  %v261 = vpack.c.b16 %v229, %v228
  %v310 = vunpack.c.l.b16 %v79
  %v311 = vunpack.c.l.b16 %v80
  %v312 = vunpack.c.l.b16 %v81
  %v313 = vunpack.c.l.b16 %v82
  %v314 = vunpack.c.l.b16 %v83
  %v315 = vunpack.c.l.b16 %v84
  %v316 = vunpack.c.l.b16 %v85
  %v317 = vunpack.c.l.b16 %v86
  %v318 = vunpack.c.l.b16 %v87
  %v319 = vunpack.c.l.b16 %v88
  %v320 = vunpack.c.l.b16 %v89
  %v321 = vunpack.c.l.b16 %v90
  %v322 = vunpack.c.l.b16 %v91
  %v323 = vunpack.c.l.b16 %v92
  %v324 = vunpack.c.l.b16 %v93
  %v325 = vunpack.c.l.b16 %v94
  %v326 = vpack.c.b16 %v311, %v310
  %v327 = vpack.c.b16 %v313, %v312
  %v328 = vpack.c.b16 %v315, %v314
  %v329 = vpack.c.b16 %v317, %v316
  %v330 = vpack.c.b16 %v319, %v318
  %v331 = vpack.c.b16 %v321, %v320
  %v332 = vpack.c.b16 %v323, %v322
  %v333 = vpack.c.b16 %v325, %v324
  %342 = vmatprep.subr.bf16.mxu0 0
  %343 = vmatpush1.bf16.msra.mxu0 %v333
  %344 = vmatprep.subr.bf16.mxu0 0
  %345 = vmatpush1.bf16.msra.mxu0 %v332
  %346 = vmatprep.subr.bf16.mxu0 0
  %347 = vmatpush1.bf16.msra.mxu0 %v331
  %348 = vmatprep.subr.bf16.mxu0 0
  %349 = vmatpush1.bf16.msra.mxu0 %v330
  %350 = vmatprep.subr.bf16.mxu0 0
  %351 = vmatpush1.bf16.msra.mxu0 %v329
  %352 = vmatprep.subr.bf16.mxu0 0
  %353 = vmatpush1.bf16.msra.mxu0 %v328
  %354 = vmatprep.subr.bf16.mxu0 0
  %355 = vmatpush1.bf16.msra.mxu0 %v327
  %356 = vmatprep.subr.bf16.mxu0 0
  %357 = vmatpush1.bf16.msra.mxu0 %v326
  %358 = vmatprep.subr.bf16.mxu0 0
  %359 = vmatpush2.bf16.msra.mxu0 0
  %360 = vmatprep.subr.bf16.mxu0 0
  %361 = vmatpush2.bf16.msra.mxu0 0
  %362 = vmatprep.subr.bf16.mxu0 0
  %363 = vmatpush2.bf16.msra.mxu0 0
  %364 = vmatprep.subr.bf16.mxu0 0
  %365 = vmatpush2.bf16.msra.mxu0 0
  %366 = vmatprep.subr.bf16.mxu0 0
  %367 = vmatpush2.bf16.msra.mxu0 0
  %368 = vmatprep.subr.bf16.mxu0 0
  %369 = vmatpush2.bf16.msra.mxu0 0
  %370 = vmatprep.subr.bf16.mxu0 0
  %371 = vmatpush2.bf16.msra.mxu0 0
  %372 = vmatprep.subr.bf16.mxu0 0
  %373 = vmatpush2.bf16.msra.mxu0 0
  %374 = vmatprep.mubr.bf16.mxu0 0
  %375 = vmatmul.mubr.bf16.gmra.mxu0 %v230
  %v376 = vpop.f32.mrf.mxu0
  %v377 = vadd.f32 %v100, %v376
  %v378 = vpop.f32.mrf.mxu0
  %v379 = vpop.f32.mrf.mxu0
  %v380 = vadd.f32 %v100, %v379
  %v381 = vpop.f32.mrf.mxu0
  %382 = vmatprep.mubr.bf16.mxu0 0
  %383 = vmatmul.mubr.bf16.gmra.mxu0 %v231
  %v384 = vpop.f32.mrf.mxu0
  %v385 = vadd.f32 %v100, %v384
  %v386 = vpop.f32.mrf.mxu0
  %v387 = vpop.f32.mrf.mxu0
  %v388 = vadd.f32 %v100, %v387
  %v389 = vpop.f32.mrf.mxu0
  %390 = vmatprep.mubr.bf16.mxu0 0
  %391 = vmatmul.mubr.bf16.gmra.mxu0 %v232
  %v392 = vpop.f32.mrf.mxu0
  %v393 = vadd.f32 %v100, %v392
  %v394 = vpop.f32.mrf.mxu0
  %v395 = vpop.f32.mrf.mxu0
  %v396 = vadd.f32 %v100, %v395
  %v397 = vpop.f32.mrf.mxu0
  %398 = vmatprep.mubr.bf16.mxu0 0
  %399 = vmatmul.mubr.bf16.gmra.mxu0 %v233
  %v400 = vpop.f32.mrf.mxu0
  %v401 = vadd.f32 %v100, %v400
  %v402 = vpop.f32.mrf.mxu0
  %v403 = vpop.f32.mrf.mxu0
  %v404 = vadd.f32 %v100, %v403
  %v405 = vpop.f32.mrf.mxu0
  %406 = vmatprep.mubr.bf16.mxu0 0
  %407 = vmatmul.mubr.bf16.gmra.mxu0 %v234
  %v408 = vpop.f32.mrf.mxu0
  %v409 = vadd.f32 %v100, %v408
  %v410 = vpop.f32.mrf.mxu0
  %v411 = vpop.f32.mrf.mxu0
  %v412 = vadd.f32 %v100, %v411
  %v413 = vpop.f32.mrf.mxu0
  %414 = vmatprep.mubr.bf16.mxu0 0
  %415 = vmatmul.mubr.bf16.gmra.mxu0 %v235
  %v416 = vpop.f32.mrf.mxu0
  %v417 = vadd.f32 %v100, %v416
  %v418 = vpop.f32.mrf.mxu0
  %v419 = vpop.f32.mrf.mxu0
  %v420 = vadd.f32 %v100, %v419
  %v421 = vpop.f32.mrf.mxu0
  %422 = vmatprep.mubr.bf16.mxu0 0
  %423 = vmatmul.mubr.bf16.gmra.mxu0 %v236
  %v424 = vpop.f32.mrf.mxu0
  %v425 = vadd.f32 %v100, %v424
  %v426 = vpop.f32.mrf.mxu0
  %v427 = vpop.f32.mrf.mxu0
  %v428 = vadd.f32 %v100, %v427
  %v429 = vpop.f32.mrf.mxu0
  %430 = vmatprep.mubr.bf16.mxu0 0
  %431 = vmatmul.mubr.bf16.gmra.mxu0 %v237
  %v432 = vpop.f32.mrf.mxu0
  %v433 = vadd.f32 %v100, %v432
  %v434 = vpop.f32.mrf.mxu0
  %v435 = vpop.f32.mrf.mxu0
  %v436 = vadd.f32 %v100, %v435
  %v437 = vpop.f32.mrf.mxu0
  %438 = vmatprep.mubr.bf16.mxu0 0
  %439 = vmatmul.mubr.bf16.gmra.mxu0 %v238
  %v440 = vpop.f32.mrf.mxu0
  %v441 = vadd.f32 %v100, %v440
  %v442 = vpop.f32.mrf.mxu0
  %v443 = vpop.f32.mrf.mxu0
  %v444 = vadd.f32 %v100, %v443
  %v445 = vpop.f32.mrf.mxu0
  %446 = vmatprep.mubr.bf16.mxu0 0
  %447 = vmatmul.mubr.bf16.gmra.mxu0 %v239
  %v448 = vpop.f32.mrf.mxu0
  %v449 = vadd.f32 %v100, %v448
  %v450 = vpop.f32.mrf.mxu0
  %v451 = vpop.f32.mrf.mxu0
  %v452 = vadd.f32 %v100, %v451
  %v453 = vpop.f32.mrf.mxu0
  %454 = vmatprep.mubr.bf16.mxu0 0
  %455 = vmatmul.mubr.bf16.gmra.mxu0 %v240
  %v456 = vpop.f32.mrf.mxu0
  %v457 = vadd.f32 %v100, %v456
  %v458 = vpop.f32.mrf.mxu0
  %v459 = vpop.f32.mrf.mxu0
  %v460 = vadd.f32 %v100, %v459
  %v461 = vpop.f32.mrf.mxu0
  %462 = vmatprep.mubr.bf16.mxu0 0
  %463 = vmatmul.mubr.bf16.gmra.mxu0 %v241
  %v464 = vpop.f32.mrf.mxu0
  %v465 = vadd.f32 %v100, %v464
  %v466 = vpop.f32.mrf.mxu0
  %v467 = vpop.f32.mrf.mxu0
  %v468 = vadd.f32 %v100, %v467
  %v469 = vpop.f32.mrf.mxu0
  %470 = vmatprep.mubr.bf16.mxu0 0
  %471 = vmatmul.mubr.bf16.gmra.mxu0 %v242
  %v472 = vpop.f32.mrf.mxu0
  %v473 = vadd.f32 %v100, %v472
  %v474 = vpop.f32.mrf.mxu0
  %v475 = vpop.f32.mrf.mxu0
  %v476 = vadd.f32 %v100, %v475
  %v477 = vpop.f32.mrf.mxu0
  %478 = vmatprep.mubr.bf16.mxu0 0
  %479 = vmatmul.mubr.bf16.gmra.mxu0 %v243
  %v480 = vpop.f32.mrf.mxu0
  %v481 = vadd.f32 %v100, %v480
  %v482 = vpop.f32.mrf.mxu0
  %v483 = vpop.f32.mrf.mxu0
  %v484 = vadd.f32 %v100, %v483
  %v485 = vpop.f32.mrf.mxu0
  %486 = vmatprep.mubr.bf16.mxu0 0
  %487 = vmatmul.mubr.bf16.gmra.mxu0 %v244
  %v488 = vpop.f32.mrf.mxu0
  %v489 = vadd.f32 %v100, %v488
  %v490 = vpop.f32.mrf.mxu0
  %v491 = vpop.f32.mrf.mxu0
  %v492 = vadd.f32 %v100, %v491
  %v493 = vpop.f32.mrf.mxu0
  %494 = vmatprep.mubr.bf16.mxu0 0
  %495 = vmatmul.mubr.bf16.gmra.mxu0 %v245
  %v496 = vpop.f32.mrf.mxu0
  %v497 = vadd.f32 %v100, %v496
  %v498 = vpop.f32.mrf.mxu0
  %v499 = vpop.f32.mrf.mxu0
  %v500 = vadd.f32 %v100, %v499
  %v501 = vpop.f32.mrf.mxu0
  %502 = vmatprep.mubr.bf16.mxu0 0
  %503 = vmatmul.mubr.bf16.gmra.mxu0 %v246
  %v504 = vpop.f32.mrf.mxu0
  %v505 = vadd.f32 %v100, %v504
  %v506 = vpop.f32.mrf.mxu0
  %v507 = vpop.f32.mrf.mxu0
  %v508 = vadd.f32 %v100, %v507
  %v509 = vpop.f32.mrf.mxu0
  %510 = vmatprep.mubr.bf16.mxu0 0
  %511 = vmatmul.mubr.bf16.gmra.mxu0 %v247
  %v512 = vpop.f32.mrf.mxu0
  %v513 = vadd.f32 %v100, %v512
  %v514 = vpop.f32.mrf.mxu0
  %v515 = vpop.f32.mrf.mxu0
  %v516 = vadd.f32 %v100, %v515
  %v517 = vpop.f32.mrf.mxu0
  %518 = vmatprep.mubr.bf16.mxu0 0
  %519 = vmatmul.mubr.bf16.gmra.mxu0 %v248
  %v520 = vpop.f32.mrf.mxu0
  %v521 = vadd.f32 %v100, %v520
  %v522 = vpop.f32.mrf.mxu0
  %v523 = vpop.f32.mrf.mxu0
  %v524 = vadd.f32 %v100, %v523
  %v525 = vpop.f32.mrf.mxu0
  %526 = vmatprep.mubr.bf16.mxu0 0
  %527 = vmatmul.mubr.bf16.gmra.mxu0 %v249
  %v528 = vpop.f32.mrf.mxu0
  %v529 = vadd.f32 %v100, %v528
  %v530 = vpop.f32.mrf.mxu0
  %v531 = vpop.f32.mrf.mxu0
  %v532 = vadd.f32 %v100, %v531
  %v533 = vpop.f32.mrf.mxu0
  %534 = vmatprep.mubr.bf16.mxu0 0
  %535 = vmatmul.mubr.bf16.gmra.mxu0 %v250
  %v536 = vpop.f32.mrf.mxu0
  %v537 = vadd.f32 %v100, %v536
  %v538 = vpop.f32.mrf.mxu0
  %v539 = vpop.f32.mrf.mxu0
  %v540 = vadd.f32 %v100, %v539
  %v541 = vpop.f32.mrf.mxu0
  %542 = vmatprep.mubr.bf16.mxu0 0
  %543 = vmatmul.mubr.bf16.gmra.mxu0 %v251
  %v544 = vpop.f32.mrf.mxu0
  %v545 = vadd.f32 %v100, %v544
  %v546 = vpop.f32.mrf.mxu0
  %v547 = vpop.f32.mrf.mxu0
  %v548 = vadd.f32 %v100, %v547
  %v549 = vpop.f32.mrf.mxu0
  %550 = vmatprep.mubr.bf16.mxu0 0
  %551 = vmatmul.mubr.bf16.gmra.mxu0 %v252
  %v552 = vpop.f32.mrf.mxu0
  %v553 = vadd.f32 %v100, %v552
  %v554 = vpop.f32.mrf.mxu0
  %v555 = vpop.f32.mrf.mxu0
  %v556 = vadd.f32 %v100, %v555
  %v557 = vpop.f32.mrf.mxu0
  %558 = vmatprep.mubr.bf16.mxu0 0
  %559 = vmatmul.mubr.bf16.gmra.mxu0 %v253
  %v560 = vpop.f32.mrf.mxu0
  %v561 = vadd.f32 %v100, %v560
  %v562 = vpop.f32.mrf.mxu0
  %v563 = vpop.f32.mrf.mxu0
  %v564 = vadd.f32 %v100, %v563
  %v565 = vpop.f32.mrf.mxu0
  %566 = vmatprep.mubr.bf16.mxu0 0
  %567 = vmatmul.mubr.bf16.gmra.mxu0 %v254
  %v568 = vpop.f32.mrf.mxu0
  %v569 = vadd.f32 %v100, %v568
  %v570 = vpop.f32.mrf.mxu0
  %v571 = vpop.f32.mrf.mxu0
  %v572 = vadd.f32 %v100, %v571
  %v573 = vpop.f32.mrf.mxu0
  %574 = vmatprep.mubr.bf16.mxu0 0
  %575 = vmatmul.mubr.bf16.gmra.mxu0 %v255
  %v576 = vpop.f32.mrf.mxu0
  %v577 = vadd.f32 %v100, %v576
  %v578 = vpop.f32.mrf.mxu0
  %v579 = vpop.f32.mrf.mxu0
  %v580 = vadd.f32 %v100, %v579
  %v581 = vpop.f32.mrf.mxu0
  %582 = vmatprep.mubr.bf16.mxu0 0
  %583 = vmatmul.mubr.bf16.gmra.mxu0 %v256
  %v584 = vpop.f32.mrf.mxu0
  %v585 = vadd.f32 %v100, %v584
  %v586 = vpop.f32.mrf.mxu0
  %v587 = vpop.f32.mrf.mxu0
  %v588 = vadd.f32 %v100, %v587
  %v589 = vpop.f32.mrf.mxu0
  %590 = vmatprep.mubr.bf16.mxu0 0
  %591 = vmatmul.mubr.bf16.gmra.mxu0 %v257
  %v592 = vpop.f32.mrf.mxu0
  %v593 = vadd.f32 %v100, %v592
  %v594 = vpop.f32.mrf.mxu0
  %v595 = vpop.f32.mrf.mxu0
  %v596 = vadd.f32 %v100, %v595
  %v597 = vpop.f32.mrf.mxu0
  %598 = vmatprep.mubr.bf16.mxu0 0
  %599 = vmatmul.mubr.bf16.gmra.mxu0 %v258
  %v600 = vpop.f32.mrf.mxu0
  %v601 = vadd.f32 %v100, %v600
  %v602 = vpop.f32.mrf.mxu0
  %v603 = vpop.f32.mrf.mxu0
  %v604 = vadd.f32 %v100, %v603
  %v605 = vpop.f32.mrf.mxu0
  %606 = vmatprep.mubr.bf16.mxu0 0
  %607 = vmatmul.mubr.bf16.gmra.mxu0 %v259
  %v608 = vpop.f32.mrf.mxu0
  %v609 = vadd.f32 %v100, %v608
  %v610 = vpop.f32.mrf.mxu0
  %v611 = vpop.f32.mrf.mxu0
  %v612 = vadd.f32 %v100, %v611
  %v613 = vpop.f32.mrf.mxu0
  %614 = vmatprep.mubr.bf16.mxu0 0
  %615 = vmatmul.mubr.bf16.gmra.mxu0 %v260
  %v616 = vpop.f32.mrf.mxu0
  %v617 = vadd.f32 %v100, %v616
  %v618 = vpop.f32.mrf.mxu0
  %v619 = vpop.f32.mrf.mxu0
  %v620 = vadd.f32 %v100, %v619
  %v621 = vpop.f32.mrf.mxu0
  %622 = vmatprep.mubr.bf16.mxu0 0
  %623 = vmatmul.mubr.bf16.gmra.mxu0 %v261
  %v624 = vpop.f32.mrf.mxu0
  %v625 = vadd.f32 %v100, %v624
  %v626 = vpop.f32.mrf.mxu0
  %v627 = vpop.f32.mrf.mxu0
  %v628 = vadd.f32 %v100, %v627
  %v629 = vpop.f32.mrf.mxu0
  %630 = vdwg.mxu0
  %vm631 = vcmp.gt.f32.partialorder %v377, 0.0
  %vm632 = vcmp.gt.f32.partialorder %v380, 0.0
  %vm633 = vcmp.gt.f32.partialorder %v385, 0.0
  %vm634 = vcmp.gt.f32.partialorder %v388, 0.0
  %vm635 = vcmp.gt.f32.partialorder %v393, 0.0
  %vm636 = vcmp.gt.f32.partialorder %v396, 0.0
  %vm637 = vcmp.gt.f32.partialorder %v401, 0.0
  %vm638 = vcmp.gt.f32.partialorder %v404, 0.0
  %vm639 = vcmp.gt.f32.partialorder %v409, 0.0
  %vm640 = vcmp.gt.f32.partialorder %v412, 0.0
  %vm641 = vcmp.gt.f32.partialorder %v417, 0.0
  %vm642 = vcmp.gt.f32.partialorder %v420, 0.0
  %vm643 = vcmp.gt.f32.partialorder %v425, 0.0
  %vm644 = vcmp.gt.f32.partialorder %v428, 0.0
  %vm645 = vcmp.gt.f32.partialorder %v433, 0.0
  %vm646 = vcmp.gt.f32.partialorder %v436, 0.0
  %vm647 = vcmp.gt.f32.partialorder %v441, 0.0
  %vm648 = vcmp.gt.f32.partialorder %v444, 0.0
  %vm649 = vcmp.gt.f32.partialorder %v449, 0.0
  %vm650 = vcmp.gt.f32.partialorder %v452, 0.0
  %vm651 = vcmp.gt.f32.partialorder %v457, 0.0
  %vm652 = vcmp.gt.f32.partialorder %v460, 0.0
  %vm653 = vcmp.gt.f32.partialorder %v465, 0.0
  %vm654 = vcmp.gt.f32.partialorder %v468, 0.0
  %vm655 = vcmp.gt.f32.partialorder %v473, 0.0
  %vm656 = vcmp.gt.f32.partialorder %v476, 0.0
  %vm657 = vcmp.gt.f32.partialorder %v481, 0.0
  %vm658 = vcmp.gt.f32.partialorder %v484, 0.0
  %vm659 = vcmp.gt.f32.partialorder %v489, 0.0
  %vm660 = vcmp.gt.f32.partialorder %v492, 0.0
  %vm661 = vcmp.gt.f32.partialorder %v497, 0.0
  %vm662 = vcmp.gt.f32.partialorder %v500, 0.0
  %vm663 = vcmp.gt.f32.partialorder %v505, 0.0
  %vm664 = vcmp.gt.f32.partialorder %v508, 0.0
  %vm665 = vcmp.gt.f32.partialorder %v513, 0.0
  %vm666 = vcmp.gt.f32.partialorder %v516, 0.0
  %vm667 = vcmp.gt.f32.partialorder %v521, 0.0
  %vm668 = vcmp.gt.f32.partialorder %v524, 0.0
  %vm669 = vcmp.gt.f32.partialorder %v529, 0.0
  %vm670 = vcmp.gt.f32.partialorder %v532, 0.0
  %vm671 = vcmp.gt.f32.partialorder %v537, 0.0
  %vm672 = vcmp.gt.f32.partialorder %v540, 0.0
  %vm673 = vcmp.gt.f32.partialorder %v545, 0.0
  %vm674 = vcmp.gt.f32.partialorder %v548, 0.0
  %vm675 = vcmp.gt.f32.partialorder %v553, 0.0
  %vm676 = vcmp.gt.f32.partialorder %v556, 0.0
  %vm677 = vcmp.gt.f32.partialorder %v561, 0.0
  %vm678 = vcmp.gt.f32.partialorder %v564, 0.0
  %vm679 = vcmp.gt.f32.partialorder %v569, 0.0
  %vm680 = vcmp.gt.f32.partialorder %v572, 0.0
  %vm681 = vcmp.gt.f32.partialorder %v577, 0.0
  %vm682 = vcmp.gt.f32.partialorder %v580, 0.0
  %vm683 = vcmp.gt.f32.partialorder %v585, 0.0
  %vm684 = vcmp.gt.f32.partialorder %v588, 0.0
  %vm685 = vcmp.gt.f32.partialorder %v593, 0.0
  %vm686 = vcmp.gt.f32.partialorder %v596, 0.0
  %vm687 = vcmp.gt.f32.partialorder %v601, 0.0
  %vm688 = vcmp.gt.f32.partialorder %v604, 0.0
  %vm689 = vcmp.gt.f32.partialorder %v609, 0.0
  %vm690 = vcmp.gt.f32.partialorder %v612, 0.0
  %vm691 = vcmp.gt.f32.partialorder %v617, 0.0
  %vm692 = vcmp.gt.f32.partialorder %v620, 0.0
  %vm693 = vcmp.gt.f32.partialorder %v625, 0.0
  %vm694 = vcmp.gt.f32.partialorder %v628, 0.0
  %v695 = vmul.f32 %v377, 0.2
  %v696 = vmul.f32 %v380, 0.2
  %v697 = vmul.f32 %v385, 0.2
  %v698 = vmul.f32 %v388, 0.2
  %v699 = vmul.f32 %v393, 0.2
  %v700 = vmul.f32 %v396, 0.2
  %v701 = vmul.f32 %v401, 0.2
  %v702 = vmul.f32 %v404, 0.2
  %v703 = vmul.f32 %v409, 0.2
  %v704 = vmul.f32 %v412, 0.2
  %v705 = vmul.f32 %v417, 0.2
  %v706 = vmul.f32 %v420, 0.2
  %v707 = vmul.f32 %v425, 0.2
  %v708 = vmul.f32 %v428, 0.2
  %v709 = vmul.f32 %v433, 0.2
  %v710 = vmul.f32 %v436, 0.2
  %v711 = vmul.f32 %v441, 0.2
  %v712 = vmul.f32 %v444, 0.2
  %v713 = vmul.f32 %v449, 0.2
  %v714 = vmul.f32 %v452, 0.2
  %v715 = vmul.f32 %v457, 0.2
  %v716 = vmul.f32 %v460, 0.2
  %v717 = vmul.f32 %v465, 0.2
  %v718 = vmul.f32 %v468, 0.2
  %v719 = vmul.f32 %v473, 0.2
  %v720 = vmul.f32 %v476, 0.2
  %v721 = vmul.f32 %v481, 0.2
  %v722 = vmul.f32 %v484, 0.2
  %v723 = vmul.f32 %v489, 0.2
  %v724 = vmul.f32 %v492, 0.2
  %v725 = vmul.f32 %v497, 0.2
  %v726 = vmul.f32 %v500, 0.2
  %v727 = vmul.f32 %v505, 0.2
  %v728 = vmul.f32 %v508, 0.2
  %v729 = vmul.f32 %v513, 0.2
  %v730 = vmul.f32 %v516, 0.2
  %v731 = vmul.f32 %v521, 0.2
  %v732 = vmul.f32 %v524, 0.2
  %v733 = vmul.f32 %v529, 0.2
  %v734 = vmul.f32 %v532, 0.2
  %v735 = vmul.f32 %v537, 0.2
  %v736 = vmul.f32 %v540, 0.2
  %v737 = vmul.f32 %v545, 0.2
  %v738 = vmul.f32 %v548, 0.2
  %v739 = vmul.f32 %v553, 0.2
  %v740 = vmul.f32 %v556, 0.2
  %v741 = vmul.f32 %v561, 0.2
  %v742 = vmul.f32 %v564, 0.2
  %v743 = vmul.f32 %v569, 0.2
  %v744 = vmul.f32 %v572, 0.2
  %v745 = vmul.f32 %v577, 0.2
  %v746 = vmul.f32 %v580, 0.2
  %v747 = vmul.f32 %v585, 0.2
  %v748 = vmul.f32 %v588, 0.2
  %v749 = vmul.f32 %v593, 0.2
  %v750 = vmul.f32 %v596, 0.2
  %v751 = vmul.f32 %v601, 0.2
  %v752 = vmul.f32 %v604, 0.2
  %v753 = vmul.f32 %v609, 0.2
  %v754 = vmul.f32 %v612, 0.2
  %v755 = vmul.f32 %v617, 0.2
  %v756 = vmul.f32 %v620, 0.2
  %v757 = vmul.f32 %v625, 0.2
  %v758 = vmul.f32 %v628, 0.2
  %v759 = vsel %vm631, %v377, %v695
  %v760 = vsel %vm632, %v380, %v696
  %v761 = vsel %vm633, %v385, %v697
  %v762 = vsel %vm634, %v388, %v698
  %v763 = vsel %vm635, %v393, %v699
  %v764 = vsel %vm636, %v396, %v700
  %v765 = vsel %vm637, %v401, %v701
  %v766 = vsel %vm638, %v404, %v702
  %v767 = vsel %vm639, %v409, %v703
  %v768 = vsel %vm640, %v412, %v704
  %v769 = vsel %vm641, %v417, %v705
  %v770 = vsel %vm642, %v420, %v706
  %v771 = vsel %vm643, %v425, %v707
  %v772 = vsel %vm644, %v428, %v708
  %v773 = vsel %vm645, %v433, %v709
  %v774 = vsel %vm646, %v436, %v710
  %v775 = vsel %vm647, %v441, %v711
  %v776 = vsel %vm648, %v444, %v712
  %v777 = vsel %vm649, %v449, %v713
  %v778 = vsel %vm650, %v452, %v714
  %v779 = vsel %vm651, %v457, %v715
  %v780 = vsel %vm652, %v460, %v716
  %v781 = vsel %vm653, %v465, %v717
  %v782 = vsel %vm654, %v468, %v718
  %v783 = vsel %vm655, %v473, %v719
  %v784 = vsel %vm656, %v476, %v720
  %v785 = vsel %vm657, %v481, %v721
  %v786 = vsel %vm658, %v484, %v722
  %v787 = vsel %vm659, %v489, %v723
  %v788 = vsel %vm660, %v492, %v724
  %v789 = vsel %vm661, %v497, %v725
  %v790 = vsel %vm662, %v500, %v726
  %v791 = vsel %vm663, %v505, %v727
  %v792 = vsel %vm664, %v508, %v728
  %v793 = vsel %vm665, %v513, %v729
  %v794 = vsel %vm666, %v516, %v730
  %v795 = vsel %vm667, %v521, %v731
  %v796 = vsel %vm668, %v524, %v732
  %v797 = vsel %vm669, %v529, %v733
  %v798 = vsel %vm670, %v532, %v734
  %v799 = vsel %vm671, %v537, %v735
  %v800 = vsel %vm672, %v540, %v736
  %v801 = vsel %vm673, %v545, %v737
  %v802 = vsel %vm674, %v548, %v738
  %v803 = vsel %vm675, %v553, %v739
  %v804 = vsel %vm676, %v556, %v740
  %v805 = vsel %vm677, %v561, %v741
  %v806 = vsel %vm678, %v564, %v742
  %v807 = vsel %vm679, %v569, %v743
  %v808 = vsel %vm680, %v572, %v744
  %v809 = vsel %vm681, %v577, %v745
  %v810 = vsel %vm682, %v580, %v746
  %v811 = vsel %vm683, %v585, %v747
  %v812 = vsel %vm684, %v588, %v748
  %v813 = vsel %vm685, %v593, %v749
  %v814 = vsel %vm686, %v596, %v750
  %v815 = vsel %vm687, %v601, %v751
  %v816 = vsel %vm688, %v604, %v752
  %v817 = vsel %vm689, %v609, %v753
  %v818 = vsel %vm690, %v612, %v754
  %v819 = vsel %vm691, %v617, %v755
  %v820 = vsel %vm692, %v620, %v756
  %v821 = vsel %vm693, %v625, %v757
  %v822 = vsel %vm694, %v628, %v758
  %v823 = vpack.c.bf16 %v760, %v759
  %v824 = vpack.c.bf16 %v762, %v761
  %v825 = vpack.c.bf16 %v764, %v763
  %v826 = vpack.c.bf16 %v766, %v765
  %v827 = vpack.c.bf16 %v768, %v767
  %v828 = vpack.c.bf16 %v770, %v769
  %v829 = vpack.c.bf16 %v772, %v771
  %v830 = vpack.c.bf16 %v774, %v773
  %v831 = vpack.c.bf16 %v776, %v775
  %v832 = vpack.c.bf16 %v778, %v777
  %v833 = vpack.c.bf16 %v780, %v779
  %v834 = vpack.c.bf16 %v782, %v781
  %v835 = vpack.c.bf16 %v784, %v783
  %v836 = vpack.c.bf16 %v786, %v785
  %v837 = vpack.c.bf16 %v788, %v787
  %v838 = vpack.c.bf16 %v790, %v789
  %v839 = vpack.c.bf16 %v792, %v791
  %v840 = vpack.c.bf16 %v794, %v793
  %v841 = vpack.c.bf16 %v796, %v795
  %v842 = vpack.c.bf16 %v798, %v797
  %v843 = vpack.c.bf16 %v800, %v799
  %v844 = vpack.c.bf16 %v802, %v801
  %v845 = vpack.c.bf16 %v804, %v803
  %v846 = vpack.c.bf16 %v806, %v805
  %v847 = vpack.c.bf16 %v808, %v807
  %v848 = vpack.c.bf16 %v810, %v809
  %v849 = vpack.c.bf16 %v812, %v811
  %v850 = vpack.c.bf16 %v814, %v813
  %v851 = vpack.c.bf16 %v816, %v815
  %v852 = vpack.c.bf16 %v818, %v817
  %v853 = vpack.c.bf16 %v820, %v819
  %v854 = vpack.c.bf16 %v822, %v821
  %v887 = vunpack.c.l.b16 %v823
  %v888 = vunpack.c.h.b16 %v823
  %v889 = vunpack.c.l.b16 %v824
  %v890 = vunpack.c.h.b16 %v824
  %v891 = vunpack.c.l.b16 %v825
  %v892 = vunpack.c.h.b16 %v825
  %v893 = vunpack.c.l.b16 %v826
  %v894 = vunpack.c.h.b16 %v826
  %v895 = vunpack.c.l.b16 %v827
  %v896 = vunpack.c.h.b16 %v827
  %v897 = vunpack.c.l.b16 %v828
  %v898 = vunpack.c.h.b16 %v828
  %v899 = vunpack.c.l.b16 %v829
  %v900 = vunpack.c.h.b16 %v829
  %v901 = vunpack.c.l.b16 %v830
  %v902 = vunpack.c.h.b16 %v830
  %v903 = vunpack.c.l.b16 %v831
  %v904 = vunpack.c.h.b16 %v831
  %v905 = vunpack.c.l.b16 %v832
  %v906 = vunpack.c.h.b16 %v832
  %v907 = vunpack.c.l.b16 %v833
  %v908 = vunpack.c.h.b16 %v833
  %v909 = vunpack.c.l.b16 %v834
  %v910 = vunpack.c.h.b16 %v834
  %v911 = vunpack.c.l.b16 %v835
  %v912 = vunpack.c.h.b16 %v835
  %v913 = vunpack.c.l.b16 %v836
  %v914 = vunpack.c.h.b16 %v836
  %v915 = vunpack.c.l.b16 %v837
  %v916 = vunpack.c.h.b16 %v837
  %v917 = vunpack.c.l.b16 %v838
  %v918 = vunpack.c.h.b16 %v838
  %v919 = vunpack.c.l.b16 %v839
  %v920 = vunpack.c.h.b16 %v839
  %v921 = vunpack.c.l.b16 %v840
  %v922 = vunpack.c.h.b16 %v840
  %v923 = vunpack.c.l.b16 %v841
  %v924 = vunpack.c.h.b16 %v841
  %v925 = vunpack.c.l.b16 %v842
  %v926 = vunpack.c.h.b16 %v842
  %v927 = vunpack.c.l.b16 %v843
  %v928 = vunpack.c.h.b16 %v843
  %v929 = vunpack.c.l.b16 %v844
  %v930 = vunpack.c.h.b16 %v844
  %v931 = vunpack.c.l.b16 %v845
  %v932 = vunpack.c.h.b16 %v845
  %v933 = vunpack.c.l.b16 %v846
  %v934 = vunpack.c.h.b16 %v846
  %v935 = vunpack.c.l.b16 %v847
  %v936 = vunpack.c.h.b16 %v847
  %v937 = vunpack.c.l.b16 %v848
  %v938 = vunpack.c.h.b16 %v848
  %v939 = vunpack.c.l.b16 %v849
  %v940 = vunpack.c.h.b16 %v849
  %v941 = vunpack.c.l.b16 %v850
  %v942 = vunpack.c.h.b16 %v850
  %v943 = vunpack.c.l.b16 %v851
  %v944 = vunpack.c.h.b16 %v851
  %v945 = vunpack.c.l.b16 %v852
  %v946 = vunpack.c.h.b16 %v852
  %v947 = vunpack.c.l.b16 %v853
  %v948 = vunpack.c.h.b16 %v853
  %v949 = vunpack.c.l.b16 %v854
  %v950 = vunpack.c.h.b16 %v854
  %v951 = vpack.c.b16 %v887, %v887
  %v952 = vpack.c.b16 %v888, %v888
  %v953 = vpack.c.b16 %v889, %v889
  %v954 = vpack.c.b16 %v890, %v890
  %v955 = vpack.c.b16 %v891, %v891
  %v956 = vpack.c.b16 %v892, %v892
  %v957 = vpack.c.b16 %v893, %v893
  %v958 = vpack.c.b16 %v894, %v894
  %v959 = vpack.c.b16 %v895, %v895
  %v960 = vpack.c.b16 %v896, %v896
  %v961 = vpack.c.b16 %v897, %v897
  %v962 = vpack.c.b16 %v898, %v898
  %v963 = vpack.c.b16 %v899, %v899
  %v964 = vpack.c.b16 %v900, %v900
  %v965 = vpack.c.b16 %v901, %v901
  %v966 = vpack.c.b16 %v902, %v902
  %v967 = vpack.c.b16 %v903, %v903
  %v968 = vpack.c.b16 %v904, %v904
  %v969 = vpack.c.b16 %v905, %v905
  %v970 = vpack.c.b16 %v906, %v906
  %v971 = vpack.c.b16 %v907, %v907
  %v972 = vpack.c.b16 %v908, %v908
  %v973 = vpack.c.b16 %v909, %v909
  %v974 = vpack.c.b16 %v910, %v910
  %v975 = vpack.c.b16 %v911, %v911
  %v976 = vpack.c.b16 %v912, %v912
  %v977 = vpack.c.b16 %v913, %v913
  %v978 = vpack.c.b16 %v914, %v914
  %v979 = vpack.c.b16 %v915, %v915
  %v980 = vpack.c.b16 %v916, %v916
  %v981 = vpack.c.b16 %v917, %v917
  %v982 = vpack.c.b16 %v918, %v918
  %v983 = vpack.c.b16 %v919, %v919
  %v984 = vpack.c.b16 %v920, %v920
  %v985 = vpack.c.b16 %v921, %v921
  %v986 = vpack.c.b16 %v922, %v922
  %v987 = vpack.c.b16 %v923, %v923
  %v988 = vpack.c.b16 %v924, %v924
  %v989 = vpack.c.b16 %v925, %v925
  %v990 = vpack.c.b16 %v926, %v926
  %v991 = vpack.c.b16 %v927, %v927
  %v992 = vpack.c.b16 %v928, %v928
  %v993 = vpack.c.b16 %v929, %v929
  %v994 = vpack.c.b16 %v930, %v930
  %v995 = vpack.c.b16 %v931, %v931
  %v996 = vpack.c.b16 %v932, %v932
  %v997 = vpack.c.b16 %v933, %v933
  %v998 = vpack.c.b16 %v934, %v934
  %v999 = vpack.c.b16 %v935, %v935
  %v1000 = vpack.c.b16 %v936, %v936
  %v1001 = vpack.c.b16 %v937, %v937
  %v1002 = vpack.c.b16 %v938, %v938
  %v1003 = vpack.c.b16 %v939, %v939
  %v1004 = vpack.c.b16 %v940, %v940
  %v1005 = vpack.c.b16 %v941, %v941
  %v1006 = vpack.c.b16 %v942, %v942
  %v1007 = vpack.c.b16 %v943, %v943
  %v1008 = vpack.c.b16 %v944, %v944
  %v1009 = vpack.c.b16 %v945, %v945
  %v1010 = vpack.c.b16 %v946, %v946
  %v1011 = vpack.c.b16 %v947, %v947
  %v1012 = vpack.c.b16 %v948, %v948
  %v1013 = vpack.c.b16 %v949, %v949
  %v1014 = vpack.c.b16 %v950, %v950
  %1079 = vst [vmem:[%s3] sm:$0xf] %v951
  %1080 = vst [vmem:[%s3 + $0x4] sm:$0xf] %v952
  %1081 = vst [vmem:[%s3 + $0x8] sm:$0xf] %v953
  %1082 = vst [vmem:[%s3 + $0xc] sm:$0xf] %v954
  %1083 = vst [vmem:[%s3 + $0x10] sm:$0xf] %v955
  %1084 = vst [vmem:[%s3 + $0x14] sm:$0xf] %v956
  %1085 = vst [vmem:[%s3 + $0x18] sm:$0xf] %v957
  %1086 = vst [vmem:[%s3 + $0x1c] sm:$0xf] %v958
  %1087 = vst [vmem:[%s3 + $0x20] sm:$0xf] %v959
  %1088 = vst [vmem:[%s3 + $0x24] sm:$0xf] %v960
  %1089 = vst [vmem:[%s3 + $0x28] sm:$0xf] %v961
  %1090 = vst [vmem:[%s3 + $0x2c] sm:$0xf] %v962
  %1091 = vst [vmem:[%s3 + $0x30] sm:$0xf] %v963
  %1092 = vst [vmem:[%s3 + $0x34] sm:$0xf] %v964
  %1093 = vst [vmem:[%s3 + $0x38] sm:$0xf] %v965
  %1094 = vst [vmem:[%s3 + $0x3c] sm:$0xf] %v966
  %1095 = vst [vmem:[%s3 + $0x40] sm:$0xf] %v967
  %1096 = vst [vmem:[%s3 + $0x44] sm:$0xf] %v968
  %1097 = vst [vmem:[%s3 + $0x48] sm:$0xf] %v969
  %1098 = vst [vmem:[%s3 + $0x4c] sm:$0xf] %v970
  %1099 = vst [vmem:[%s3 + $0x50] sm:$0xf] %v971
  %1100 = vst [vmem:[%s3 + $0x54] sm:$0xf] %v972
  %1101 = vst [vmem:[%s3 + $0x58] sm:$0xf] %v973
  %1102 = vst [vmem:[%s3 + $0x5c] sm:$0xf] %v974
  %1103 = vst [vmem:[%s3 + $0x60] sm:$0xf] %v975
  %1104 = vst [vmem:[%s3 + $0x64] sm:$0xf] %v976
  %1105 = vst [vmem:[%s3 + $0x68] sm:$0xf] %v977
  %1106 = vst [vmem:[%s3 + $0x6c] sm:$0xf] %v978
  %1107 = vst [vmem:[%s3 + $0x70] sm:$0xf] %v979
  %1108 = vst [vmem:[%s3 + $0x74] sm:$0xf] %v980
  %1109 = vst [vmem:[%s3 + $0x78] sm:$0xf] %v981
  %1110 = vst [vmem:[%s3 + $0x7c] sm:$0xf] %v982
  %1111 = vst [vmem:[%s3 + $0x80] sm:$0xf] %v983
  %1112 = vst [vmem:[%s3 + $0x84] sm:$0xf] %v984
  %1113 = vst [vmem:[%s3 + $0x88] sm:$0xf] %v985
  %1114 = vst [vmem:[%s3 + $0x8c] sm:$0xf] %v986
  %1115 = vst [vmem:[%s3 + $0x90] sm:$0xf] %v987
  %1116 = vst [vmem:[%s3 + $0x94] sm:$0xf] %v988
  %1117 = vst [vmem:[%s3 + $0x98] sm:$0xf] %v989
  %1118 = vst [vmem:[%s3 + $0x9c] sm:$0xf] %v990
  %1119 = vst [vmem:[%s3 + $0xa0] sm:$0xf] %v991
  %1120 = vst [vmem:[%s3 + $0xa4] sm:$0xf] %v992
  %1121 = vst [vmem:[%s3 + $0xa8] sm:$0xf] %v993
  %1122 = vst [vmem:[%s3 + $0xac] sm:$0xf] %v994
  %1123 = vst [vmem:[%s3 + $0xb0] sm:$0xf] %v995
  %1124 = vst [vmem:[%s3 + $0xb4] sm:$0xf] %v996
  %1125 = vst [vmem:[%s3 + $0xb8] sm:$0xf] %v997
  %1126 = vst [vmem:[%s3 + $0xbc] sm:$0xf] %v998
  %1127 = vst [vmem:[%s3 + $0xc0] sm:$0xf] %v999
  %1128 = vst [vmem:[%s3 + $0xc4] sm:$0xf] %v1000
  %1129 = vst [vmem:[%s3 + $0xc8] sm:$0xf] %v1001
  %1130 = vst [vmem:[%s3 + $0xcc] sm:$0xf] %v1002
  %1131 = vst [vmem:[%s3 + $0xd0] sm:$0xf] %v1003
  %1132 = vst [vmem:[%s3 + $0xd4] sm:$0xf] %v1004
  %1133 = vst [vmem:[%s3 + $0xd8] sm:$0xf] %v1005
  %1134 = vst [vmem:[%s3 + $0xdc] sm:$0xf] %v1006
  %1135 = vst [vmem:[%s3 + $0xe0] sm:$0xf] %v1007
  %1136 = vst [vmem:[%s3 + $0xe4] sm:$0xf] %v1008
  %1137 = vst [vmem:[%s3 + $0xe8] sm:$0xf] %v1009
  %1138 = vst [vmem:[%s3 + $0xec] sm:$0xf] %v1010
  %1139 = vst [vmem:[%s3 + $0xf0] sm:$0xf] %v1011
  %1140 = vst [vmem:[%s3 + $0xf4] sm:$0xf] %v1012
  %1141 = vst [vmem:[%s3 + $0xf8] sm:$0xf] %v1013
  %1142 = vst [vmem:[%s3 + $0xfc] sm:$0xf] %v1014
  // Predicated region
  $region14: #{_lambda_.5} parent=0 // pred_check
    _
  $region15: #{_lambda_.5} parent=0 // pred_check_branch
    %1144 = sbr.rel (0) target = $region17
  $region16: #{_lambda_.5} parent=0 // pred_region
    _
  $region17: #{_lambda_.5} parent=0 // pred_fallthru
    _
  // Predicated region
  $region18: #{_lambda_.5} parent=0 // pred_check
    _
  $region19: #{_lambda_.5} parent=0 // pred_check_branch
    %1146 = sbr.rel (0) target = $region21
  $region20: #{_lambda_.5} parent=0 // pred_region
    _
  $region21: #{_lambda_.5} parent=0 // pred_fallthru
    _

// kernel: _lambda_.6
$region0: #{_lambda_.6}
  #allocation0 [shape = 'u32[]', space=smem, size = 0x4, offset = 0x4, fixed_abs, tag = 'smem constant byte address 0x4 - core index']
  #allocation1 [shape = 'u32[144,128]{1,0:T(1,128)}', space=vmem, size = 0x12000, scoped, tag = 'internal scratch']
  #allocation2 [shape = 'f32[1,128,128]{2,1,0:T(8,128)}', space=vmem, size = 0x10000, scoped, tag = 'scratch operand']
  #allocation3 [shape = 'f32[1,128]{1,0:T(1,128)}', space=vmem, size = 0x200, scoped, tag = 'scratch operand']
  #allocation4 [shape = 'f32[1,128]{1,0:T(1,128)}', space=vmem, size = 0x200, scoped, tag = 'scratch operand']
  #allocation5 [shape = 'f32[1,128]{1,0:T(1,128)}', space=vmem, size = 0x200, scoped, tag = 'scratch operand']
  #allocation6 [shape = 'f32[1,128]{1,0:T(1,128)}', space=vmem, size = 0x200, scoped, tag = 'scratch operand']
  %s0 = inlined_call_operand.vmem [shape: bf16[128,128], index: 0, kind: input, shape index: {}]
  %s1 = inlined_call_operand.vmem [shape: bf16[128,128], index: 1, kind: input, shape index: {}]
  %s2 = inlined_call_operand.vmem [shape: f32[1,128], index: 2, kind: input, shape index: {}]
  %s3 = inlined_call_operand.vmem [shape: f32[1,128], index: 3, kind: input, shape index: {}]
  %s4 = inlined_call_operand.vmem [shape: bf16[128,128], index: 4, kind: output, shape index: {}]
  %s5 = sld [smem:[#allocation0]]
  $region65: #{_lambda_.6} parent=0
    _
  %s7 = ssub.s32 1, %s5
  %s8 = scalar_select 0, %s7, %s5
  loop: start=0, step=1, limit=4
  $region2: #{_lambda_.6} parent=0 // loop_pre_header
    _
  $region3: #{_lambda_.6} parent=0 // loop_header
    %s10 = sphi 0, %s14
    %p11 = scmp.ge.s32.totalorder %s10, 4
    %s17 = sphi 0, %s29
    %s18 = sphi 0, %s25
    %s19 = sphi 0, %s17
    %s20 = sphi 0, %s18
    %s21 = sphi 0, %s19
    %s22 = sphi 0, %s20
    %s36 = sphi 0, %s38
    %s39 = sphi 0, %s36
    %s40 = sphi 0, %s39
    %s56 = sphi 0, %s40
    %s60 = sphi 0, %s60
    %s62 = sphi 0, %s60
    %s63 = sphi 0, %s62
    %s77 = sphi 0, %s63
    %s81 = sphi 0, %s81
    %s83 = sphi 0, %s81
    %s84 = sphi 0, %s83
    %s98 = sphi 0, %s84
    %s102 = sphi 0, %s102
    %s104 = sphi 0, %s102
    %s105 = sphi 0, %s104
    %s119 = sphi 0, %s105
    %s127 = sphi 0, %s129
    %s130 = sphi 0, %s127
    %s131 = sphi 0, %s130
    %s147 = sphi 0, %s131
  $region4: #{_lambda_.6} parent=0 // loop_header_branch
    %13 = sbr.rel (%p11) target = $region8
  $region5: #{_lambda_.6} parent=0 // loop_body
    %s15 = ssub.s32 %s10, 1
    %s16 = ssub.s32 %s10, 2
    %s23 = sadd.s32 1, %s18
    %p24 = scmp.ge.s32.totalorder %s23, 1
    %s25 = scalar_select %p24, 0, %s23
    %s26 = sadd.s32 1, %s17
    %s27 = scalar_select %p24, %s26, %s17
    %p28 = scmp.ge.s32.totalorder %s27, 2
    %s29 = scalar_select %p28, 0, %s27
    %s30 = ssub.s32 1, %s17
    %s31 = smul.u32 %s18, %s30
    %s32 = ssub.s32 1, %s29
    %s33 = smul.u32 %s25, %s32
    %s34 = ssub.s32 %s31, %s33
    %p35 = scmp.eq.s32.totalorder %s34, 0
    %s37 = sadd.s32 %s36, 1
    %s38 = scalar_select %p35, %s36, %s37
    %p41 = pneg %p35
    %p42 = scmp.eq.s32.totalorder %s10, 1
    %p43 = por %p41, %p42
    %p44 = scmp.ne.s32.totalorder %s36, %s39
    %p45 = scmp.eq.s32.totalorder %s10, 0
    %p46 = por %p44, %p45
    %p47 = scmp.ne.s32.totalorder %s36, %s39
    %p48 = scmp.eq.s32.totalorder %s15, 1
    %p49 = por %p47, %p48
    %p50 = scmp.ne.s32.totalorder %s39, %s40
    %p51 = scmp.eq.s32.totalorder %s15, 0
    %p52 = por %p50, %p51
    %p53 = scmp.ne.s32.totalorder %s39, %s40
    %p54 = scmp.eq.s32.totalorder %s16, 1
    %p55 = por %p53, %p54
    %p57 = scmp.ne.s32.totalorder %s40, %s56
    %p58 = scmp.eq.s32.totalorder %s16, 0
    %p59 = por %p57, %p58
    %s61 = sadd.s32 %s60, 1
    %p64 = scmp.eq.s32.totalorder %s10, 1
    %p65 = scmp.ne.s32.totalorder %s60, %s62
    %p66 = scmp.eq.s32.totalorder %s10, 0
    %p67 = por %p65, %p66
    %p68 = scmp.ne.s32.totalorder %s60, %s62
    %p69 = scmp.eq.s32.totalorder %s15, 1
    %p70 = por %p68, %p69
    %p71 = scmp.ne.s32.totalorder %s62, %s63
    %p72 = scmp.eq.s32.totalorder %s15, 0
    %p73 = por %p71, %p72
    %p74 = scmp.ne.s32.totalorder %s62, %s63
    %p75 = scmp.eq.s32.totalorder %s16, 1
    %p76 = por %p74, %p75
    %p78 = scmp.ne.s32.totalorder %s63, %s77
    %p79 = scmp.eq.s32.totalorder %s16, 0
    %p80 = por %p78, %p79
    %s82 = sadd.s32 %s81, 1
    %p85 = scmp.eq.s32.totalorder %s10, 1
    %p86 = scmp.ne.s32.totalorder %s81, %s83
    %p87 = scmp.eq.s32.totalorder %s10, 0
    %p88 = por %p86, %p87
    %p89 = scmp.ne.s32.totalorder %s81, %s83
    %p90 = scmp.eq.s32.totalorder %s15, 1
    %p91 = por %p89, %p90
    %p92 = scmp.ne.s32.totalorder %s83, %s84
    %p93 = scmp.eq.s32.totalorder %s15, 0
    %p94 = por %p92, %p93
    %p95 = scmp.ne.s32.totalorder %s83, %s84
    %p96 = scmp.eq.s32.totalorder %s16, 1
    %p97 = por %p95, %p96
    %p99 = scmp.ne.s32.totalorder %s84, %s98
    %p100 = scmp.eq.s32.totalorder %s16, 0
    %p101 = por %p99, %p100
    %s103 = sadd.s32 %s102, 1
    %p106 = scmp.eq.s32.totalorder %s10, 1
    %p107 = scmp.ne.s32.totalorder %s102, %s104
    %p108 = scmp.eq.s32.totalorder %s10, 0
    %p109 = por %p107, %p108
    %p110 = scmp.ne.s32.totalorder %s102, %s104
    %p111 = scmp.eq.s32.totalorder %s15, 1
    %p112 = por %p110, %p111
    %p113 = scmp.ne.s32.totalorder %s104, %s105
    %p114 = scmp.eq.s32.totalorder %s15, 0
    %p115 = por %p113, %p114
    %p116 = scmp.ne.s32.totalorder %s104, %s105
    %p117 = scmp.eq.s32.totalorder %s16, 1
    %p118 = por %p116, %p117
    %p120 = scmp.ne.s32.totalorder %s105, %s119
    %p121 = scmp.eq.s32.totalorder %s16, 0
    %p122 = por %p120, %p121
    %s123 = smul.u32 %s18, %s17
    %s124 = smul.u32 %s25, %s29
    %s125 = ssub.s32 %s123, %s124
    %p126 = scmp.eq.s32.totalorder %s125, 0
    %s128 = sadd.s32 %s127, 1
    %s129 = scalar_select %p126, %s127, %s128
    %p132 = pneg %p126
    %p133 = scmp.eq.s32.totalorder %s10, 1
    %p134 = por %p132, %p133
    %p135 = scmp.ne.s32.totalorder %s127, %s130
    %p136 = scmp.eq.s32.totalorder %s10, 0
    %p137 = por %p135, %p136
    %p138 = scmp.ne.s32.totalorder %s127, %s130
    %p139 = scmp.eq.s32.totalorder %s15, 1
    %p140 = por %p138, %p139
    %p141 = scmp.ne.s32.totalorder %s130, %s131
    %p142 = scmp.eq.s32.totalorder %s15, 0
    %p143 = por %p141, %p142
    %p144 = scmp.ne.s32.totalorder %s130, %s131
    %p145 = scmp.eq.s32.totalorder %s16, 1
    %p146 = por %p144, %p145
    %p148 = scmp.ne.s32.totalorder %s131, %s147
    %p149 = scmp.eq.s32.totalorder %s16, 0
    %p150 = por %p148, %p149
    %p151 = scmp.le.s32.totalorder 1, %s10
    %p152 = scmp.lt.s32.totalorder %s10, 3
    %p153 = pnand %p151, %p152
    %p154 = pneg %p153
    // Predicated region
    $region9: #{_lambda_.6} parent=5 // pred_check
      _
    $region10: #{_lambda_.6} parent=5 // pred_check_branch
      %156 = sbr.rel (%p153) target = $region12
    $region11: #{_lambda_.6} parent=5 // pred_region
      %s157 = ssub.s32 %s10, 1
      // Predicated region
      $region13: #{_lambda_.6} parent=11 // pred_check
        %p158 = pneg %p73
      $region14: #{_lambda_.6} parent=11 // pred_check_branch
        %160 = sbr.rel (%p158) target = $region16
      $region15: #{_lambda_.6} parent=11 // pred_region
        _
      $region16: #{_lambda_.6} parent=11 // pred_fallthru
        _
      // Predicated region
      $region17: #{_lambda_.6} parent=11 // pred_check
        %p161 = pneg %p94
      $region18: #{_lambda_.6} parent=11 // pred_check_branch
        %163 = sbr.rel (%p161) target = $region20
      $region19: #{_lambda_.6} parent=11 // pred_region
        _
      $region20: #{_lambda_.6} parent=11 // pred_fallthru
        _
      // Predicated region
      $region21: #{_lambda_.6} parent=11 // pred_check
        %p164 = pneg %p115
      $region22: #{_lambda_.6} parent=11 // pred_check_branch
        %166 = sbr.rel (%p164) target = $region24
      $region23: #{_lambda_.6} parent=11 // pred_region
        _
      $region24: #{_lambda_.6} parent=11 // pred_fallthru
        _
    $region12: #{_lambda_.6} parent=5 // pred_fallthru
      _
    %p167 = scmp.lt.s32.totalorder %s10, 2
    // Predicated region
    $region25: #{_lambda_.6} parent=5 // pred_check
      %p168 = pneg %p167
    $region26: #{_lambda_.6} parent=5 // pred_check_branch
      %170 = sbr.rel (%p168) target = $region28
    $region27: #{_lambda_.6} parent=5 // pred_region
      // Predicated region
      $region29: #{_lambda_.6} parent=27 // pred_check
        %p171 = pneg %p46
      $region30: #{_lambda_.6} parent=27 // pred_check_branch
        %173 = sbr.rel (%p171) target = $region32
      $region31: #{_lambda_.6} parent=27 // pred_region
        %s174 = ssub.s32 1, %s17
        %s175 = smul.u32 %s18, %s174
        %s176 = smul.u32 16, %s175
        %p177 = scmp.lt.s32.totalorder %s176, 15
        %s178 = scalar_select %p177, %s176, 15
        %s179 = smul.addr %s178, 4
        %s180 = scalar_lea.vmem %s0, %s179
        %s181 = ssub.s32 1, %s17
        %s182 = smul.u32 %s18, %s181
        %s183 = smul.u32 16, %s182
      $region32: #{_lambda_.6} parent=27 // pred_fallthru
        _
    $region28: #{_lambda_.6} parent=5 // pred_fallthru
      _
    %p184 = scmp.le.s32.totalorder 1, %s10
    %p185 = scmp.lt.s32.totalorder %s10, 3
    %p186 = pnand %p184, %p185
    %p187 = pneg %p186
    // Predicated region
    $region33: #{_lambda_.6} parent=5 // pred_check
      _
    $region34: #{_lambda_.6} parent=5 // pred_check_branch
      %189 = sbr.rel (%p186) target = $region36
    $region35: #{_lambda_.6} parent=5 // pred_region
      %s190 = ssub.s32 %s10, 1
      %s191 = ssub.s32 1, %s19
      %s192 = smul.u32 %s20, %s191
      %s193 = smul.u32 16, %s192
      %p194 = scmp.lt.s32.totalorder %s193, 15
      %s195 = scalar_select %p194, %s193, 15
      %s196 = smul.addr %s195, 4
      %s197 = scalar_lea.vmem %s0, %s196
      %p198 = pneg %p52
      %p199 = pneg %p49
      %p200 = pneg %p73
      %p201 = pneg %p70
      %p202 = pneg %p94
      %p203 = pneg %p91
      %p204 = pneg %p115
      %p205 = pneg %p112
      %p206 = pneg %p143
      %p207 = pneg %p140
      %s208 = smul.u32 %s20, %s19
      %s209 = smul.u32 16, %s208
      %p210 = scmp.lt.s32.totalorder %s209, 15
      %s211 = scalar_select %p210, %s209, 15
      %s212 = smul.addr %s211, 4
      %s213 = scalar_lea.vmem %s4, %s212
      %s214 = ssub.s32 1, %s19
      %s215 = smul.u32 %s20, %s214
      %s216 = smul.u32 16, %s215
      %p217 = scmp.lt.s32.totalorder %s216, 15
      %s218 = scalar_select %p217, %s216, 15
      %s219 = smul.addr %s218, 4
      %s220 = scalar_lea.vmem %s0, %s219
      %s221 = ssub.s32 1, %s19
      %s222 = smul.u32 %s20, %s221
      %s223 = smul.u32 16, %s222
      %s224 = smul.u32 %s20, %s19
      %s225 = smul.u32 16, %s224
      %p226 = scmp.lt.s32.totalorder %s225, 15
      %s227 = scalar_select %p226, %s225, 15
      %s228 = smul.addr %s227, 4
      %s229 = scalar_lea.vmem %s4, %s228
      %s230 = smul.u32 %s20, %s19
      %s231 = smul.u32 16, %s230
      %p233 = scmp.eq.s32.totalorder %s19, 0
      // Predicated region
      $region37: #{_lambda_.6} parent=35 // pred_check
        %p234 = pneg %p233
      $region38: #{_lambda_.6} parent=35 // pred_check_branch
        %236 = sbr.rel (%p234) target = $region40
      $region39: #{_lambda_.6} parent=35 // pred_region
        %p237 = scmp.eq.s32.totalorder %s20, 0
        // Predicated region
        $region41: #{_lambda_.6} parent=39 // pred_check
          %p238 = pneg %p237
        $region42: #{_lambda_.6} parent=39 // pred_check_branch
          %240 = sbr.rel (%p238) target = $region44
        $region43: #{_lambda_.6} parent=39 // pred_region
          %241 = vst [vmem:[#allocation3] sm:$0x1] 0.0
          %242 = vst [vmem:[#allocation4] sm:$0x1] 0.0
        $region44: #{_lambda_.6} parent=39 // pred_fallthru
          _
        %v243 = vld [vmem:[%s220] sm:$0xf]
        %v244 = vld [vmem:[%s220 + $0x4] sm:$0xf]
        %v245 = vld [vmem:[%s220 + $0x8] sm:$0xf]
        %v246 = vld [vmem:[%s220 + $0xc] sm:$0xf]
        %v247 = vld [vmem:[%s220 + $0x10] sm:$0xf]
        %v248 = vld [vmem:[%s220 + $0x14] sm:$0xf]
        %v249 = vld [vmem:[%s220 + $0x18] sm:$0xf]
        %v250 = vld [vmem:[%s220 + $0x1c] sm:$0xf]
        %v251 = vld [vmem:[%s220 + $0x20] sm:$0xf]
        %v252 = vld [vmem:[%s220 + $0x24] sm:$0xf]
        %v253 = vld [vmem:[%s220 + $0x28] sm:$0xf]
        %v254 = vld [vmem:[%s220 + $0x2c] sm:$0xf]
        %v255 = vld [vmem:[%s220 + $0x30] sm:$0xf]
        %v256 = vld [vmem:[%s220 + $0x34] sm:$0xf]
        %v257 = vld [vmem:[%s220 + $0x38] sm:$0xf]
        %v258 = vld [vmem:[%s220 + $0x3c] sm:$0xf]
        %v259 = vld [vmem:[%s1] sm:$0xf]
        %v260 = vld [vmem:[%s1 + $0x4] sm:$0xf]
        %v261 = vld [vmem:[%s1 + $0x8] sm:$0xf]
        %v262 = vld [vmem:[%s1 + $0xc] sm:$0xf]
        %v263 = vld [vmem:[%s1 + $0x10] sm:$0xf]
        %v264 = vld [vmem:[%s1 + $0x14] sm:$0xf]
        %v265 = vld [vmem:[%s1 + $0x18] sm:$0xf]
        %v266 = vld [vmem:[%s1 + $0x1c] sm:$0xf]
        %v267 = vld [vmem:[%s1 + $0x20] sm:$0xf]
        %v268 = vld [vmem:[%s1 + $0x24] sm:$0xf]
        %v269 = vld [vmem:[%s1 + $0x28] sm:$0xf]
        %v270 = vld [vmem:[%s1 + $0x2c] sm:$0xf]
        %v271 = vld [vmem:[%s1 + $0x30] sm:$0xf]
        %v272 = vld [vmem:[%s1 + $0x34] sm:$0xf]
        %v273 = vld [vmem:[%s1 + $0x38] sm:$0xf]
        %v274 = vld [vmem:[%s1 + $0x3c] sm:$0xf]
        %v291 = vunpack.c.l.b16 %v243
        %v292 = vunpack.c.l.b16 %v244
        %v293 = vunpack.c.l.b16 %v245
        %v294 = vunpack.c.l.b16 %v246
        %v295 = vunpack.c.l.b16 %v247
        %v296 = vunpack.c.l.b16 %v248
        %v297 = vunpack.c.l.b16 %v249
        %v298 = vunpack.c.l.b16 %v250
        %v299 = vunpack.c.l.b16 %v251
        %v300 = vunpack.c.l.b16 %v252
        %v301 = vunpack.c.l.b16 %v253
        %v302 = vunpack.c.l.b16 %v254
        %v303 = vunpack.c.l.b16 %v255
        %v304 = vunpack.c.l.b16 %v256
        %v305 = vunpack.c.l.b16 %v257
        %v306 = vunpack.c.l.b16 %v258
        %v307 = vpack.c.b16 %v292, %v291
        %v308 = vpack.c.b16 %v294, %v293
        %v309 = vpack.c.b16 %v296, %v295
        %v310 = vpack.c.b16 %v298, %v297
        %v311 = vpack.c.b16 %v300, %v299
        %v312 = vpack.c.b16 %v302, %v301
        %v313 = vpack.c.b16 %v304, %v303
        %v314 = vpack.c.b16 %v306, %v305
        %v339 = vunpack.c.l.b16 %v259
        %v340 = vunpack.c.l.b16 %v260
        %v341 = vunpack.c.l.b16 %v261
        %v342 = vunpack.c.l.b16 %v262
        %v343 = vunpack.c.l.b16 %v263
        %v344 = vunpack.c.l.b16 %v264
        %v345 = vunpack.c.l.b16 %v265
        %v346 = vunpack.c.l.b16 %v266
        %v347 = vunpack.c.l.b16 %v267
        %v348 = vunpack.c.l.b16 %v268
        %v349 = vunpack.c.l.b16 %v269
        %v350 = vunpack.c.l.b16 %v270
        %v351 = vunpack.c.l.b16 %v271
        %v352 = vunpack.c.l.b16 %v272
        %v353 = vunpack.c.l.b16 %v273
        %v354 = vunpack.c.l.b16 %v274
        %v355 = vpack.c.b16 %v340, %v339
        %v356 = vpack.c.b16 %v342, %v341
        %v357 = vpack.c.b16 %v344, %v343
        %v358 = vpack.c.b16 %v346, %v345
        %v359 = vpack.c.b16 %v348, %v347
        %v360 = vpack.c.b16 %v350, %v349
        %v361 = vpack.c.b16 %v352, %v351
        %v362 = vpack.c.b16 %v354, %v353
        %371 = vmatprep.subr.bf16.mxu0 0
        %372 = vmatpush1.bf16.msra.mxu0 %v362
        %373 = vmatprep.subr.bf16.mxu0 0
        %374 = vmatpush1.bf16.msra.mxu0 %v361
        %375 = vmatprep.subr.bf16.mxu0 0
        %376 = vmatpush1.bf16.msra.mxu0 %v360
        %377 = vmatprep.subr.bf16.mxu0 0
        %378 = vmatpush1.bf16.msra.mxu0 %v359
        %379 = vmatprep.subr.bf16.mxu0 0
        %380 = vmatpush1.bf16.msra.mxu0 %v358
        %381 = vmatprep.subr.bf16.mxu0 0
        %382 = vmatpush1.bf16.msra.mxu0 %v357
        %383 = vmatprep.subr.bf16.mxu0 0
        %384 = vmatpush1.bf16.msra.mxu0 %v356
        %385 = vmatprep.subr.bf16.mxu0 0
        %386 = vmatpush1.bf16.msra.mxu0 %v355
        %387 = vmatprep.subr.bf16.mxu0 0
        %388 = vmatpush2.bf16.msra.mxu0 0
        %389 = vmatprep.subr.bf16.mxu0 0
        %390 = vmatpush2.bf16.msra.mxu0 0
        %391 = vmatprep.subr.bf16.mxu0 0
        %392 = vmatpush2.bf16.msra.mxu0 0
        %393 = vmatprep.subr.bf16.mxu0 0
        %394 = vmatpush2.bf16.msra.mxu0 0
        %395 = vmatprep.subr.bf16.mxu0 0
        %396 = vmatpush2.bf16.msra.mxu0 0
        %397 = vmatprep.subr.bf16.mxu0 0
        %398 = vmatpush2.bf16.msra.mxu0 0
        %399 = vmatprep.subr.bf16.mxu0 0
        %400 = vmatpush2.bf16.msra.mxu0 0
        %401 = vmatprep.subr.bf16.mxu0 0
        %402 = vmatpush2.bf16.msra.mxu0 0
        %403 = vmatprep.mubr.bf16.mxu0 0
        %404 = vmatmul.mubr.bf16.gmra.mxu0 %v307
        %v405 = vpop.f32.mrf.mxu0
        %v406 = vadd.f32 0.0, %v405
        %v407 = vpop.f32.mrf.mxu0
        %v408 = vpop.f32.mrf.mxu0
        %v409 = vadd.f32 0.0, %v408
        %v410 = vpop.f32.mrf.mxu0
        %411 = vmatprep.mubr.bf16.mxu0 0
        %412 = vmatmul.mubr.bf16.gmra.mxu0 %v308
        %v413 = vpop.f32.mrf.mxu0
        %v414 = vadd.f32 0.0, %v413
        %v415 = vpop.f32.mrf.mxu0
        %v416 = vpop.f32.mrf.mxu0
        %v417 = vadd.f32 0.0, %v416
        %v418 = vpop.f32.mrf.mxu0
        %419 = vmatprep.mubr.bf16.mxu0 0
        %420 = vmatmul.mubr.bf16.gmra.mxu0 %v309
        %v421 = vpop.f32.mrf.mxu0
        %v422 = vadd.f32 0.0, %v421
        %v423 = vpop.f32.mrf.mxu0
        %v424 = vpop.f32.mrf.mxu0
        %v425 = vadd.f32 0.0, %v424
        %v426 = vpop.f32.mrf.mxu0
        %427 = vmatprep.mubr.bf16.mxu0 0
        %428 = vmatmul.mubr.bf16.gmra.mxu0 %v310
        %v429 = vpop.f32.mrf.mxu0
        %v430 = vadd.f32 0.0, %v429
        %v431 = vpop.f32.mrf.mxu0
        %v432 = vpop.f32.mrf.mxu0
        %v433 = vadd.f32 0.0, %v432
        %v434 = vpop.f32.mrf.mxu0
        %435 = vmatprep.mubr.bf16.mxu0 0
        %436 = vmatmul.mubr.bf16.gmra.mxu0 %v311
        %v437 = vpop.f32.mrf.mxu0
        %v438 = vadd.f32 0.0, %v437
        %v439 = vpop.f32.mrf.mxu0
        %v440 = vpop.f32.mrf.mxu0
        %v441 = vadd.f32 0.0, %v440
        %v442 = vpop.f32.mrf.mxu0
        %443 = vmatprep.mubr.bf16.mxu0 0
        %444 = vmatmul.mubr.bf16.gmra.mxu0 %v312
        %v445 = vpop.f32.mrf.mxu0
        %v446 = vadd.f32 0.0, %v445
        %v447 = vpop.f32.mrf.mxu0
        %v448 = vpop.f32.mrf.mxu0
        %v449 = vadd.f32 0.0, %v448
        %v450 = vpop.f32.mrf.mxu0
        %451 = vmatprep.mubr.bf16.mxu0 0
        %452 = vmatmul.mubr.bf16.gmra.mxu0 %v313
        %v453 = vpop.f32.mrf.mxu0
        %v454 = vadd.f32 0.0, %v453
        %v455 = vpop.f32.mrf.mxu0
        %v456 = vpop.f32.mrf.mxu0
        %v457 = vadd.f32 0.0, %v456
        %v458 = vpop.f32.mrf.mxu0
        %459 = vmatprep.mubr.bf16.mxu0 0
        %460 = vmatmul.mubr.bf16.gmra.mxu0 %v314
        %v461 = vpop.f32.mrf.mxu0
        %v462 = vadd.f32 0.0, %v461
        %v463 = vpop.f32.mrf.mxu0
        %v464 = vpop.f32.mrf.mxu0
        %v465 = vadd.f32 0.0, %v464
        %v466 = vpop.f32.mrf.mxu0
        %467 = vdwg.mxu0
        %s468 = smul.u32 %s20, 128
        %s469 = scalar_lea.vmem [#allocation2], %s468
        %470 = vst [vmem:[%s469] sm:$0xff] %v406
        %471 = vst [vmem:[%s469 + $0x8] sm:$0xff] %v409
        %472 = vst [vmem:[%s469 + $0x10] sm:$0xff] %v414
        %473 = vst [vmem:[%s469 + $0x18] sm:$0xff] %v417
        %474 = vst [vmem:[%s469 + $0x20] sm:$0xff] %v422
        %475 = vst [vmem:[%s469 + $0x28] sm:$0xff] %v425
        %476 = vst [vmem:[%s469 + $0x30] sm:$0xff] %v430
        %477 = vst [vmem:[%s469 + $0x38] sm:$0xff] %v433
        %478 = vst [vmem:[%s469 + $0x40] sm:$0xff] %v438
        %479 = vst [vmem:[%s469 + $0x48] sm:$0xff] %v441
        %480 = vst [vmem:[%s469 + $0x50] sm:$0xff] %v446
        %481 = vst [vmem:[%s469 + $0x58] sm:$0xff] %v449
        %482 = vst [vmem:[%s469 + $0x60] sm:$0xff] %v454
        %483 = vst [vmem:[%s469 + $0x68] sm:$0xff] %v457
        %484 = vst [vmem:[%s469 + $0x70] sm:$0xff] %v462
        %485 = vst [vmem:[%s469 + $0x78] sm:$0xff] %v465
        %v486 = vld [vmem:[#allocation3] sm:$0x1]
        %v487 = vadd.f32 %v406, %v409
        %v488 = vadd.f32 %v487, %v414
        %v489 = vadd.f32 %v488, %v417
        %v490 = vadd.f32 %v489, %v422
        %v491 = vadd.f32 %v490, %v425
        %v492 = vadd.f32 %v491, %v430
        %v493 = vadd.f32 %v492, %v433
        %v494 = vadd.f32 %v493, %v438
        %v495 = vadd.f32 %v494, %v441
        %v496 = vadd.f32 %v495, %v446
        %v497 = vadd.f32 %v496, %v449
        %v498 = vadd.f32 %v497, %v454
        %v499 = vadd.f32 %v498, %v457
        %v500 = vadd.f32 %v499, %v462
        %v501 = vadd.f32 %v500, %v465
        %v502 = vrot.slane %v501, 4
        %v503 = vadd.f32 %v501, %v502
        %v504 = vrot.slane %v503, 2
        %v505 = vadd.f32 %v503, %v504
        %v506 = vrot.slane %v505, 1
        %v507 = vadd.f32 %v505, %v506
        %v508 = vadd.f32 %v486, %v507
        %509 = vst [vmem:[#allocation3] sm:$0x1] %v508
        %v510 = vld [vmem:[#allocation4] sm:$0x1]
        %v511 = vmul.f32 %v406, %v406
        %v512 = vmul.f32 %v409, %v409
        %v513 = vmul.f32 %v414, %v414
        %v514 = vmul.f32 %v417, %v417
        %v515 = vmul.f32 %v422, %v422
        %v516 = vmul.f32 %v425, %v425
        %v517 = vmul.f32 %v430, %v430
        %v518 = vmul.f32 %v433, %v433
        %v519 = vmul.f32 %v438, %v438
        %v520 = vmul.f32 %v441, %v441
        %v521 = vmul.f32 %v446, %v446
        %v522 = vmul.f32 %v449, %v449
        %v523 = vmul.f32 %v454, %v454
        %v524 = vmul.f32 %v457, %v457
        %v525 = vmul.f32 %v462, %v462
        %v526 = vmul.f32 %v465, %v465
        %v527 = vadd.f32 %v511, %v512
        %v528 = vadd.f32 %v527, %v513
        %v529 = vadd.f32 %v528, %v514
        %v530 = vadd.f32 %v529, %v515
        %v531 = vadd.f32 %v530, %v516
        %v532 = vadd.f32 %v531, %v517
        %v533 = vadd.f32 %v532, %v518
        %v534 = vadd.f32 %v533, %v519
        %v535 = vadd.f32 %v534, %v520
        %v536 = vadd.f32 %v535, %v521
        %v537 = vadd.f32 %v536, %v522
        %v538 = vadd.f32 %v537, %v523
        %v539 = vadd.f32 %v538, %v524
        %v540 = vadd.f32 %v539, %v525
        %v541 = vadd.f32 %v540, %v526
        %v542 = vrot.slane %v541, 4
        %v543 = vadd.f32 %v541, %v542
        %v544 = vrot.slane %v543, 2
        %v545 = vadd.f32 %v543, %v544
        %v546 = vrot.slane %v545, 1
        %v547 = vadd.f32 %v545, %v546
        %v548 = vadd.f32 %v510, %v547
        %549 = vst [vmem:[#allocation4] sm:$0x1] %v548
      $region40: #{_lambda_.6} parent=35 // pred_fallthru
        _
      %p550 = scmp.eq.s32.totalorder %s19, 1
      %p551 = scmp.eq.s32.totalorder %s20, 0
      %p552 = pnand %p550, %p551
      %p553 = pneg %p552
      // Predicated region
      $region45: #{_lambda_.6} parent=35 // pred_check
        _
      $region46: #{_lambda_.6} parent=35 // pred_check_branch
        %555 = sbr.rel (%p552) target = $region48
      $region47: #{_lambda_.6} parent=35 // pred_region
        %v556 = vld [vmem:[#allocation3] sm:$0x1]
        %v557 = vmul.f32 %v556, 0.0078125
        %v558 = vld [vmem:[#allocation4] sm:$0x1]
        %v559 = vmul.f32 %v558, 0.0078125
        %v560 = vmul.f32 %v557, %v557
        %v561 = vsub.f32 %v559, %v560
        %v562 = vmax.f32 %v561, 0.0
        %v563 = vld [vmem:[%s2] sm:$0x1]
        %v564 = vadd.f32 %v562, 1e-05
        %v565 = vrsqrt.pop %v564
        %v566 = vmul.f32 %v563, %v565
        %567 = vst [vmem:[#allocation5] sm:$0x1] %v566
        %v568 = vld [vmem:[%s3] sm:$0x1]
        %v569 = vmul.f32 %v557, %v566
        %v570 = vsub.f32 %v568, %v569
        %571 = vst [vmem:[#allocation6] sm:$0x1] %v570
      $region48: #{_lambda_.6} parent=35 // pred_fallthru
        _
      // Predicated region
      $region49: #{_lambda_.6} parent=35 // pred_check
        %p572 = pneg %p550
      $region50: #{_lambda_.6} parent=35 // pred_check_branch
        %574 = sbr.rel (%p572) target = $region52
      $region51: #{_lambda_.6} parent=35 // pred_region
        %s575 = smul.u32 %s20, 128
        %s576 = scalar_lea.vmem [#allocation2], %s575
        %v577 = vld [vmem:[%s576] sm:$0xff]
        %v578 = vld [vmem:[%s576 + $0x8] sm:$0xff]
        %v579 = vld [vmem:[%s576 + $0x10] sm:$0xff]
        %v580 = vld [vmem:[%s576 + $0x18] sm:$0xff]
        %v581 = vld [vmem:[%s576 + $0x20] sm:$0xff]
        %v582 = vld [vmem:[%s576 + $0x28] sm:$0xff]
        %v583 = vld [vmem:[%s576 + $0x30] sm:$0xff]
        %v584 = vld [vmem:[%s576 + $0x38] sm:$0xff]
        %v585 = vld [vmem:[%s576 + $0x40] sm:$0xff]
        %v586 = vld [vmem:[%s576 + $0x48] sm:$0xff]
        %v587 = vld [vmem:[%s576 + $0x50] sm:$0xff]
        %v588 = vld [vmem:[%s576 + $0x58] sm:$0xff]
        %v589 = vld [vmem:[%s576 + $0x60] sm:$0xff]
        %v590 = vld [vmem:[%s576 + $0x68] sm:$0xff]
        %v591 = vld [vmem:[%s576 + $0x70] sm:$0xff]
        %v592 = vld [vmem:[%s576 + $0x78] sm:$0xff]
        %v593 = vld [vmem:[#allocation5] sm:$0x1]
        %v595 = vlaneseq
        %v596 = vshrl.u32 %v595, 7
        %v597 = vsub.s32 0, %v596
        %v598 = vrot.slane %v593, %v597
        %v600 = vmul.f32 %v577, %v598
        %v601 = vmul.f32 %v578, %v598
        %v602 = vmul.f32 %v579, %v598
        %v603 = vmul.f32 %v580, %v598
        %v604 = vmul.f32 %v581, %v598
        %v605 = vmul.f32 %v582, %v598
        %v606 = vmul.f32 %v583, %v598
        %v607 = vmul.f32 %v584, %v598
        %v608 = vmul.f32 %v585, %v598
        %v609 = vmul.f32 %v586, %v598
        %v610 = vmul.f32 %v587, %v598
        %v611 = vmul.f32 %v588, %v598
        %v612 = vmul.f32 %v589, %v598
        %v613 = vmul.f32 %v590, %v598
        %v614 = vmul.f32 %v591, %v598
        %v615 = vmul.f32 %v592, %v598
        %v616 = vld [vmem:[#allocation6] sm:$0x1]
        %v618 = vlaneseq
        %v619 = vshrl.u32 %v618, 7
        %v620 = vsub.s32 0, %v619
        %v621 = vrot.slane %v616, %v620
        %v623 = vadd.f32 %v600, %v621
        %v624 = vadd.f32 %v601, %v621
        %v625 = vadd.f32 %v602, %v621
        %v626 = vadd.f32 %v603, %v621
        %v627 = vadd.f32 %v604, %v621
        %v628 = vadd.f32 %v605, %v621
        %v629 = vadd.f32 %v606, %v621
        %v630 = vadd.f32 %v607, %v621
        %v631 = vadd.f32 %v608, %v621
        %v632 = vadd.f32 %v609, %v621
        %v633 = vadd.f32 %v610, %v621
        %v634 = vadd.f32 %v611, %v621
        %v635 = vadd.f32 %v612, %v621
        %v636 = vadd.f32 %v613, %v621
        %v637 = vadd.f32 %v614, %v621
        %v638 = vadd.f32 %v615, %v621
        %vm639 = vcmp.gt.f32.partialorder %v623, 0.0
        %vm640 = vcmp.gt.f32.partialorder %v624, 0.0
        %vm641 = vcmp.gt.f32.partialorder %v625, 0.0
        %vm642 = vcmp.gt.f32.partialorder %v626, 0.0
        %vm643 = vcmp.gt.f32.partialorder %v627, 0.0
        %vm644 = vcmp.gt.f32.partialorder %v628, 0.0
        %vm645 = vcmp.gt.f32.partialorder %v629, 0.0
        %vm646 = vcmp.gt.f32.partialorder %v630, 0.0
        %vm647 = vcmp.gt.f32.partialorder %v631, 0.0
        %vm648 = vcmp.gt.f32.partialorder %v632, 0.0
        %vm649 = vcmp.gt.f32.partialorder %v633, 0.0
        %vm650 = vcmp.gt.f32.partialorder %v634, 0.0
        %vm651 = vcmp.gt.f32.partialorder %v635, 0.0
        %vm652 = vcmp.gt.f32.partialorder %v636, 0.0
        %vm653 = vcmp.gt.f32.partialorder %v637, 0.0
        %vm654 = vcmp.gt.f32.partialorder %v638, 0.0
        %v655 = vmul.f32 %v623, 0.2
        %v656 = vmul.f32 %v624, 0.2
        %v657 = vmul.f32 %v625, 0.2
        %v658 = vmul.f32 %v626, 0.2
        %v659 = vmul.f32 %v627, 0.2
        %v660 = vmul.f32 %v628, 0.2
        %v661 = vmul.f32 %v629, 0.2
        %v662 = vmul.f32 %v630, 0.2
        %v663 = vmul.f32 %v631, 0.2
        %v664 = vmul.f32 %v632, 0.2
        %v665 = vmul.f32 %v633, 0.2
        %v666 = vmul.f32 %v634, 0.2
        %v667 = vmul.f32 %v635, 0.2
        %v668 = vmul.f32 %v636, 0.2
        %v669 = vmul.f32 %v637, 0.2
        %v670 = vmul.f32 %v638, 0.2
        %v671 = vsel %vm639, %v623, %v655
        %v672 = vsel %vm640, %v624, %v656
        %v673 = vsel %vm641, %v625, %v657
        %v674 = vsel %vm642, %v626, %v658
        %v675 = vsel %vm643, %v627, %v659
        %v676 = vsel %vm644, %v628, %v660
        %v677 = vsel %vm645, %v629, %v661
        %v678 = vsel %vm646, %v630, %v662
        %v679 = vsel %vm647, %v631, %v663
        %v680 = vsel %vm648, %v632, %v664
        %v681 = vsel %vm649, %v633, %v665
        %v682 = vsel %vm650, %v634, %v666
        %v683 = vsel %vm651, %v635, %v667
        %v684 = vsel %vm652, %v636, %v668
        %v685 = vsel %vm653, %v637, %v669
        %v686 = vsel %vm654, %v638, %v670
        %v687 = vpack.c.bf16 %v672, %v671
        %v688 = vpack.c.bf16 %v674, %v673
        %v689 = vpack.c.bf16 %v676, %v675
        %v690 = vpack.c.bf16 %v678, %v677
        %v691 = vpack.c.bf16 %v680, %v679
        %v692 = vpack.c.bf16 %v682, %v681
        %v693 = vpack.c.bf16 %v684, %v683
        %v694 = vpack.c.bf16 %v686, %v685
        %v703 = vunpack.c.l.b16 %v687
        %v704 = vunpack.c.h.b16 %v687
        %v705 = vunpack.c.l.b16 %v688
        %v706 = vunpack.c.h.b16 %v688
        %v707 = vunpack.c.l.b16 %v689
        %v708 = vunpack.c.h.b16 %v689
        %v709 = vunpack.c.l.b16 %v690
        %v710 = vunpack.c.h.b16 %v690
        %v711 = vunpack.c.l.b16 %v691
        %v712 = vunpack.c.h.b16 %v691
        %v713 = vunpack.c.l.b16 %v692
        %v714 = vunpack.c.h.b16 %v692
        %v715 = vunpack.c.l.b16 %v693
        %v716 = vunpack.c.h.b16 %v693
        %v717 = vunpack.c.l.b16 %v694
        %v718 = vunpack.c.h.b16 %v694
        %v719 = vpack.c.b16 %v703, %v703
        %v720 = vpack.c.b16 %v704, %v704
        %v721 = vpack.c.b16 %v705, %v705
        %v722 = vpack.c.b16 %v706, %v706
        %v723 = vpack.c.b16 %v707, %v707
        %v724 = vpack.c.b16 %v708, %v708
        %v725 = vpack.c.b16 %v709, %v709
        %v726 = vpack.c.b16 %v710, %v710
        %v727 = vpack.c.b16 %v711, %v711
        %v728 = vpack.c.b16 %v712, %v712
        %v729 = vpack.c.b16 %v713, %v713
        %v730 = vpack.c.b16 %v714, %v714
        %v731 = vpack.c.b16 %v715, %v715
        %v732 = vpack.c.b16 %v716, %v716
        %v733 = vpack.c.b16 %v717, %v717
        %v734 = vpack.c.b16 %v718, %v718
        %751 = vst [vmem:[%s229] sm:$0xf] %v719
        %752 = vst [vmem:[%s229 + $0x4] sm:$0xf] %v720
        %753 = vst [vmem:[%s229 + $0x8] sm:$0xf] %v721
        %754 = vst [vmem:[%s229 + $0xc] sm:$0xf] %v722
        %755 = vst [vmem:[%s229 + $0x10] sm:$0xf] %v723
        %756 = vst [vmem:[%s229 + $0x14] sm:$0xf] %v724
        %757 = vst [vmem:[%s229 + $0x18] sm:$0xf] %v725
        %758 = vst [vmem:[%s229 + $0x1c] sm:$0xf] %v726
        %759 = vst [vmem:[%s229 + $0x20] sm:$0xf] %v727
        %760 = vst [vmem:[%s229 + $0x24] sm:$0xf] %v728
        %761 = vst [vmem:[%s229 + $0x28] sm:$0xf] %v729
        %762 = vst [vmem:[%s229 + $0x2c] sm:$0xf] %v730
        %763 = vst [vmem:[%s229 + $0x30] sm:$0xf] %v731
        %764 = vst [vmem:[%s229 + $0x34] sm:$0xf] %v732
        %765 = vst [vmem:[%s229 + $0x38] sm:$0xf] %v733
        %766 = vst [vmem:[%s229 + $0x3c] sm:$0xf] %v734
      $region52: #{_lambda_.6} parent=35 // pred_fallthru
        _
      %s767 = smul.u32 %s20, %s19
      %s768 = smul.u32 16, %s767
      %p769 = scmp.lt.s32.totalorder %s768, 15
      %s770 = scalar_select %p769, %s768, 15
      %s771 = smul.addr %s770, 4
      %s772 = scalar_lea.vmem %s4, %s771
      // Predicated region
      $region53: #{_lambda_.6} parent=35 // pred_check
        %p773 = pneg %p140
      $region54: #{_lambda_.6} parent=35 // pred_check_branch
        %775 = sbr.rel (%p773) target = $region56
      $region55: #{_lambda_.6} parent=35 // pred_region
        %s776 = smul.u32 %s20, %s19
        %s777 = smul.u32 16, %s776
      $region56: #{_lambda_.6} parent=35 // pred_fallthru
        _
    $region36: #{_lambda_.6} parent=5 // pred_fallthru
      _
    %p778 = scmp.le.s32.totalorder 2, %s10
    // Predicated region
    $region57: #{_lambda_.6} parent=5 // pred_check
      %p779 = pneg %p778
    $region58: #{_lambda_.6} parent=5 // pred_check_branch
      %781 = sbr.rel (%p779) target = $region60
    $region59: #{_lambda_.6} parent=5 // pred_region
      %s782 = ssub.s32 %s10, 2
      // Predicated region
      $region61: #{_lambda_.6} parent=59 // pred_check
        %p783 = pneg %p146
      $region62: #{_lambda_.6} parent=59 // pred_check_branch
        %785 = sbr.rel (%p783) target = $region64
      $region63: #{_lambda_.6} parent=59 // pred_region
        %s786 = smul.u32 %s22, %s21
        %s787 = smul.u32 16, %s786
        %p788 = scmp.lt.s32.totalorder %s787, 15
        %s789 = scalar_select %p788, %s787, 15
        %s790 = smul.addr %s789, 4
        %s791 = scalar_lea.vmem %s4, %s790
      $region64: #{_lambda_.6} parent=59 // pred_fallthru
        _
    $region60: #{_lambda_.6} parent=5 // pred_fallthru
      _
  $region6: #{_lambda_.6} parent=0 // loop_footer
    %s14 = sadd.s32 1, %s10
  $region7: #{_lambda_.6} parent=0 // loop_footer_branch
    %9 = sbr.rel target = $region3
  $region8: #{_lambda_.6} parent=0 // loop_exit
    _

// kernel: _lambda_.7
$region0: #{_lambda_.7}
  #allocation0 [shape = 'u32[]', space=smem, size = 0x4, offset = 0x4, fixed_abs, tag = 'smem constant byte address 0x4 - core index']
  #allocation1 [shape = 'u32[144,128]{1,0:T(1,128)}', space=vmem, size = 0x12000, scoped, tag = 'internal scratch']
  #allocation2 [shape = 'f32[1,32,128]{2,1,0:T(8,128)}', space=vmem, size = 0x4000, scoped, tag = 'scratch operand']
  #allocation3 [shape = 'f32[1,128]{1,0:T(1,128)}', space=vmem, size = 0x200, scoped, tag = 'scratch operand']
  #allocation4 [shape = 'f32[1,128]{1,0:T(1,128)}', space=vmem, size = 0x200, scoped, tag = 'scratch operand']
  #allocation5 [shape = 'f32[1,128]{1,0:T(1,128)}', space=vmem, size = 0x200, scoped, tag = 'scratch operand']
  #allocation6 [shape = 'f32[1,128]{1,0:T(1,128)}', space=vmem, size = 0x200, scoped, tag = 'scratch operand']
  %s0 = inlined_call_operand.vmem [shape: bf16[32,256], index: 0, kind: input, shape index: {}]
  %s1 = inlined_call_operand.vmem [shape: bf16[256,128], index: 1, kind: input, shape index: {}]
  %s2 = inlined_call_operand.vmem [shape: f32[1,128], index: 2, kind: input, shape index: {}]
  %s3 = inlined_call_operand.vmem [shape: f32[1,128], index: 3, kind: input, shape index: {}]
  %s4 = inlined_call_operand.vmem [shape: bf16[32,128], index: 4, kind: output, shape index: {}]
  %s5 = sld [smem:[#allocation0]]
  $region65: #{_lambda_.7} parent=0
    _
  %s7 = ssub.s32 1, %s5
  %s8 = scalar_select 0, %s7, %s5
  loop: start=0, step=1, limit=4
  $region2: #{_lambda_.7} parent=0 // loop_pre_header
    _
  $region3: #{_lambda_.7} parent=0 // loop_header
    %s10 = sphi 0, %s14
    %p11 = scmp.ge.s32.totalorder %s10, 4
    %s17 = sphi 0, %s29
    %s18 = sphi 0, %s25
    %s19 = sphi 0, %s17
    %s20 = sphi 0, %s18
    %s21 = sphi 0, %s19
    %s22 = sphi 0, %s20
    %s36 = sphi 0, %s38
    %s39 = sphi 0, %s36
    %s40 = sphi 0, %s39
    %s56 = sphi 0, %s40
    %s60 = sphi 0, %s60
    %s62 = sphi 0, %s60
    %s63 = sphi 0, %s62
    %s77 = sphi 0, %s63
    %s81 = sphi 0, %s81
    %s83 = sphi 0, %s81
    %s84 = sphi 0, %s83
    %s98 = sphi 0, %s84
    %s102 = sphi 0, %s102
    %s104 = sphi 0, %s102
    %s105 = sphi 0, %s104
    %s119 = sphi 0, %s105
    %s127 = sphi 0, %s129
    %s130 = sphi 0, %s127
    %s131 = sphi 0, %s130
    %s147 = sphi 0, %s131
  $region4: #{_lambda_.7} parent=0 // loop_header_branch
    %13 = sbr.rel (%p11) target = $region8
  $region5: #{_lambda_.7} parent=0 // loop_body
    %s15 = ssub.s32 %s10, 1
    %s16 = ssub.s32 %s10, 2
    %s23 = sadd.s32 1, %s18
    %p24 = scmp.ge.s32.totalorder %s23, 1
    %s25 = scalar_select %p24, 0, %s23
    %s26 = sadd.s32 1, %s17
    %s27 = scalar_select %p24, %s26, %s17
    %p28 = scmp.ge.s32.totalorder %s27, 2
    %s29 = scalar_select %p28, 0, %s27
    %s30 = ssub.s32 1, %s17
    %s31 = smul.u32 %s18, %s30
    %s32 = ssub.s32 1, %s29
    %s33 = smul.u32 %s25, %s32
    %s34 = ssub.s32 %s31, %s33
    %p35 = scmp.eq.s32.totalorder %s34, 0
    %s37 = sadd.s32 %s36, 1
    %s38 = scalar_select %p35, %s36, %s37
    %p41 = pneg %p35
    %p42 = scmp.eq.s32.totalorder %s10, 1
    %p43 = por %p41, %p42
    %p44 = scmp.ne.s32.totalorder %s36, %s39
    %p45 = scmp.eq.s32.totalorder %s10, 0
    %p46 = por %p44, %p45
    %p47 = scmp.ne.s32.totalorder %s36, %s39
    %p48 = scmp.eq.s32.totalorder %s15, 1
    %p49 = por %p47, %p48
    %p50 = scmp.ne.s32.totalorder %s39, %s40
    %p51 = scmp.eq.s32.totalorder %s15, 0
    %p52 = por %p50, %p51
    %p53 = scmp.ne.s32.totalorder %s39, %s40
    %p54 = scmp.eq.s32.totalorder %s16, 1
    %p55 = por %p53, %p54
    %p57 = scmp.ne.s32.totalorder %s40, %s56
    %p58 = scmp.eq.s32.totalorder %s16, 0
    %p59 = por %p57, %p58
    %s61 = sadd.s32 %s60, 1
    %p64 = scmp.eq.s32.totalorder %s10, 1
    %p65 = scmp.ne.s32.totalorder %s60, %s62
    %p66 = scmp.eq.s32.totalorder %s10, 0
    %p67 = por %p65, %p66
    %p68 = scmp.ne.s32.totalorder %s60, %s62
    %p69 = scmp.eq.s32.totalorder %s15, 1
    %p70 = por %p68, %p69
    %p71 = scmp.ne.s32.totalorder %s62, %s63
    %p72 = scmp.eq.s32.totalorder %s15, 0
    %p73 = por %p71, %p72
    %p74 = scmp.ne.s32.totalorder %s62, %s63
    %p75 = scmp.eq.s32.totalorder %s16, 1
    %p76 = por %p74, %p75
    %p78 = scmp.ne.s32.totalorder %s63, %s77
    %p79 = scmp.eq.s32.totalorder %s16, 0
    %p80 = por %p78, %p79
    %s82 = sadd.s32 %s81, 1
    %p85 = scmp.eq.s32.totalorder %s10, 1
    %p86 = scmp.ne.s32.totalorder %s81, %s83
    %p87 = scmp.eq.s32.totalorder %s10, 0
    %p88 = por %p86, %p87
    %p89 = scmp.ne.s32.totalorder %s81, %s83
    %p90 = scmp.eq.s32.totalorder %s15, 1
    %p91 = por %p89, %p90
    %p92 = scmp.ne.s32.totalorder %s83, %s84
    %p93 = scmp.eq.s32.totalorder %s15, 0
    %p94 = por %p92, %p93
    %p95 = scmp.ne.s32.totalorder %s83, %s84
    %p96 = scmp.eq.s32.totalorder %s16, 1
    %p97 = por %p95, %p96
    %p99 = scmp.ne.s32.totalorder %s84, %s98
    %p100 = scmp.eq.s32.totalorder %s16, 0
    %p101 = por %p99, %p100
    %s103 = sadd.s32 %s102, 1
    %p106 = scmp.eq.s32.totalorder %s10, 1
    %p107 = scmp.ne.s32.totalorder %s102, %s104
    %p108 = scmp.eq.s32.totalorder %s10, 0
    %p109 = por %p107, %p108
    %p110 = scmp.ne.s32.totalorder %s102, %s104
    %p111 = scmp.eq.s32.totalorder %s15, 1
    %p112 = por %p110, %p111
    %p113 = scmp.ne.s32.totalorder %s104, %s105
    %p114 = scmp.eq.s32.totalorder %s15, 0
    %p115 = por %p113, %p114
    %p116 = scmp.ne.s32.totalorder %s104, %s105
    %p117 = scmp.eq.s32.totalorder %s16, 1
    %p118 = por %p116, %p117
    %p120 = scmp.ne.s32.totalorder %s105, %s119
    %p121 = scmp.eq.s32.totalorder %s16, 0
    %p122 = por %p120, %p121
    %s123 = smul.u32 %s18, %s17
    %s124 = smul.u32 %s25, %s29
    %s125 = ssub.s32 %s123, %s124
    %p126 = scmp.eq.s32.totalorder %s125, 0
    %s128 = sadd.s32 %s127, 1
    %s129 = scalar_select %p126, %s127, %s128
    %p132 = pneg %p126
    %p133 = scmp.eq.s32.totalorder %s10, 1
    %p134 = por %p132, %p133
    %p135 = scmp.ne.s32.totalorder %s127, %s130
    %p136 = scmp.eq.s32.totalorder %s10, 0
    %p137 = por %p135, %p136
    %p138 = scmp.ne.s32.totalorder %s127, %s130
    %p139 = scmp.eq.s32.totalorder %s15, 1
    %p140 = por %p138, %p139
    %p141 = scmp.ne.s32.totalorder %s130, %s131
    %p142 = scmp.eq.s32.totalorder %s15, 0
    %p143 = por %p141, %p142
    %p144 = scmp.ne.s32.totalorder %s130, %s131
    %p145 = scmp.eq.s32.totalorder %s16, 1
    %p146 = por %p144, %p145
    %p148 = scmp.ne.s32.totalorder %s131, %s147
    %p149 = scmp.eq.s32.totalorder %s16, 0
    %p150 = por %p148, %p149
    %p151 = scmp.le.s32.totalorder 1, %s10
    %p152 = scmp.lt.s32.totalorder %s10, 3
    %p153 = pnand %p151, %p152
    %p154 = pneg %p153
    // Predicated region
    $region9: #{_lambda_.7} parent=5 // pred_check
      _
    $region10: #{_lambda_.7} parent=5 // pred_check_branch
      %156 = sbr.rel (%p153) target = $region12
    $region11: #{_lambda_.7} parent=5 // pred_region
      %s157 = ssub.s32 %s10, 1
      // Predicated region
      $region13: #{_lambda_.7} parent=11 // pred_check
        %p158 = pneg %p73
      $region14: #{_lambda_.7} parent=11 // pred_check_branch
        %160 = sbr.rel (%p158) target = $region16
      $region15: #{_lambda_.7} parent=11 // pred_region
        _
      $region16: #{_lambda_.7} parent=11 // pred_fallthru
        _
      // Predicated region
      $region17: #{_lambda_.7} parent=11 // pred_check
        %p161 = pneg %p94
      $region18: #{_lambda_.7} parent=11 // pred_check_branch
        %163 = sbr.rel (%p161) target = $region20
      $region19: #{_lambda_.7} parent=11 // pred_region
        _
      $region20: #{_lambda_.7} parent=11 // pred_fallthru
        _
      // Predicated region
      $region21: #{_lambda_.7} parent=11 // pred_check
        %p164 = pneg %p115
      $region22: #{_lambda_.7} parent=11 // pred_check_branch
        %166 = sbr.rel (%p164) target = $region24
      $region23: #{_lambda_.7} parent=11 // pred_region
        _
      $region24: #{_lambda_.7} parent=11 // pred_fallthru
        _
    $region12: #{_lambda_.7} parent=5 // pred_fallthru
      _
    %p167 = scmp.lt.s32.totalorder %s10, 2
    // Predicated region
    $region25: #{_lambda_.7} parent=5 // pred_check
      %p168 = pneg %p167
    $region26: #{_lambda_.7} parent=5 // pred_check_branch
      %170 = sbr.rel (%p168) target = $region28
    $region27: #{_lambda_.7} parent=5 // pred_region
      // Predicated region
      $region29: #{_lambda_.7} parent=27 // pred_check
        %p171 = pneg %p46
      $region30: #{_lambda_.7} parent=27 // pred_check_branch
        %173 = sbr.rel (%p171) target = $region32
      $region31: #{_lambda_.7} parent=27 // pred_region
        %s174 = ssub.s32 1, %s17
        %s175 = smul.u32 %s18, %s174
        %s176 = smul.u32 4, %s175
        %p177 = scmp.lt.s32.totalorder %s176, 3
        %s178 = scalar_select %p177, %s176, 3
        %s179 = smul.addr %s178, 2
        %s180 = smul.addr %s179, 4
        %s181 = scalar_lea.vmem %s0, %s180
        %s182 = ssub.s32 1, %s17
        %s183 = smul.u32 %s18, %s182
        %s184 = smul.u32 4, %s183
      $region32: #{_lambda_.7} parent=27 // pred_fallthru
        _
    $region28: #{_lambda_.7} parent=5 // pred_fallthru
      _
    %p185 = scmp.le.s32.totalorder 1, %s10
    %p186 = scmp.lt.s32.totalorder %s10, 3
    %p187 = pnand %p185, %p186
    %p188 = pneg %p187
    // Predicated region
    $region33: #{_lambda_.7} parent=5 // pred_check
      _
    $region34: #{_lambda_.7} parent=5 // pred_check_branch
      %190 = sbr.rel (%p187) target = $region36
    $region35: #{_lambda_.7} parent=5 // pred_region
      %s191 = ssub.s32 %s10, 1
      %s192 = ssub.s32 1, %s19
      %s193 = smul.u32 %s20, %s192
      %s194 = smul.u32 4, %s193
      %p195 = scmp.lt.s32.totalorder %s194, 3
      %s196 = scalar_select %p195, %s194, 3
      %s197 = smul.addr %s196, 2
      %s198 = smul.addr %s197, 4
      %s199 = scalar_lea.vmem %s0, %s198
      %p200 = pneg %p52
      %p201 = pneg %p49
      %p202 = pneg %p73
      %p203 = pneg %p70
      %p204 = pneg %p94
      %p205 = pneg %p91
      %p206 = pneg %p115
      %p207 = pneg %p112
      %p208 = pneg %p143
      %p209 = pneg %p140
      %s210 = smul.u32 %s20, %s19
      %s211 = smul.u32 4, %s210
      %p212 = scmp.lt.s32.totalorder %s211, 3
      %s213 = scalar_select %p212, %s211, 3
      %s214 = smul.addr %s213, 4
      %s215 = scalar_lea.vmem %s4, %s214
      %s216 = ssub.s32 1, %s19
      %s217 = smul.u32 %s20, %s216
      %s218 = smul.u32 4, %s217
      %p219 = scmp.lt.s32.totalorder %s218, 3
      %s220 = scalar_select %p219, %s218, 3
      %s221 = smul.addr %s220, 2
      %s222 = smul.addr %s221, 4
      %s223 = scalar_lea.vmem %s0, %s222
      %s224 = ssub.s32 1, %s19
      %s225 = smul.u32 %s20, %s224
      %s226 = smul.u32 4, %s225
      %s227 = smul.u32 %s20, %s19
      %s228 = smul.u32 4, %s227
      %p229 = scmp.lt.s32.totalorder %s228, 3
      %s230 = scalar_select %p229, %s228, 3
      %s231 = smul.addr %s230, 4
      %s232 = scalar_lea.vmem %s4, %s231
      %s233 = smul.u32 %s20, %s19
      %s234 = smul.u32 4, %s233
      %p236 = scmp.eq.s32.totalorder %s19, 0
      // Predicated region
      $region37: #{_lambda_.7} parent=35 // pred_check
        %p237 = pneg %p236
      $region38: #{_lambda_.7} parent=35 // pred_check_branch
        %239 = sbr.rel (%p237) target = $region40
      $region39: #{_lambda_.7} parent=35 // pred_region
        %p240 = scmp.eq.s32.totalorder %s20, 0
        // Predicated region
        $region41: #{_lambda_.7} parent=39 // pred_check
          %p241 = pneg %p240
        $region42: #{_lambda_.7} parent=39 // pred_check_branch
          %243 = sbr.rel (%p241) target = $region44
        $region43: #{_lambda_.7} parent=39 // pred_region
          %244 = vst [vmem:[#allocation3] sm:$0x1] 0.0
          %245 = vst [vmem:[#allocation4] sm:$0x1] 0.0
        $region44: #{_lambda_.7} parent=39 // pred_fallthru
          _
        %v246 = vld [vmem:[%s223] sm:$0xff]
        %v247 = vld [vmem:[%s223 + $0x8] sm:$0xff]
        %v248 = vld [vmem:[%s223 + $0x10] sm:$0xff]
        %v249 = vld [vmem:[%s223 + $0x18] sm:$0xff]
        %v250 = vld [vmem:[%s1] sm:$0xf]
        %v251 = vld [vmem:[%s1 + $0x4] sm:$0xf]
        %v252 = vld [vmem:[%s1 + $0x8] sm:$0xf]
        %v253 = vld [vmem:[%s1 + $0xc] sm:$0xf]
        %v254 = vld [vmem:[%s1 + $0x10] sm:$0xf]
        %v255 = vld [vmem:[%s1 + $0x14] sm:$0xf]
        %v256 = vld [vmem:[%s1 + $0x18] sm:$0xf]
        %v257 = vld [vmem:[%s1 + $0x1c] sm:$0xf]
        %v258 = vld [vmem:[%s1 + $0x20] sm:$0xf]
        %v259 = vld [vmem:[%s1 + $0x24] sm:$0xf]
        %v260 = vld [vmem:[%s1 + $0x28] sm:$0xf]
        %v261 = vld [vmem:[%s1 + $0x2c] sm:$0xf]
        %v262 = vld [vmem:[%s1 + $0x30] sm:$0xf]
        %v263 = vld [vmem:[%s1 + $0x34] sm:$0xf]
        %v264 = vld [vmem:[%s1 + $0x38] sm:$0xf]
        %v265 = vld [vmem:[%s1 + $0x3c] sm:$0xf]
        %v266 = vld [vmem:[%s1 + $0x40] sm:$0xf]
        %v267 = vld [vmem:[%s1 + $0x44] sm:$0xf]
        %v268 = vld [vmem:[%s1 + $0x48] sm:$0xf]
        %v269 = vld [vmem:[%s1 + $0x4c] sm:$0xf]
        %v270 = vld [vmem:[%s1 + $0x50] sm:$0xf]
        %v271 = vld [vmem:[%s1 + $0x54] sm:$0xf]
        %v272 = vld [vmem:[%s1 + $0x58] sm:$0xf]
        %v273 = vld [vmem:[%s1 + $0x5c] sm:$0xf]
        %v274 = vld [vmem:[%s1 + $0x60] sm:$0xf]
        %v275 = vld [vmem:[%s1 + $0x64] sm:$0xf]
        %v276 = vld [vmem:[%s1 + $0x68] sm:$0xf]
        %v277 = vld [vmem:[%s1 + $0x6c] sm:$0xf]
        %v278 = vld [vmem:[%s1 + $0x70] sm:$0xf]
        %v279 = vld [vmem:[%s1 + $0x74] sm:$0xf]
        %v280 = vld [vmem:[%s1 + $0x78] sm:$0xf]
        %v281 = vld [vmem:[%s1 + $0x7c] sm:$0xf]
        %v286 = vunpack.c.l.b16 %v246
        %v287 = vunpack.c.h.b16 %v246
        %v288 = vunpack.c.l.b16 %v247
        %v289 = vunpack.c.h.b16 %v247
        %v290 = vunpack.c.l.b16 %v248
        %v291 = vunpack.c.h.b16 %v248
        %v292 = vunpack.c.l.b16 %v249
        %v293 = vunpack.c.h.b16 %v249
        %v294 = vpack.c.b16 %v288, %v286
        %v295 = vpack.c.b16 %v289, %v287
        %v296 = vpack.c.b16 %v292, %v290
        %v297 = vpack.c.b16 %v293, %v291
        %v334 = vunpack.c.l.b16 %v250
        %v335 = vunpack.c.l.b16 %v251
        %v336 = vunpack.c.l.b16 %v252
        %v337 = vunpack.c.l.b16 %v253
        %v338 = vunpack.c.l.b16 %v254
        %v339 = vunpack.c.l.b16 %v255
        %v340 = vunpack.c.l.b16 %v256
        %v341 = vunpack.c.l.b16 %v257
        %v342 = vunpack.c.l.b16 %v258
        %v343 = vunpack.c.l.b16 %v259
        %v344 = vunpack.c.l.b16 %v260
        %v345 = vunpack.c.l.b16 %v261
        %v346 = vunpack.c.l.b16 %v262
        %v347 = vunpack.c.l.b16 %v263
        %v348 = vunpack.c.l.b16 %v264
        %v349 = vunpack.c.l.b16 %v265
        %v350 = vunpack.c.l.b16 %v266
        %v351 = vunpack.c.l.b16 %v267
        %v352 = vunpack.c.l.b16 %v268
        %v353 = vunpack.c.l.b16 %v269
        %v354 = vunpack.c.l.b16 %v270
        %v355 = vunpack.c.l.b16 %v271
        %v356 = vunpack.c.l.b16 %v272
        %v357 = vunpack.c.l.b16 %v273
        %v358 = vunpack.c.l.b16 %v274
        %v359 = vunpack.c.l.b16 %v275
        %v360 = vunpack.c.l.b16 %v276
        %v361 = vunpack.c.l.b16 %v277
        %v362 = vunpack.c.l.b16 %v278
        %v363 = vunpack.c.l.b16 %v279
        %v364 = vunpack.c.l.b16 %v280
        %v365 = vunpack.c.l.b16 %v281
        %v366 = vpack.c.b16 %v335, %v334
        %v367 = vpack.c.b16 %v337, %v336
        %v368 = vpack.c.b16 %v339, %v338
        %v369 = vpack.c.b16 %v341, %v340
        %v370 = vpack.c.b16 %v343, %v342
        %v371 = vpack.c.b16 %v345, %v344
        %v372 = vpack.c.b16 %v347, %v346
        %v373 = vpack.c.b16 %v349, %v348
        %v374 = vpack.c.b16 %v351, %v350
        %v375 = vpack.c.b16 %v353, %v352
        %v376 = vpack.c.b16 %v355, %v354
        %v377 = vpack.c.b16 %v357, %v356
        %v378 = vpack.c.b16 %v359, %v358
        %v379 = vpack.c.b16 %v361, %v360
        %v380 = vpack.c.b16 %v363, %v362
        %v381 = vpack.c.b16 %v365, %v364
        %398 = vmatprep.subr.bf16.mxu0 0
        %399 = vmatpush1.bf16.msra.mxu0 %v373
        %400 = vmatprep.subr.bf16.mxu0 0
        %401 = vmatpush1.bf16.msra.mxu0 %v372
        %402 = vmatprep.subr.bf16.mxu0 0
        %403 = vmatpush1.bf16.msra.mxu0 %v371
        %404 = vmatprep.subr.bf16.mxu0 0
        %405 = vmatpush1.bf16.msra.mxu0 %v370
        %406 = vmatprep.subr.bf16.mxu0 0
        %407 = vmatpush1.bf16.msra.mxu0 %v369
        %408 = vmatprep.subr.bf16.mxu0 0
        %409 = vmatpush1.bf16.msra.mxu0 %v368
        %410 = vmatprep.subr.bf16.mxu0 0
        %411 = vmatpush1.bf16.msra.mxu0 %v367
        %412 = vmatprep.subr.bf16.mxu0 0
        %413 = vmatpush1.bf16.msra.mxu0 %v366
        %414 = vmatprep.subr.bf16.mxu0 0
        %415 = vmatpush2.bf16.msra.mxu0 %v381
        %416 = vmatprep.subr.bf16.mxu0 0
        %417 = vmatpush2.bf16.msra.mxu0 %v380
        %418 = vmatprep.subr.bf16.mxu0 0
        %419 = vmatpush2.bf16.msra.mxu0 %v379
        %420 = vmatprep.subr.bf16.mxu0 0
        %421 = vmatpush2.bf16.msra.mxu0 %v378
        %422 = vmatprep.subr.bf16.mxu0 0
        %423 = vmatpush2.bf16.msra.mxu0 %v377
        %424 = vmatprep.subr.bf16.mxu0 0
        %425 = vmatpush2.bf16.msra.mxu0 %v376
        %426 = vmatprep.subr.bf16.mxu0 0
        %427 = vmatpush2.bf16.msra.mxu0 %v375
        %428 = vmatprep.subr.bf16.mxu0 0
        %429 = vmatpush2.bf16.msra.mxu0 %v374
        %430 = vmatprep.mubr.bf16.mxu0 %v295
        %431 = vmatmul.mubr.bf16.gmra.mxu0 %v294
        %v432 = vpop.f32.mrf.mxu0
        %v433 = vadd.f32 0.0, %v432
        %v434 = vpop.f32.mrf.mxu0
        %v435 = vpop.f32.mrf.mxu0
        %v436 = vadd.f32 0.0, %v435
        %v437 = vpop.f32.mrf.mxu0
        %438 = vmatprep.mubr.bf16.mxu0 %v297
        %439 = vmatmul.mubr.bf16.gmra.mxu0 %v296
        %v440 = vpop.f32.mrf.mxu0
        %v441 = vadd.f32 0.0, %v440
        %v442 = vpop.f32.mrf.mxu0
        %v443 = vpop.f32.mrf.mxu0
        %v444 = vadd.f32 0.0, %v443
        %v445 = vpop.f32.mrf.mxu0
        %446 = vdwg.mxu0
        %s447 = smul.u32 %s20, 32
        %s448 = scalar_lea.vmem [#allocation2], %s447
        %449 = vst [vmem:[%s448] sm:$0xff] %v433
        %450 = vst [vmem:[%s448 + $0x8] sm:$0xff] %v436
        %451 = vst [vmem:[%s448 + $0x10] sm:$0xff] %v441
        %452 = vst [vmem:[%s448 + $0x18] sm:$0xff] %v444
        %v453 = vld [vmem:[#allocation3] sm:$0x1]
        %v454 = vadd.f32 %v433, %v436
        %v455 = vadd.f32 %v454, %v441
        %v456 = vadd.f32 %v455, %v444
        %v457 = vrot.slane %v456, 4
        %v458 = vadd.f32 %v456, %v457
        %v459 = vrot.slane %v458, 2
        %v460 = vadd.f32 %v458, %v459
        %v461 = vrot.slane %v460, 1
        %v462 = vadd.f32 %v460, %v461
        %v463 = vadd.f32 %v453, %v462
        %464 = vst [vmem:[#allocation3] sm:$0x1] %v463
        %v465 = vld [vmem:[#allocation4] sm:$0x1]
        %v466 = vmul.f32 %v433, %v433
        %v467 = vmul.f32 %v436, %v436
        %v468 = vmul.f32 %v441, %v441
        %v469 = vmul.f32 %v444, %v444
        %v470 = vadd.f32 %v466, %v467
        %v471 = vadd.f32 %v470, %v468
        %v472 = vadd.f32 %v471, %v469
        %v473 = vrot.slane %v472, 4
        %v474 = vadd.f32 %v472, %v473
        %v475 = vrot.slane %v474, 2
        %v476 = vadd.f32 %v474, %v475
        %v477 = vrot.slane %v476, 1
        %v478 = vadd.f32 %v476, %v477
        %v479 = vadd.f32 %v465, %v478
        %480 = vst [vmem:[#allocation4] sm:$0x1] %v479
      $region40: #{_lambda_.7} parent=35 // pred_fallthru
        _
      %p481 = scmp.eq.s32.totalorder %s19, 1
      %p482 = scmp.eq.s32.totalorder %s20, 0
      %p483 = pnand %p481, %p482
      %p484 = pneg %p483
      // Predicated region
      $region45: #{_lambda_.7} parent=35 // pred_check
        _
      $region46: #{_lambda_.7} parent=35 // pred_check_branch
        %486 = sbr.rel (%p483) target = $region48
      $region47: #{_lambda_.7} parent=35 // pred_region
        %v487 = vld [vmem:[#allocation3] sm:$0x1]
        %v488 = vmul.f32 %v487, 0.03125
        %v489 = vld [vmem:[#allocation4] sm:$0x1]
        %v490 = vmul.f32 %v489, 0.03125
        %v491 = vmul.f32 %v488, %v488
        %v492 = vsub.f32 %v490, %v491
        %v493 = vmax.f32 %v492, 0.0
        %v494 = vld [vmem:[%s2] sm:$0x1]
        %v495 = vadd.f32 %v493, 1e-05
        %v496 = vrsqrt.pop %v495
        %v497 = vmul.f32 %v494, %v496
        %498 = vst [vmem:[#allocation5] sm:$0x1] %v497
        %v499 = vld [vmem:[%s3] sm:$0x1]
        %v500 = vmul.f32 %v488, %v497
        %v501 = vsub.f32 %v499, %v500
        %502 = vst [vmem:[#allocation6] sm:$0x1] %v501
      $region48: #{_lambda_.7} parent=35 // pred_fallthru
        _
      // Predicated region
      $region49: #{_lambda_.7} parent=35 // pred_check
        %p503 = pneg %p481
      $region50: #{_lambda_.7} parent=35 // pred_check_branch
        %505 = sbr.rel (%p503) target = $region52
      $region51: #{_lambda_.7} parent=35 // pred_region
        %s506 = smul.u32 %s20, 32
        %s507 = scalar_lea.vmem [#allocation2], %s506
        %v508 = vld [vmem:[%s507] sm:$0xff]
        %v509 = vld [vmem:[%s507 + $0x8] sm:$0xff]
        %v510 = vld [vmem:[%s507 + $0x10] sm:$0xff]
        %v511 = vld [vmem:[%s507 + $0x18] sm:$0xff]
        %v512 = vld [vmem:[#allocation5] sm:$0x1]
        %v514 = vlaneseq
        %v515 = vshrl.u32 %v514, 7
        %v516 = vsub.s32 0, %v515
        %v517 = vrot.slane %v512, %v516
        %v519 = vmul.f32 %v508, %v517
        %v520 = vmul.f32 %v509, %v517
        %v521 = vmul.f32 %v510, %v517
        %v522 = vmul.f32 %v511, %v517
        %v523 = vld [vmem:[#allocation6] sm:$0x1]
        %v525 = vlaneseq
        %v526 = vshrl.u32 %v525, 7
        %v527 = vsub.s32 0, %v526
        %v528 = vrot.slane %v523, %v527
        %v530 = vadd.f32 %v519, %v528
        %v531 = vadd.f32 %v520, %v528
        %v532 = vadd.f32 %v521, %v528
        %v533 = vadd.f32 %v522, %v528
        %vm534 = vcmp.gt.f32.partialorder %v530, 0.0
        %vm535 = vcmp.gt.f32.partialorder %v531, 0.0
        %vm536 = vcmp.gt.f32.partialorder %v532, 0.0
        %vm537 = vcmp.gt.f32.partialorder %v533, 0.0
        %v538 = vmul.f32 %v530, 0.2
        %v539 = vmul.f32 %v531, 0.2
        %v540 = vmul.f32 %v532, 0.2
        %v541 = vmul.f32 %v533, 0.2
        %v542 = vsel %vm534, %v530, %v538
        %v543 = vsel %vm535, %v531, %v539
        %v544 = vsel %vm536, %v532, %v540
        %v545 = vsel %vm537, %v533, %v541
        %v546 = vpack.c.bf16 %v543, %v542
        %v547 = vpack.c.bf16 %v545, %v544
        %v550 = vunpack.c.l.b16 %v546
        %v551 = vunpack.c.h.b16 %v546
        %v552 = vunpack.c.l.b16 %v547
        %v553 = vunpack.c.h.b16 %v547
        %v554 = vpack.c.b16 %v550, %v550
        %v555 = vpack.c.b16 %v551, %v551
        %v556 = vpack.c.b16 %v552, %v552
        %v557 = vpack.c.b16 %v553, %v553
        %562 = vst [vmem:[%s232] sm:$0xf] %v554
        %563 = vst [vmem:[%s232 + $0x4] sm:$0xf] %v555
        %564 = vst [vmem:[%s232 + $0x8] sm:$0xf] %v556
        %565 = vst [vmem:[%s232 + $0xc] sm:$0xf] %v557
      $region52: #{_lambda_.7} parent=35 // pred_fallthru
        _
      %s566 = smul.u32 %s20, %s19
      %s567 = smul.u32 4, %s566
      %p568 = scmp.lt.s32.totalorder %s567, 3
      %s569 = scalar_select %p568, %s567, 3
      %s570 = smul.addr %s569, 4
      %s571 = scalar_lea.vmem %s4, %s570
      // Predicated region
      $region53: #{_lambda_.7} parent=35 // pred_check
        %p572 = pneg %p140
      $region54: #{_lambda_.7} parent=35 // pred_check_branch
        %574 = sbr.rel (%p572) target = $region56
      $region55: #{_lambda_.7} parent=35 // pred_region
        %s575 = smul.u32 %s20, %s19
        %s576 = smul.u32 4, %s575
      $region56: #{_lambda_.7} parent=35 // pred_fallthru
        _
    $region36: #{_lambda_.7} parent=5 // pred_fallthru
      _
    %p577 = scmp.le.s32.totalorder 2, %s10
    // Predicated region
    $region57: #{_lambda_.7} parent=5 // pred_check
      %p578 = pneg %p577
    $region58: #{_lambda_.7} parent=5 // pred_check_branch
      %580 = sbr.rel (%p578) target = $region60
    $region59: #{_lambda_.7} parent=5 // pred_region
      %s581 = ssub.s32 %s10, 2
      // Predicated region
      $region61: #{_lambda_.7} parent=59 // pred_check
        %p582 = pneg %p146
      $region62: #{_lambda_.7} parent=59 // pred_check_branch
        %584 = sbr.rel (%p582) target = $region64
      $region63: #{_lambda_.7} parent=59 // pred_region
        %s585 = smul.u32 %s22, %s21
        %s586 = smul.u32 4, %s585
        %p587 = scmp.lt.s32.totalorder %s586, 3
        %s588 = scalar_select %p587, %s586, 3
        %s589 = smul.addr %s588, 4
        %s590 = scalar_lea.vmem %s4, %s589
      $region64: #{_lambda_.7} parent=59 // pred_fallthru
        _
    $region60: #{_lambda_.7} parent=5 // pred_fallthru
      _
  $region6: #{_lambda_.7} parent=0 // loop_footer
    %s14 = sadd.s32 1, %s10
  $region7: #{_lambda_.7} parent=0 // loop_footer_branch
    %9 = sbr.rel target = $region3
  $region8: #{_lambda_.7} parent=0 // loop_exit
    _

// kernel: _lambda_.8
$region0: #{_lambda_.8}
  #allocation0 [shape = 'u32[]', space=smem, size = 0x4, offset = 0x4, fixed_abs, tag = 'smem constant byte address 0x4 - core index']
  #allocation1 [shape = 'u32[144,128]{1,0:T(1,128)}', space=vmem, size = 0x12000, scoped, tag = 'internal scratch']
  #allocation2 [shape = 'f32[1,32,128]{2,1,0:T(8,128)}', space=vmem, size = 0x4000, scoped, tag = 'scratch operand']
  #allocation3 [shape = 'f32[1,128]{1,0:T(1,128)}', space=vmem, size = 0x200, scoped, tag = 'scratch operand']
  #allocation4 [shape = 'f32[1,128]{1,0:T(1,128)}', space=vmem, size = 0x200, scoped, tag = 'scratch operand']
  #allocation5 [shape = 'f32[1,128]{1,0:T(1,128)}', space=vmem, size = 0x200, scoped, tag = 'scratch operand']
  #allocation6 [shape = 'f32[1,128]{1,0:T(1,128)}', space=vmem, size = 0x200, scoped, tag = 'scratch operand']
  %s0 = inlined_call_operand.vmem [shape: bf16[32,512], index: 0, kind: input, shape index: {}]
  %s1 = inlined_call_operand.vmem [shape: bf16[512,128], index: 1, kind: input, shape index: {}]
  %s2 = inlined_call_operand.vmem [shape: f32[1,128], index: 2, kind: input, shape index: {}]
  %s3 = inlined_call_operand.vmem [shape: f32[1,128], index: 3, kind: input, shape index: {}]
  %s4 = inlined_call_operand.vmem [shape: bf16[32,128], index: 4, kind: output, shape index: {}]
  %s5 = sld [smem:[#allocation0]]
  $region65: #{_lambda_.8} parent=0
    _
  %s7 = ssub.s32 1, %s5
  %s8 = scalar_select 0, %s7, %s5
  loop: start=0, step=1, limit=4
  $region2: #{_lambda_.8} parent=0 // loop_pre_header
    _
  $region3: #{_lambda_.8} parent=0 // loop_header
    %s10 = sphi 0, %s14
    %p11 = scmp.ge.s32.totalorder %s10, 4
    %s17 = sphi 0, %s29
    %s18 = sphi 0, %s25
    %s19 = sphi 0, %s17
    %s20 = sphi 0, %s18
    %s21 = sphi 0, %s19
    %s22 = sphi 0, %s20
    %s36 = sphi 0, %s38
    %s39 = sphi 0, %s36
    %s40 = sphi 0, %s39
    %s56 = sphi 0, %s40
    %s60 = sphi 0, %s60
    %s62 = sphi 0, %s60
    %s63 = sphi 0, %s62
    %s77 = sphi 0, %s63
    %s81 = sphi 0, %s81
    %s83 = sphi 0, %s81
    %s84 = sphi 0, %s83
    %s98 = sphi 0, %s84
    %s102 = sphi 0, %s102
    %s104 = sphi 0, %s102
    %s105 = sphi 0, %s104
    %s119 = sphi 0, %s105
    %s127 = sphi 0, %s129
    %s130 = sphi 0, %s127
    %s131 = sphi 0, %s130
    %s147 = sphi 0, %s131
  $region4: #{_lambda_.8} parent=0 // loop_header_branch
    %13 = sbr.rel (%p11) target = $region8
  $region5: #{_lambda_.8} parent=0 // loop_body
    %s15 = ssub.s32 %s10, 1
    %s16 = ssub.s32 %s10, 2
    %s23 = sadd.s32 1, %s18
    %p24 = scmp.ge.s32.totalorder %s23, 1
    %s25 = scalar_select %p24, 0, %s23
    %s26 = sadd.s32 1, %s17
    %s27 = scalar_select %p24, %s26, %s17
    %p28 = scmp.ge.s32.totalorder %s27, 2
    %s29 = scalar_select %p28, 0, %s27
    %s30 = ssub.s32 1, %s17
    %s31 = smul.u32 %s18, %s30
    %s32 = ssub.s32 1, %s29
    %s33 = smul.u32 %s25, %s32
    %s34 = ssub.s32 %s31, %s33
    %p35 = scmp.eq.s32.totalorder %s34, 0
    %s37 = sadd.s32 %s36, 1
    %s38 = scalar_select %p35, %s36, %s37
    %p41 = pneg %p35
    %p42 = scmp.eq.s32.totalorder %s10, 1
    %p43 = por %p41, %p42
    %p44 = scmp.ne.s32.totalorder %s36, %s39
    %p45 = scmp.eq.s32.totalorder %s10, 0
    %p46 = por %p44, %p45
    %p47 = scmp.ne.s32.totalorder %s36, %s39
    %p48 = scmp.eq.s32.totalorder %s15, 1
    %p49 = por %p47, %p48
    %p50 = scmp.ne.s32.totalorder %s39, %s40
    %p51 = scmp.eq.s32.totalorder %s15, 0
    %p52 = por %p50, %p51
    %p53 = scmp.ne.s32.totalorder %s39, %s40
    %p54 = scmp.eq.s32.totalorder %s16, 1
    %p55 = por %p53, %p54
    %p57 = scmp.ne.s32.totalorder %s40, %s56
    %p58 = scmp.eq.s32.totalorder %s16, 0
    %p59 = por %p57, %p58
    %s61 = sadd.s32 %s60, 1
    %p64 = scmp.eq.s32.totalorder %s10, 1
    %p65 = scmp.ne.s32.totalorder %s60, %s62
    %p66 = scmp.eq.s32.totalorder %s10, 0
    %p67 = por %p65, %p66
    %p68 = scmp.ne.s32.totalorder %s60, %s62
    %p69 = scmp.eq.s32.totalorder %s15, 1
    %p70 = por %p68, %p69
    %p71 = scmp.ne.s32.totalorder %s62, %s63
    %p72 = scmp.eq.s32.totalorder %s15, 0
    %p73 = por %p71, %p72
    %p74 = scmp.ne.s32.totalorder %s62, %s63
    %p75 = scmp.eq.s32.totalorder %s16, 1
    %p76 = por %p74, %p75
    %p78 = scmp.ne.s32.totalorder %s63, %s77
    %p79 = scmp.eq.s32.totalorder %s16, 0
    %p80 = por %p78, %p79
    %s82 = sadd.s32 %s81, 1
    %p85 = scmp.eq.s32.totalorder %s10, 1
    %p86 = scmp.ne.s32.totalorder %s81, %s83
    %p87 = scmp.eq.s32.totalorder %s10, 0
    %p88 = por %p86, %p87
    %p89 = scmp.ne.s32.totalorder %s81, %s83
    %p90 = scmp.eq.s32.totalorder %s15, 1
    %p91 = por %p89, %p90
    %p92 = scmp.ne.s32.totalorder %s83, %s84
    %p93 = scmp.eq.s32.totalorder %s15, 0
    %p94 = por %p92, %p93
    %p95 = scmp.ne.s32.totalorder %s83, %s84
    %p96 = scmp.eq.s32.totalorder %s16, 1
    %p97 = por %p95, %p96
    %p99 = scmp.ne.s32.totalorder %s84, %s98
    %p100 = scmp.eq.s32.totalorder %s16, 0
    %p101 = por %p99, %p100
    %s103 = sadd.s32 %s102, 1
    %p106 = scmp.eq.s32.totalorder %s10, 1
    %p107 = scmp.ne.s32.totalorder %s102, %s104
    %p108 = scmp.eq.s32.totalorder %s10, 0
    %p109 = por %p107, %p108
    %p110 = scmp.ne.s32.totalorder %s102, %s104
    %p111 = scmp.eq.s32.totalorder %s15, 1
    %p112 = por %p110, %p111
    %p113 = scmp.ne.s32.totalorder %s104, %s105
    %p114 = scmp.eq.s32.totalorder %s15, 0
    %p115 = por %p113, %p114
    %p116 = scmp.ne.s32.totalorder %s104, %s105
    %p117 = scmp.eq.s32.totalorder %s16, 1
    %p118 = por %p116, %p117
    %p120 = scmp.ne.s32.totalorder %s105, %s119
    %p121 = scmp.eq.s32.totalorder %s16, 0
    %p122 = por %p120, %p121
    %s123 = smul.u32 %s18, %s17
    %s124 = smul.u32 %s25, %s29
    %s125 = ssub.s32 %s123, %s124
    %p126 = scmp.eq.s32.totalorder %s125, 0
    %s128 = sadd.s32 %s127, 1
    %s129 = scalar_select %p126, %s127, %s128
    %p132 = pneg %p126
    %p133 = scmp.eq.s32.totalorder %s10, 1
    %p134 = por %p132, %p133
    %p135 = scmp.ne.s32.totalorder %s127, %s130
    %p136 = scmp.eq.s32.totalorder %s10, 0
    %p137 = por %p135, %p136
    %p138 = scmp.ne.s32.totalorder %s127, %s130
    %p139 = scmp.eq.s32.totalorder %s15, 1
    %p140 = por %p138, %p139
    %p141 = scmp.ne.s32.totalorder %s130, %s131
    %p142 = scmp.eq.s32.totalorder %s15, 0
    %p143 = por %p141, %p142
    %p144 = scmp.ne.s32.totalorder %s130, %s131
    %p145 = scmp.eq.s32.totalorder %s16, 1
    %p146 = por %p144, %p145
    %p148 = scmp.ne.s32.totalorder %s131, %s147
    %p149 = scmp.eq.s32.totalorder %s16, 0
    %p150 = por %p148, %p149
    %p151 = scmp.le.s32.totalorder 1, %s10
    %p152 = scmp.lt.s32.totalorder %s10, 3
    %p153 = pnand %p151, %p152
    %p154 = pneg %p153
    // Predicated region
    $region9: #{_lambda_.8} parent=5 // pred_check
      _
    $region10: #{_lambda_.8} parent=5 // pred_check_branch
      %156 = sbr.rel (%p153) target = $region12
    $region11: #{_lambda_.8} parent=5 // pred_region
      %s157 = ssub.s32 %s10, 1
      // Predicated region
      $region13: #{_lambda_.8} parent=11 // pred_check
        %p158 = pneg %p73
      $region14: #{_lambda_.8} parent=11 // pred_check_branch
        %160 = sbr.rel (%p158) target = $region16
      $region15: #{_lambda_.8} parent=11 // pred_region
        _
      $region16: #{_lambda_.8} parent=11 // pred_fallthru
        _
      // Predicated region
      $region17: #{_lambda_.8} parent=11 // pred_check
        %p161 = pneg %p94
      $region18: #{_lambda_.8} parent=11 // pred_check_branch
        %163 = sbr.rel (%p161) target = $region20
      $region19: #{_lambda_.8} parent=11 // pred_region
        _
      $region20: #{_lambda_.8} parent=11 // pred_fallthru
        _
      // Predicated region
      $region21: #{_lambda_.8} parent=11 // pred_check
        %p164 = pneg %p115
      $region22: #{_lambda_.8} parent=11 // pred_check_branch
        %166 = sbr.rel (%p164) target = $region24
      $region23: #{_lambda_.8} parent=11 // pred_region
        _
      $region24: #{_lambda_.8} parent=11 // pred_fallthru
        _
    $region12: #{_lambda_.8} parent=5 // pred_fallthru
      _
    %p167 = scmp.lt.s32.totalorder %s10, 2
    // Predicated region
    $region25: #{_lambda_.8} parent=5 // pred_check
      %p168 = pneg %p167
    $region26: #{_lambda_.8} parent=5 // pred_check_branch
      %170 = sbr.rel (%p168) target = $region28
    $region27: #{_lambda_.8} parent=5 // pred_region
      // Predicated region
      $region29: #{_lambda_.8} parent=27 // pred_check
        %p171 = pneg %p46
      $region30: #{_lambda_.8} parent=27 // pred_check_branch
        %173 = sbr.rel (%p171) target = $region32
      $region31: #{_lambda_.8} parent=27 // pred_region
        %s174 = ssub.s32 1, %s17
        %s175 = smul.u32 %s18, %s174
        %s176 = smul.u32 4, %s175
        %p177 = scmp.lt.s32.totalorder %s176, 3
        %s178 = scalar_select %p177, %s176, 3
        %s179 = smul.addr %s178, 4
        %s180 = smul.addr %s179, 4
        %s181 = scalar_lea.vmem %s0, %s180
        %s182 = ssub.s32 1, %s17
        %s183 = smul.u32 %s18, %s182
        %s184 = smul.u32 4, %s183
      $region32: #{_lambda_.8} parent=27 // pred_fallthru
        _
    $region28: #{_lambda_.8} parent=5 // pred_fallthru
      _
    %p185 = scmp.le.s32.totalorder 1, %s10
    %p186 = scmp.lt.s32.totalorder %s10, 3
    %p187 = pnand %p185, %p186
    %p188 = pneg %p187
    // Predicated region
    $region33: #{_lambda_.8} parent=5 // pred_check
      _
    $region34: #{_lambda_.8} parent=5 // pred_check_branch
      %190 = sbr.rel (%p187) target = $region36
    $region35: #{_lambda_.8} parent=5 // pred_region
      %s191 = ssub.s32 %s10, 1
      %s192 = ssub.s32 1, %s19
      %s193 = smul.u32 %s20, %s192
      %s194 = smul.u32 4, %s193
      %p195 = scmp.lt.s32.totalorder %s194, 3
      %s196 = scalar_select %p195, %s194, 3
      %s197 = smul.addr %s196, 4
      %s198 = smul.addr %s197, 4
      %s199 = scalar_lea.vmem %s0, %s198
      %p200 = pneg %p52
      %p201 = pneg %p49
      %p202 = pneg %p73
      %p203 = pneg %p70
      %p204 = pneg %p94
      %p205 = pneg %p91
      %p206 = pneg %p115
      %p207 = pneg %p112
      %p208 = pneg %p143
      %p209 = pneg %p140
      %s210 = smul.u32 %s20, %s19
      %s211 = smul.u32 4, %s210
      %p212 = scmp.lt.s32.totalorder %s211, 3
      %s213 = scalar_select %p212, %s211, 3
      %s214 = smul.addr %s213, 4
      %s215 = scalar_lea.vmem %s4, %s214
      %s216 = ssub.s32 1, %s19
      %s217 = smul.u32 %s20, %s216
      %s218 = smul.u32 4, %s217
      %p219 = scmp.lt.s32.totalorder %s218, 3
      %s220 = scalar_select %p219, %s218, 3
      %s221 = smul.addr %s220, 4
      %s222 = smul.addr %s221, 4
      %s223 = scalar_lea.vmem %s0, %s222
      %s224 = ssub.s32 1, %s19
      %s225 = smul.u32 %s20, %s224
      %s226 = smul.u32 4, %s225
      %s227 = smul.u32 %s20, %s19
      %s228 = smul.u32 4, %s227
      %p229 = scmp.lt.s32.totalorder %s228, 3
      %s230 = scalar_select %p229, %s228, 3
      %s231 = smul.addr %s230, 4
      %s232 = scalar_lea.vmem %s4, %s231
      %s233 = smul.u32 %s20, %s19
      %s234 = smul.u32 4, %s233
      %p236 = scmp.eq.s32.totalorder %s19, 0
      // Predicated region
      $region37: #{_lambda_.8} parent=35 // pred_check
        %p237 = pneg %p236
      $region38: #{_lambda_.8} parent=35 // pred_check_branch
        %239 = sbr.rel (%p237) target = $region40
      $region39: #{_lambda_.8} parent=35 // pred_region
        %p240 = scmp.eq.s32.totalorder %s20, 0
        // Predicated region
        $region41: #{_lambda_.8} parent=39 // pred_check
          %p241 = pneg %p240
        $region42: #{_lambda_.8} parent=39 // pred_check_branch
          %243 = sbr.rel (%p241) target = $region44
        $region43: #{_lambda_.8} parent=39 // pred_region
          %244 = vst [vmem:[#allocation3] sm:$0x1] 0.0
          %245 = vst [vmem:[#allocation4] sm:$0x1] 0.0
        $region44: #{_lambda_.8} parent=39 // pred_fallthru
          _
        %v246 = vld [vmem:[%s223] sm:$0xff]
        %v247 = vld [vmem:[%s223 + $0x8] sm:$0xff]
        %v248 = vld [vmem:[%s223 + $0x10] sm:$0xff]
        %v249 = vld [vmem:[%s223 + $0x18] sm:$0xff]
        %v250 = vld [vmem:[%s223 + $0x20] sm:$0xff]
        %v251 = vld [vmem:[%s223 + $0x28] sm:$0xff]
        %v252 = vld [vmem:[%s223 + $0x30] sm:$0xff]
        %v253 = vld [vmem:[%s223 + $0x38] sm:$0xff]
        %v254 = vld [vmem:[%s1] sm:$0xf]
        %v255 = vld [vmem:[%s1 + $0x4] sm:$0xf]
        %v256 = vld [vmem:[%s1 + $0x8] sm:$0xf]
        %v257 = vld [vmem:[%s1 + $0xc] sm:$0xf]
        %v258 = vld [vmem:[%s1 + $0x10] sm:$0xf]
        %v259 = vld [vmem:[%s1 + $0x14] sm:$0xf]
        %v260 = vld [vmem:[%s1 + $0x18] sm:$0xf]
        %v261 = vld [vmem:[%s1 + $0x1c] sm:$0xf]
        %v262 = vld [vmem:[%s1 + $0x20] sm:$0xf]
        %v263 = vld [vmem:[%s1 + $0x24] sm:$0xf]
        %v264 = vld [vmem:[%s1 + $0x28] sm:$0xf]
        %v265 = vld [vmem:[%s1 + $0x2c] sm:$0xf]
        %v266 = vld [vmem:[%s1 + $0x30] sm:$0xf]
        %v267 = vld [vmem:[%s1 + $0x34] sm:$0xf]
        %v268 = vld [vmem:[%s1 + $0x38] sm:$0xf]
        %v269 = vld [vmem:[%s1 + $0x3c] sm:$0xf]
        %v270 = vld [vmem:[%s1 + $0x40] sm:$0xf]
        %v271 = vld [vmem:[%s1 + $0x44] sm:$0xf]
        %v272 = vld [vmem:[%s1 + $0x48] sm:$0xf]
        %v273 = vld [vmem:[%s1 + $0x4c] sm:$0xf]
        %v274 = vld [vmem:[%s1 + $0x50] sm:$0xf]
        %v275 = vld [vmem:[%s1 + $0x54] sm:$0xf]
        %v276 = vld [vmem:[%s1 + $0x58] sm:$0xf]
        %v277 = vld [vmem:[%s1 + $0x5c] sm:$0xf]
        %v278 = vld [vmem:[%s1 + $0x60] sm:$0xf]
        %v279 = vld [vmem:[%s1 + $0x64] sm:$0xf]
        %v280 = vld [vmem:[%s1 + $0x68] sm:$0xf]
        %v281 = vld [vmem:[%s1 + $0x6c] sm:$0xf]
        %v282 = vld [vmem:[%s1 + $0x70] sm:$0xf]
        %v283 = vld [vmem:[%s1 + $0x74] sm:$0xf]
        %v284 = vld [vmem:[%s1 + $0x78] sm:$0xf]
        %v285 = vld [vmem:[%s1 + $0x7c] sm:$0xf]
        %v286 = vld [vmem:[%s1 + $0x80] sm:$0xf]
        %v287 = vld [vmem:[%s1 + $0x84] sm:$0xf]
        %v288 = vld [vmem:[%s1 + $0x88] sm:$0xf]
        %v289 = vld [vmem:[%s1 + $0x8c] sm:$0xf]
        %v290 = vld [vmem:[%s1 + $0x90] sm:$0xf]
        %v291 = vld [vmem:[%s1 + $0x94] sm:$0xf]
        %v292 = vld [vmem:[%s1 + $0x98] sm:$0xf]
        %v293 = vld [vmem:[%s1 + $0x9c] sm:$0xf]
        %v294 = vld [vmem:[%s1 + $0xa0] sm:$0xf]
        %v295 = vld [vmem:[%s1 + $0xa4] sm:$0xf]
        %v296 = vld [vmem:[%s1 + $0xa8] sm:$0xf]
        %v297 = vld [vmem:[%s1 + $0xac] sm:$0xf]
        %v298 = vld [vmem:[%s1 + $0xb0] sm:$0xf]
        %v299 = vld [vmem:[%s1 + $0xb4] sm:$0xf]
        %v300 = vld [vmem:[%s1 + $0xb8] sm:$0xf]
        %v301 = vld [vmem:[%s1 + $0xbc] sm:$0xf]
        %v302 = vld [vmem:[%s1 + $0xc0] sm:$0xf]
        %v303 = vld [vmem:[%s1 + $0xc4] sm:$0xf]
        %v304 = vld [vmem:[%s1 + $0xc8] sm:$0xf]
        %v305 = vld [vmem:[%s1 + $0xcc] sm:$0xf]
        %v306 = vld [vmem:[%s1 + $0xd0] sm:$0xf]
        %v307 = vld [vmem:[%s1 + $0xd4] sm:$0xf]
        %v308 = vld [vmem:[%s1 + $0xd8] sm:$0xf]
        %v309 = vld [vmem:[%s1 + $0xdc] sm:$0xf]
        %v310 = vld [vmem:[%s1 + $0xe0] sm:$0xf]
        %v311 = vld [vmem:[%s1 + $0xe4] sm:$0xf]
        %v312 = vld [vmem:[%s1 + $0xe8] sm:$0xf]
        %v313 = vld [vmem:[%s1 + $0xec] sm:$0xf]
        %v314 = vld [vmem:[%s1 + $0xf0] sm:$0xf]
        %v315 = vld [vmem:[%s1 + $0xf4] sm:$0xf]
        %v316 = vld [vmem:[%s1 + $0xf8] sm:$0xf]
        %v317 = vld [vmem:[%s1 + $0xfc] sm:$0xf]
        %v326 = vunpack.c.l.b16 %v246
        %v327 = vunpack.c.h.b16 %v246
        %v328 = vunpack.c.l.b16 %v247
        %v329 = vunpack.c.h.b16 %v247
        %v330 = vunpack.c.l.b16 %v248
        %v331 = vunpack.c.h.b16 %v248
        %v332 = vunpack.c.l.b16 %v249
        %v333 = vunpack.c.h.b16 %v249
        %v334 = vunpack.c.l.b16 %v250
        %v335 = vunpack.c.h.b16 %v250
        %v336 = vunpack.c.l.b16 %v251
        %v337 = vunpack.c.h.b16 %v251
        %v338 = vunpack.c.l.b16 %v252
        %v339 = vunpack.c.h.b16 %v252
        %v340 = vunpack.c.l.b16 %v253
        %v341 = vunpack.c.h.b16 %v253
        %v342 = vpack.c.b16 %v330, %v326
        %v343 = vpack.c.b16 %v331, %v327
        %v344 = vpack.c.b16 %v332, %v328
        %v345 = vpack.c.b16 %v333, %v329
        %v346 = vpack.c.b16 %v338, %v334
        %v347 = vpack.c.b16 %v339, %v335
        %v348 = vpack.c.b16 %v340, %v336
        %v349 = vpack.c.b16 %v341, %v337
        %v422 = vunpack.c.l.b16 %v254
        %v423 = vunpack.c.l.b16 %v255
        %v424 = vunpack.c.l.b16 %v256
        %v425 = vunpack.c.l.b16 %v257
        %v426 = vunpack.c.l.b16 %v258
        %v427 = vunpack.c.l.b16 %v259
        %v428 = vunpack.c.l.b16 %v260
        %v429 = vunpack.c.l.b16 %v261
        %v430 = vunpack.c.l.b16 %v262
        %v431 = vunpack.c.l.b16 %v263
        %v432 = vunpack.c.l.b16 %v264
        %v433 = vunpack.c.l.b16 %v265
        %v434 = vunpack.c.l.b16 %v266
        %v435 = vunpack.c.l.b16 %v267
        %v436 = vunpack.c.l.b16 %v268
        %v437 = vunpack.c.l.b16 %v269
        %v438 = vunpack.c.l.b16 %v270
        %v439 = vunpack.c.l.b16 %v271
        %v440 = vunpack.c.l.b16 %v272
        %v441 = vunpack.c.l.b16 %v273
        %v442 = vunpack.c.l.b16 %v274
        %v443 = vunpack.c.l.b16 %v275
        %v444 = vunpack.c.l.b16 %v276
        %v445 = vunpack.c.l.b16 %v277
        %v446 = vunpack.c.l.b16 %v278
        %v447 = vunpack.c.l.b16 %v279
        %v448 = vunpack.c.l.b16 %v280
        %v449 = vunpack.c.l.b16 %v281
        %v450 = vunpack.c.l.b16 %v282
        %v451 = vunpack.c.l.b16 %v283
        %v452 = vunpack.c.l.b16 %v284
        %v453 = vunpack.c.l.b16 %v285
        %v454 = vunpack.c.l.b16 %v286
        %v455 = vunpack.c.l.b16 %v287
        %v456 = vunpack.c.l.b16 %v288
        %v457 = vunpack.c.l.b16 %v289
        %v458 = vunpack.c.l.b16 %v290
        %v459 = vunpack.c.l.b16 %v291
        %v460 = vunpack.c.l.b16 %v292
        %v461 = vunpack.c.l.b16 %v293
        %v462 = vunpack.c.l.b16 %v294
        %v463 = vunpack.c.l.b16 %v295
        %v464 = vunpack.c.l.b16 %v296
        %v465 = vunpack.c.l.b16 %v297
        %v466 = vunpack.c.l.b16 %v298
        %v467 = vunpack.c.l.b16 %v299
        %v468 = vunpack.c.l.b16 %v300
        %v469 = vunpack.c.l.b16 %v301
        %v470 = vunpack.c.l.b16 %v302
        %v471 = vunpack.c.l.b16 %v303
        %v472 = vunpack.c.l.b16 %v304
        %v473 = vunpack.c.l.b16 %v305
        %v474 = vunpack.c.l.b16 %v306
        %v475 = vunpack.c.l.b16 %v307
        %v476 = vunpack.c.l.b16 %v308
        %v477 = vunpack.c.l.b16 %v309
        %v478 = vunpack.c.l.b16 %v310
        %v479 = vunpack.c.l.b16 %v311
        %v480 = vunpack.c.l.b16 %v312
        %v481 = vunpack.c.l.b16 %v313
        %v482 = vunpack.c.l.b16 %v314
        %v483 = vunpack.c.l.b16 %v315
        %v484 = vunpack.c.l.b16 %v316
        %v485 = vunpack.c.l.b16 %v317
        %v486 = vpack.c.b16 %v423, %v422
        %v487 = vpack.c.b16 %v425, %v424
        %v488 = vpack.c.b16 %v427, %v426
        %v489 = vpack.c.b16 %v429, %v428
        %v490 = vpack.c.b16 %v431, %v430
        %v491 = vpack.c.b16 %v433, %v432
        %v492 = vpack.c.b16 %v435, %v434
        %v493 = vpack.c.b16 %v437, %v436
        %v494 = vpack.c.b16 %v439, %v438
        %v495 = vpack.c.b16 %v441, %v440
        %v496 = vpack.c.b16 %v443, %v442
        %v497 = vpack.c.b16 %v445, %v444
        %v498 = vpack.c.b16 %v447, %v446
        %v499 = vpack.c.b16 %v449, %v448
        %v500 = vpack.c.b16 %v451, %v450
        %v501 = vpack.c.b16 %v453, %v452
        %v502 = vpack.c.b16 %v455, %v454
        %v503 = vpack.c.b16 %v457, %v456
        %v504 = vpack.c.b16 %v459, %v458
        %v505 = vpack.c.b16 %v461, %v460
        %v506 = vpack.c.b16 %v463, %v462
        %v507 = vpack.c.b16 %v465, %v464
        %v508 = vpack.c.b16 %v467, %v466
        %v509 = vpack.c.b16 %v469, %v468
        %v510 = vpack.c.b16 %v471, %v470
        %v511 = vpack.c.b16 %v473, %v472
        %v512 = vpack.c.b16 %v475, %v474
        %v513 = vpack.c.b16 %v477, %v476
        %v514 = vpack.c.b16 %v479, %v478
        %v515 = vpack.c.b16 %v481, %v480
        %v516 = vpack.c.b16 %v483, %v482
        %v517 = vpack.c.b16 %v485, %v484
        %550 = vmatprep.subr.bf16.mxu0 0
        %551 = vmatpush1.bf16.msra.mxu0 %v493
        %552 = vmatprep.subr.bf16.mxu0 0
        %553 = vmatpush1.bf16.msra.mxu0 %v492
        %554 = vmatprep.subr.bf16.mxu0 0
        %555 = vmatpush1.bf16.msra.mxu0 %v491
        %556 = vmatprep.subr.bf16.mxu0 0
        %557 = vmatpush1.bf16.msra.mxu0 %v490
        %558 = vmatprep.subr.bf16.mxu0 0
        %559 = vmatpush1.bf16.msra.mxu0 %v489
        %560 = vmatprep.subr.bf16.mxu0 0
        %561 = vmatpush1.bf16.msra.mxu0 %v488
        %562 = vmatprep.subr.bf16.mxu0 0
        %563 = vmatpush1.bf16.msra.mxu0 %v487
        %564 = vmatprep.subr.bf16.mxu0 0
        %565 = vmatpush1.bf16.msra.mxu0 %v486
        %566 = vmatprep.subr.bf16.mxu0 0
        %567 = vmatpush2.bf16.msra.mxu0 %v501
        %568 = vmatprep.subr.bf16.mxu0 0
        %569 = vmatpush2.bf16.msra.mxu0 %v500
        %570 = vmatprep.subr.bf16.mxu0 0
        %571 = vmatpush2.bf16.msra.mxu0 %v499
        %572 = vmatprep.subr.bf16.mxu0 0
        %573 = vmatpush2.bf16.msra.mxu0 %v498
        %574 = vmatprep.subr.bf16.mxu0 0
        %575 = vmatpush2.bf16.msra.mxu0 %v497
        %576 = vmatprep.subr.bf16.mxu0 0
        %577 = vmatpush2.bf16.msra.mxu0 %v496
        %578 = vmatprep.subr.bf16.mxu0 0
        %579 = vmatpush2.bf16.msra.mxu0 %v495
        %580 = vmatprep.subr.bf16.mxu0 0
        %581 = vmatpush2.bf16.msra.mxu0 %v494
        %582 = vmatprep.mubr.bf16.mxu0 %v343
        %583 = vmatmul.mubr.bf16.gmra.mxu0 %v342
        %v584 = vpop.f32.mrf.mxu0
        %v585 = vadd.f32 0.0, %v584
        %v586 = vpop.f32.mrf.mxu0
        %v587 = vpop.f32.mrf.mxu0
        %v588 = vadd.f32 0.0, %v587
        %v589 = vpop.f32.mrf.mxu0
        %590 = vmatprep.mubr.bf16.mxu0 %v347
        %591 = vmatmul.mubr.bf16.gmra.mxu0 %v346
        %v592 = vpop.f32.mrf.mxu0
        %v593 = vadd.f32 0.0, %v592
        %v594 = vpop.f32.mrf.mxu0
        %v595 = vpop.f32.mrf.mxu0
        %v596 = vadd.f32 0.0, %v595
        %v597 = vpop.f32.mrf.mxu0
        %598 = vdwg.mxu0
        %599 = vmatprep.subr.bf16.mxu0 0
        %600 = vmatpush1.bf16.msra.mxu0 %v509
        %601 = vmatprep.subr.bf16.mxu0 0
        %602 = vmatpush1.bf16.msra.mxu0 %v508
        %603 = vmatprep.subr.bf16.mxu0 0
        %604 = vmatpush1.bf16.msra.mxu0 %v507
        %605 = vmatprep.subr.bf16.mxu0 0
        %606 = vmatpush1.bf16.msra.mxu0 %v506
        %607 = vmatprep.subr.bf16.mxu0 0
        %608 = vmatpush1.bf16.msra.mxu0 %v505
        %609 = vmatprep.subr.bf16.mxu0 0
        %610 = vmatpush1.bf16.msra.mxu0 %v504
        %611 = vmatprep.subr.bf16.mxu0 0
        %612 = vmatpush1.bf16.msra.mxu0 %v503
        %613 = vmatprep.subr.bf16.mxu0 0
        %614 = vmatpush1.bf16.msra.mxu0 %v502
        %615 = vmatprep.subr.bf16.mxu0 0
        %616 = vmatpush2.bf16.msra.mxu0 %v517
        %617 = vmatprep.subr.bf16.mxu0 0
        %618 = vmatpush2.bf16.msra.mxu0 %v516
        %619 = vmatprep.subr.bf16.mxu0 0
        %620 = vmatpush2.bf16.msra.mxu0 %v515
        %621 = vmatprep.subr.bf16.mxu0 0
        %622 = vmatpush2.bf16.msra.mxu0 %v514
        %623 = vmatprep.subr.bf16.mxu0 0
        %624 = vmatpush2.bf16.msra.mxu0 %v513
        %625 = vmatprep.subr.bf16.mxu0 0
        %626 = vmatpush2.bf16.msra.mxu0 %v512
        %627 = vmatprep.subr.bf16.mxu0 0
        %628 = vmatpush2.bf16.msra.mxu0 %v511
        %629 = vmatprep.subr.bf16.mxu0 0
        %630 = vmatpush2.bf16.msra.mxu0 %v510
        %631 = vmatprep.mubr.bf16.mxu0 %v345
        %632 = vmatmul.mubr.bf16.gmra.mxu0 %v344
        %v633 = vpop.f32.mrf.mxu0
        %v634 = vadd.f32 %v585, %v633
        %v635 = vpop.f32.mrf.mxu0
        %v636 = vpop.f32.mrf.mxu0
        %v637 = vadd.f32 %v588, %v636
        %v638 = vpop.f32.mrf.mxu0
        %639 = vmatprep.mubr.bf16.mxu0 %v349
        %640 = vmatmul.mubr.bf16.gmra.mxu0 %v348
        %v641 = vpop.f32.mrf.mxu0
        %v642 = vadd.f32 %v593, %v641
        %v643 = vpop.f32.mrf.mxu0
        %v644 = vpop.f32.mrf.mxu0
        %v645 = vadd.f32 %v596, %v644
        %v646 = vpop.f32.mrf.mxu0
        %647 = vdwg.mxu0
        %s648 = smul.u32 %s20, 32
        %s649 = scalar_lea.vmem [#allocation2], %s648
        %650 = vst [vmem:[%s649] sm:$0xff] %v634
        %651 = vst [vmem:[%s649 + $0x8] sm:$0xff] %v637
        %652 = vst [vmem:[%s649 + $0x10] sm:$0xff] %v642
        %653 = vst [vmem:[%s649 + $0x18] sm:$0xff] %v645
        %v654 = vld [vmem:[#allocation3] sm:$0x1]
        %v655 = vadd.f32 %v634, %v637
        %v656 = vadd.f32 %v655, %v642
        %v657 = vadd.f32 %v656, %v645
        %v658 = vrot.slane %v657, 4
        %v659 = vadd.f32 %v657, %v658
        %v660 = vrot.slane %v659, 2
        %v661 = vadd.f32 %v659, %v660
        %v662 = vrot.slane %v661, 1
        %v663 = vadd.f32 %v661, %v662
        %v664 = vadd.f32 %v654, %v663
        %665 = vst [vmem:[#allocation3] sm:$0x1] %v664
        %v666 = vld [vmem:[#allocation4] sm:$0x1]
        %v667 = vmul.f32 %v634, %v634
        %v668 = vmul.f32 %v637, %v637
        %v669 = vmul.f32 %v642, %v642
        %v670 = vmul.f32 %v645, %v645
        %v671 = vadd.f32 %v667, %v668
        %v672 = vadd.f32 %v671, %v669
        %v673 = vadd.f32 %v672, %v670
        %v674 = vrot.slane %v673, 4
        %v675 = vadd.f32 %v673, %v674
        %v676 = vrot.slane %v675, 2
        %v677 = vadd.f32 %v675, %v676
        %v678 = vrot.slane %v677, 1
        %v679 = vadd.f32 %v677, %v678
        %v680 = vadd.f32 %v666, %v679
        %681 = vst [vmem:[#allocation4] sm:$0x1] %v680
      $region40: #{_lambda_.8} parent=35 // pred_fallthru
        _
      %p682 = scmp.eq.s32.totalorder %s19, 1
      %p683 = scmp.eq.s32.totalorder %s20, 0
      %p684 = pnand %p682, %p683
      %p685 = pneg %p684
      // Predicated region
      $region45: #{_lambda_.8} parent=35 // pred_check
        _
      $region46: #{_lambda_.8} parent=35 // pred_check_branch
        %687 = sbr.rel (%p684) target = $region48
      $region47: #{_lambda_.8} parent=35 // pred_region
        %v688 = vld [vmem:[#allocation3] sm:$0x1]
        %v689 = vmul.f32 %v688, 0.055555556
        %v690 = vld [vmem:[#allocation4] sm:$0x1]
        %v691 = vmul.f32 %v690, 0.055555556
        %v692 = vmul.f32 %v689, %v689
        %v693 = vsub.f32 %v691, %v692
        %v694 = vmax.f32 %v693, 0.0
        %v695 = vld [vmem:[%s2] sm:$0x1]
        %v696 = vadd.f32 %v694, 1e-05
        %v697 = vrsqrt.pop %v696
        %v698 = vmul.f32 %v695, %v697
        %699 = vst [vmem:[#allocation5] sm:$0x1] %v698
        %v700 = vld [vmem:[%s3] sm:$0x1]
        %v701 = vmul.f32 %v689, %v698
        %v702 = vsub.f32 %v700, %v701
        %703 = vst [vmem:[#allocation6] sm:$0x1] %v702
      $region48: #{_lambda_.8} parent=35 // pred_fallthru
        _
      // Predicated region
      $region49: #{_lambda_.8} parent=35 // pred_check
        %p704 = pneg %p682
      $region50: #{_lambda_.8} parent=35 // pred_check_branch
        %706 = sbr.rel (%p704) target = $region52
      $region51: #{_lambda_.8} parent=35 // pred_region
        %s707 = smul.u32 %s20, 32
        %s708 = scalar_lea.vmem [#allocation2], %s707
        %v709 = vld [vmem:[%s708] sm:$0xff]
        %v710 = vld [vmem:[%s708 + $0x8] sm:$0xff]
        %v711 = vld [vmem:[%s708 + $0x10] sm:$0xff]
        %v712 = vld [vmem:[%s708 + $0x18] sm:$0xff]
        %v713 = vld [vmem:[#allocation5] sm:$0x1]
        %v715 = vlaneseq
        %v716 = vshrl.u32 %v715, 7
        %v717 = vsub.s32 0, %v716
        %v718 = vrot.slane %v713, %v717
        %v720 = vmul.f32 %v709, %v718
        %v721 = vmul.f32 %v710, %v718
        %v722 = vmul.f32 %v711, %v718
        %v723 = vmul.f32 %v712, %v718
        %v724 = vld [vmem:[#allocation6] sm:$0x1]
        %v726 = vlaneseq
        %v727 = vshrl.u32 %v726, 7
        %v728 = vsub.s32 0, %v727
        %v729 = vrot.slane %v724, %v728
        %v731 = vadd.f32 %v720, %v729
        %v732 = vadd.f32 %v721, %v729
        %v733 = vadd.f32 %v722, %v729
        %v734 = vadd.f32 %v723, %v729
        %vm735 = vcmp.gt.f32.partialorder %v731, 0.0
        %vm736 = vcmp.gt.f32.partialorder %v732, 0.0
        %vm737 = vcmp.gt.f32.partialorder %v733, 0.0
        %vm738 = vcmp.gt.f32.partialorder %v734, 0.0
        %v739 = vmul.f32 %v731, 0.2
        %v740 = vmul.f32 %v732, 0.2
        %v741 = vmul.f32 %v733, 0.2
        %v742 = vmul.f32 %v734, 0.2
        %v743 = vsel %vm735, %v731, %v739
        %v744 = vsel %vm736, %v732, %v740
        %v745 = vsel %vm737, %v733, %v741
        %v746 = vsel %vm738, %v734, %v742
        %v747 = vpack.c.bf16 %v744, %v743
        %v748 = vpack.c.bf16 %v746, %v745
        %v751 = vunpack.c.l.b16 %v747
        %v752 = vunpack.c.h.b16 %v747
        %v753 = vunpack.c.l.b16 %v748
        %v754 = vunpack.c.h.b16 %v748
        %v755 = vpack.c.b16 %v751, %v751
        %v756 = vpack.c.b16 %v752, %v752
        %v757 = vpack.c.b16 %v753, %v753
        %v758 = vpack.c.b16 %v754, %v754
        %763 = vst [vmem:[%s232] sm:$0xf] %v755
        %764 = vst [vmem:[%s232 + $0x4] sm:$0xf] %v756
        %765 = vst [vmem:[%s232 + $0x8] sm:$0xf] %v757
        %766 = vst [vmem:[%s232 + $0xc] sm:$0xf] %v758
      $region52: #{_lambda_.8} parent=35 // pred_fallthru
        _
      %s767 = smul.u32 %s20, %s19
      %s768 = smul.u32 4, %s767
      %p769 = scmp.lt.s32.totalorder %s768, 3
      %s770 = scalar_select %p769, %s768, 3
      %s771 = smul.addr %s770, 4
      %s772 = scalar_lea.vmem %s4, %s771
      // Predicated region
      $region53: #{_lambda_.8} parent=35 // pred_check
        %p773 = pneg %p140
      $region54: #{_lambda_.8} parent=35 // pred_check_branch
        %775 = sbr.rel (%p773) target = $region56
      $region55: #{_lambda_.8} parent=35 // pred_region
        %s776 = smul.u32 %s20, %s19
        %s777 = smul.u32 4, %s776
      $region56: #{_lambda_.8} parent=35 // pred_fallthru
        _
    $region36: #{_lambda_.8} parent=5 // pred_fallthru
      _
    %p778 = scmp.le.s32.totalorder 2, %s10
    // Predicated region
    $region57: #{_lambda_.8} parent=5 // pred_check
      %p779 = pneg %p778
    $region58: #{_lambda_.8} parent=5 // pred_check_branch
      %781 = sbr.rel (%p779) target = $region60
    $region59: #{_lambda_.8} parent=5 // pred_region
      %s782 = ssub.s32 %s10, 2
      // Predicated region
      $region61: #{_lambda_.8} parent=59 // pred_check
        %p783 = pneg %p146
      $region62: #{_lambda_.8} parent=59 // pred_check_branch
        %785 = sbr.rel (%p783) target = $region64
      $region63: #{_lambda_.8} parent=59 // pred_region
        %s786 = smul.u32 %s22, %s21
        %s787 = smul.u32 4, %s786
        %p788 = scmp.lt.s32.totalorder %s787, 3
        %s789 = scalar_select %p788, %s787, 3
        %s790 = smul.addr %s789, 4
        %s791 = scalar_lea.vmem %s4, %s790
      $region64: #{_lambda_.8} parent=59 // pred_fallthru
        _
    $region60: #{_lambda_.8} parent=5 // pred_fallthru
      _
  $region6: #{_lambda_.8} parent=0 // loop_footer
    %s14 = sadd.s32 1, %s10
  $region7: #{_lambda_.8} parent=0 // loop_footer_branch
    %9 = sbr.rel target = $region3
  $region8: #{_lambda_.8} parent=0 // loop_exit
    _

// kernel: _lambda_.9
$region0: #{_lambda_.9}
  #allocation0 [shape = 'u32[]', space=smem, size = 0x4, offset = 0x4, fixed_abs, tag = 'smem constant byte address 0x4 - core index']
  #allocation1 [shape = 'u32[144,128]{1,0:T(1,128)}', space=vmem, size = 0x12000, scoped, tag = 'internal scratch']
  %s0 = inlined_call_operand.vmem [shape: bf16[16,1024], index: 0, kind: input, shape index: {}]
  %s1 = inlined_call_operand.vmem [shape: bf16[1024,128], index: 1, kind: input, shape index: {}]
  %s2 = inlined_call_operand.vmem [shape: f32[1,128], index: 2, kind: input, shape index: {}]
  %s3 = inlined_call_operand.vmem [shape: f32[16,128], index: 3, kind: output, shape index: {}]
  %s4 = sld [smem:[#allocation0]]
  $region22: #{_lambda_.9} parent=0
    _
  %s6 = ssub.s32 1, %s4
  %s7 = scalar_select 0, %s6, %s4
  // Predicated region
  $region2: #{_lambda_.9} parent=0 // pred_check
    _
  $region3: #{_lambda_.9} parent=0 // pred_check_branch
    %9 = sbr.rel (0) target = $region5
  $region4: #{_lambda_.9} parent=0 // pred_region
    _
  $region5: #{_lambda_.9} parent=0 // pred_fallthru
    _
  // Predicated region
  $region6: #{_lambda_.9} parent=0 // pred_check
    _
  $region7: #{_lambda_.9} parent=0 // pred_check_branch
    %11 = sbr.rel (0) target = $region9
  $region8: #{_lambda_.9} parent=0 // pred_region
    _
  $region9: #{_lambda_.9} parent=0 // pred_fallthru
    _
  // Predicated region
  $region10: #{_lambda_.9} parent=0 // pred_check
    _
  $region11: #{_lambda_.9} parent=0 // pred_check_branch
    %13 = sbr.rel (0) target = $region13
  $region12: #{_lambda_.9} parent=0 // pred_region
    _
  $region13: #{_lambda_.9} parent=0 // pred_fallthru
    _
  %v15 = vld [vmem:[%s0] sm:$0xff]
  %v16 = vld [vmem:[%s0 + $0x8] sm:$0xff]
  %v17 = vld [vmem:[%s0 + $0x10] sm:$0xff]
  %v18 = vld [vmem:[%s0 + $0x18] sm:$0xff]
  %v19 = vld [vmem:[%s0 + $0x20] sm:$0xff]
  %v20 = vld [vmem:[%s0 + $0x28] sm:$0xff]
  %v21 = vld [vmem:[%s0 + $0x30] sm:$0xff]
  %v22 = vld [vmem:[%s0 + $0x38] sm:$0xff]
  %v23 = vld [vmem:[%s1] sm:$0xf]
  %v24 = vld [vmem:[%s1 + $0x4] sm:$0xf]
  %v25 = vld [vmem:[%s1 + $0x8] sm:$0xf]
  %v26 = vld [vmem:[%s1 + $0xc] sm:$0xf]
  %v27 = vld [vmem:[%s1 + $0x10] sm:$0xf]
  %v28 = vld [vmem:[%s1 + $0x14] sm:$0xf]
  %v29 = vld [vmem:[%s1 + $0x18] sm:$0xf]
  %v30 = vld [vmem:[%s1 + $0x1c] sm:$0xf]
  %v31 = vld [vmem:[%s1 + $0x20] sm:$0xf]
  %v32 = vld [vmem:[%s1 + $0x24] sm:$0xf]
  %v33 = vld [vmem:[%s1 + $0x28] sm:$0xf]
  %v34 = vld [vmem:[%s1 + $0x2c] sm:$0xf]
  %v35 = vld [vmem:[%s1 + $0x30] sm:$0xf]
  %v36 = vld [vmem:[%s1 + $0x34] sm:$0xf]
  %v37 = vld [vmem:[%s1 + $0x38] sm:$0xf]
  %v38 = vld [vmem:[%s1 + $0x3c] sm:$0xf]
  %v39 = vld [vmem:[%s1 + $0x40] sm:$0xf]
  %v40 = vld [vmem:[%s1 + $0x44] sm:$0xf]
  %v41 = vld [vmem:[%s1 + $0x48] sm:$0xf]
  %v42 = vld [vmem:[%s1 + $0x4c] sm:$0xf]
  %v43 = vld [vmem:[%s1 + $0x50] sm:$0xf]
  %v44 = vld [vmem:[%s1 + $0x54] sm:$0xf]
  %v45 = vld [vmem:[%s1 + $0x58] sm:$0xf]
  %v46 = vld [vmem:[%s1 + $0x5c] sm:$0xf]
  %v47 = vld [vmem:[%s1 + $0x60] sm:$0xf]
  %v48 = vld [vmem:[%s1 + $0x64] sm:$0xf]
  %v49 = vld [vmem:[%s1 + $0x68] sm:$0xf]
  %v50 = vld [vmem:[%s1 + $0x6c] sm:$0xf]
  %v51 = vld [vmem:[%s1 + $0x70] sm:$0xf]
  %v52 = vld [vmem:[%s1 + $0x74] sm:$0xf]
  %v53 = vld [vmem:[%s1 + $0x78] sm:$0xf]
  %v54 = vld [vmem:[%s1 + $0x7c] sm:$0xf]
  %v55 = vld [vmem:[%s1 + $0x80] sm:$0xf]
  %v56 = vld [vmem:[%s1 + $0x84] sm:$0xf]
  %v57 = vld [vmem:[%s1 + $0x88] sm:$0xf]
  %v58 = vld [vmem:[%s1 + $0x8c] sm:$0xf]
  %v59 = vld [vmem:[%s1 + $0x90] sm:$0xf]
  %v60 = vld [vmem:[%s1 + $0x94] sm:$0xf]
  %v61 = vld [vmem:[%s1 + $0x98] sm:$0xf]
  %v62 = vld [vmem:[%s1 + $0x9c] sm:$0xf]
  %v63 = vld [vmem:[%s1 + $0xa0] sm:$0xf]
  %v64 = vld [vmem:[%s1 + $0xa4] sm:$0xf]
  %v65 = vld [vmem:[%s1 + $0xa8] sm:$0xf]
  %v66 = vld [vmem:[%s1 + $0xac] sm:$0xf]
  %v67 = vld [vmem:[%s1 + $0xb0] sm:$0xf]
  %v68 = vld [vmem:[%s1 + $0xb4] sm:$0xf]
  %v69 = vld [vmem:[%s1 + $0xb8] sm:$0xf]
  %v70 = vld [vmem:[%s1 + $0xbc] sm:$0xf]
  %v71 = vld [vmem:[%s1 + $0xc0] sm:$0xf]
  %v72 = vld [vmem:[%s1 + $0xc4] sm:$0xf]
  %v73 = vld [vmem:[%s1 + $0xc8] sm:$0xf]
  %v74 = vld [vmem:[%s1 + $0xcc] sm:$0xf]
  %v75 = vld [vmem:[%s1 + $0xd0] sm:$0xf]
  %v76 = vld [vmem:[%s1 + $0xd4] sm:$0xf]
  %v77 = vld [vmem:[%s1 + $0xd8] sm:$0xf]
  %v78 = vld [vmem:[%s1 + $0xdc] sm:$0xf]
  %v79 = vld [vmem:[%s1 + $0xe0] sm:$0xf]
  %v80 = vld [vmem:[%s1 + $0xe4] sm:$0xf]
  %v81 = vld [vmem:[%s1 + $0xe8] sm:$0xf]
  %v82 = vld [vmem:[%s1 + $0xec] sm:$0xf]
  %v83 = vld [vmem:[%s1 + $0xf0] sm:$0xf]
  %v84 = vld [vmem:[%s1 + $0xf4] sm:$0xf]
  %v85 = vld [vmem:[%s1 + $0xf8] sm:$0xf]
  %v86 = vld [vmem:[%s1 + $0xfc] sm:$0xf]
  %v87 = vld [vmem:[%s1 + $0x100] sm:$0xf]
  %v88 = vld [vmem:[%s1 + $0x104] sm:$0xf]
  %v89 = vld [vmem:[%s1 + $0x108] sm:$0xf]
  %v90 = vld [vmem:[%s1 + $0x10c] sm:$0xf]
  %v91 = vld [vmem:[%s1 + $0x110] sm:$0xf]
  %v92 = vld [vmem:[%s1 + $0x114] sm:$0xf]
  %v93 = vld [vmem:[%s1 + $0x118] sm:$0xf]
  %v94 = vld [vmem:[%s1 + $0x11c] sm:$0xf]
  %v95 = vld [vmem:[%s1 + $0x120] sm:$0xf]
  %v96 = vld [vmem:[%s1 + $0x124] sm:$0xf]
  %v97 = vld [vmem:[%s1 + $0x128] sm:$0xf]
  %v98 = vld [vmem:[%s1 + $0x12c] sm:$0xf]
  %v99 = vld [vmem:[%s1 + $0x130] sm:$0xf]
  %v100 = vld [vmem:[%s1 + $0x134] sm:$0xf]
  %v101 = vld [vmem:[%s1 + $0x138] sm:$0xf]
  %v102 = vld [vmem:[%s1 + $0x13c] sm:$0xf]
  %v103 = vld [vmem:[%s1 + $0x140] sm:$0xf]
  %v104 = vld [vmem:[%s1 + $0x144] sm:$0xf]
  %v105 = vld [vmem:[%s1 + $0x148] sm:$0xf]
  %v106 = vld [vmem:[%s1 + $0x14c] sm:$0xf]
  %v107 = vld [vmem:[%s1 + $0x150] sm:$0xf]
  %v108 = vld [vmem:[%s1 + $0x154] sm:$0xf]
  %v109 = vld [vmem:[%s1 + $0x158] sm:$0xf]
  %v110 = vld [vmem:[%s1 + $0x15c] sm:$0xf]
  %v111 = vld [vmem:[%s1 + $0x160] sm:$0xf]
  %v112 = vld [vmem:[%s1 + $0x164] sm:$0xf]
  %v113 = vld [vmem:[%s1 + $0x168] sm:$0xf]
  %v114 = vld [vmem:[%s1 + $0x16c] sm:$0xf]
  %v115 = vld [vmem:[%s1 + $0x170] sm:$0xf]
  %v116 = vld [vmem:[%s1 + $0x174] sm:$0xf]
  %v117 = vld [vmem:[%s1 + $0x178] sm:$0xf]
  %v118 = vld [vmem:[%s1 + $0x17c] sm:$0xf]
  %v119 = vld [vmem:[%s1 + $0x180] sm:$0xf]
  %v120 = vld [vmem:[%s1 + $0x184] sm:$0xf]
  %v121 = vld [vmem:[%s1 + $0x188] sm:$0xf]
  %v122 = vld [vmem:[%s1 + $0x18c] sm:$0xf]
  %v123 = vld [vmem:[%s1 + $0x190] sm:$0xf]
  %v124 = vld [vmem:[%s1 + $0x194] sm:$0xf]
  %v125 = vld [vmem:[%s1 + $0x198] sm:$0xf]
  %v126 = vld [vmem:[%s1 + $0x19c] sm:$0xf]
  %v127 = vld [vmem:[%s1 + $0x1a0] sm:$0xf]
  %v128 = vld [vmem:[%s1 + $0x1a4] sm:$0xf]
  %v129 = vld [vmem:[%s1 + $0x1a8] sm:$0xf]
  %v130 = vld [vmem:[%s1 + $0x1ac] sm:$0xf]
  %v131 = vld [vmem:[%s1 + $0x1b0] sm:$0xf]
  %v132 = vld [vmem:[%s1 + $0x1b4] sm:$0xf]
  %v133 = vld [vmem:[%s1 + $0x1b8] sm:$0xf]
  %v134 = vld [vmem:[%s1 + $0x1bc] sm:$0xf]
  %v135 = vld [vmem:[%s1 + $0x1c0] sm:$0xf]
  %v136 = vld [vmem:[%s1 + $0x1c4] sm:$0xf]
  %v137 = vld [vmem:[%s1 + $0x1c8] sm:$0xf]
  %v138 = vld [vmem:[%s1 + $0x1cc] sm:$0xf]
  %v139 = vld [vmem:[%s1 + $0x1d0] sm:$0xf]
  %v140 = vld [vmem:[%s1 + $0x1d4] sm:$0xf]
  %v141 = vld [vmem:[%s1 + $0x1d8] sm:$0xf]
  %v142 = vld [vmem:[%s1 + $0x1dc] sm:$0xf]
  %v143 = vld [vmem:[%s1 + $0x1e0] sm:$0xf]
  %v144 = vld [vmem:[%s1 + $0x1e4] sm:$0xf]
  %v145 = vld [vmem:[%s1 + $0x1e8] sm:$0xf]
  %v146 = vld [vmem:[%s1 + $0x1ec] sm:$0xf]
  %v147 = vld [vmem:[%s1 + $0x1f0] sm:$0xf]
  %v148 = vld [vmem:[%s1 + $0x1f4] sm:$0xf]
  %v149 = vld [vmem:[%s1 + $0x1f8] sm:$0xf]
  %v150 = vld [vmem:[%s1 + $0x1fc] sm:$0xf]
  %v151 = vld [vmem:[%s2] sm:$0x1]
  %v153 = vlaneseq
  %v154 = vshrl.u32 %v153, 7
  %v155 = vsub.s32 0, %v154
  %v156 = vrot.slane %v151, %v155
  %v166 = vunpack.c.l.b16 %v15
  %v167 = vunpack.c.h.b16 %v15
  %v168 = vunpack.c.l.b16 %v16
  %v169 = vunpack.c.h.b16 %v16
  %v170 = vunpack.c.l.b16 %v17
  %v171 = vunpack.c.h.b16 %v17
  %v172 = vunpack.c.l.b16 %v18
  %v173 = vunpack.c.h.b16 %v18
  %v174 = vunpack.c.l.b16 %v19
  %v175 = vunpack.c.h.b16 %v19
  %v176 = vunpack.c.l.b16 %v20
  %v177 = vunpack.c.h.b16 %v20
  %v178 = vunpack.c.l.b16 %v21
  %v179 = vunpack.c.h.b16 %v21
  %v180 = vunpack.c.l.b16 %v22
  %v181 = vunpack.c.h.b16 %v22
  %v182 = vpack.c.b16 %v174, %v166
  %v183 = vpack.c.b16 %v175, %v167
  %v184 = vpack.c.b16 %v176, %v168
  %v185 = vpack.c.b16 %v177, %v169
  %v186 = vpack.c.b16 %v178, %v170
  %v187 = vpack.c.b16 %v179, %v171
  %v188 = vpack.c.b16 %v180, %v172
  %v189 = vpack.c.b16 %v181, %v173
  %v326 = vunpack.c.l.b16 %v23
  %v327 = vunpack.c.l.b16 %v24
  %v328 = vunpack.c.l.b16 %v25
  %v329 = vunpack.c.l.b16 %v26
  %v330 = vunpack.c.l.b16 %v27
  %v331 = vunpack.c.l.b16 %v28
  %v332 = vunpack.c.l.b16 %v29
  %v333 = vunpack.c.l.b16 %v30
  %v334 = vunpack.c.l.b16 %v31
  %v335 = vunpack.c.l.b16 %v32
  %v336 = vunpack.c.l.b16 %v33
  %v337 = vunpack.c.l.b16 %v34
  %v338 = vunpack.c.l.b16 %v35
  %v339 = vunpack.c.l.b16 %v36
  %v340 = vunpack.c.l.b16 %v37
  %v341 = vunpack.c.l.b16 %v38
  %v342 = vunpack.c.l.b16 %v39
  %v343 = vunpack.c.l.b16 %v40
  %v344 = vunpack.c.l.b16 %v41
  %v345 = vunpack.c.l.b16 %v42
  %v346 = vunpack.c.l.b16 %v43
  %v347 = vunpack.c.l.b16 %v44
  %v348 = vunpack.c.l.b16 %v45
  %v349 = vunpack.c.l.b16 %v46
  %v350 = vunpack.c.l.b16 %v47
  %v351 = vunpack.c.l.b16 %v48
  %v352 = vunpack.c.l.b16 %v49
  %v353 = vunpack.c.l.b16 %v50
  %v354 = vunpack.c.l.b16 %v51
  %v355 = vunpack.c.l.b16 %v52
  %v356 = vunpack.c.l.b16 %v53
  %v357 = vunpack.c.l.b16 %v54
  %v358 = vunpack.c.l.b16 %v55
  %v359 = vunpack.c.l.b16 %v56
  %v360 = vunpack.c.l.b16 %v57
  %v361 = vunpack.c.l.b16 %v58
  %v362 = vunpack.c.l.b16 %v59
  %v363 = vunpack.c.l.b16 %v60
  %v364 = vunpack.c.l.b16 %v61
  %v365 = vunpack.c.l.b16 %v62
  %v366 = vunpack.c.l.b16 %v63
  %v367 = vunpack.c.l.b16 %v64
  %v368 = vunpack.c.l.b16 %v65
  %v369 = vunpack.c.l.b16 %v66
  %v370 = vunpack.c.l.b16 %v67
  %v371 = vunpack.c.l.b16 %v68
  %v372 = vunpack.c.l.b16 %v69
  %v373 = vunpack.c.l.b16 %v70
  %v374 = vunpack.c.l.b16 %v71
  %v375 = vunpack.c.l.b16 %v72
  %v376 = vunpack.c.l.b16 %v73
  %v377 = vunpack.c.l.b16 %v74
  %v378 = vunpack.c.l.b16 %v75
  %v379 = vunpack.c.l.b16 %v76
  %v380 = vunpack.c.l.b16 %v77
  %v381 = vunpack.c.l.b16 %v78
  %v382 = vunpack.c.l.b16 %v79
  %v383 = vunpack.c.l.b16 %v80
  %v384 = vunpack.c.l.b16 %v81
  %v385 = vunpack.c.l.b16 %v82
  %v386 = vunpack.c.l.b16 %v83
  %v387 = vunpack.c.l.b16 %v84
  %v388 = vunpack.c.l.b16 %v85
  %v389 = vunpack.c.l.b16 %v86
  %v390 = vunpack.c.l.b16 %v87
  %v391 = vunpack.c.l.b16 %v88
  %v392 = vunpack.c.l.b16 %v89
  %v393 = vunpack.c.l.b16 %v90
  %v394 = vunpack.c.l.b16 %v91
  %v395 = vunpack.c.l.b16 %v92
  %v396 = vunpack.c.l.b16 %v93
  %v397 = vunpack.c.l.b16 %v94
  %v398 = vunpack.c.l.b16 %v95
  %v399 = vunpack.c.l.b16 %v96
  %v400 = vunpack.c.l.b16 %v97
  %v401 = vunpack.c.l.b16 %v98
  %v402 = vunpack.c.l.b16 %v99
  %v403 = vunpack.c.l.b16 %v100
  %v404 = vunpack.c.l.b16 %v101
  %v405 = vunpack.c.l.b16 %v102
  %v406 = vunpack.c.l.b16 %v103
  %v407 = vunpack.c.l.b16 %v104
  %v408 = vunpack.c.l.b16 %v105
  %v409 = vunpack.c.l.b16 %v106
  %v410 = vunpack.c.l.b16 %v107
  %v411 = vunpack.c.l.b16 %v108
  %v412 = vunpack.c.l.b16 %v109
  %v413 = vunpack.c.l.b16 %v110
  %v414 = vunpack.c.l.b16 %v111
  %v415 = vunpack.c.l.b16 %v112
  %v416 = vunpack.c.l.b16 %v113
  %v417 = vunpack.c.l.b16 %v114
  %v418 = vunpack.c.l.b16 %v115
  %v419 = vunpack.c.l.b16 %v116
  %v420 = vunpack.c.l.b16 %v117
  %v421 = vunpack.c.l.b16 %v118
  %v422 = vunpack.c.l.b16 %v119
  %v423 = vunpack.c.l.b16 %v120
  %v424 = vunpack.c.l.b16 %v121
  %v425 = vunpack.c.l.b16 %v122
  %v426 = vunpack.c.l.b16 %v123
  %v427 = vunpack.c.l.b16 %v124
  %v428 = vunpack.c.l.b16 %v125
  %v429 = vunpack.c.l.b16 %v126
  %v430 = vunpack.c.l.b16 %v127
  %v431 = vunpack.c.l.b16 %v128
  %v432 = vunpack.c.l.b16 %v129
  %v433 = vunpack.c.l.b16 %v130
  %v434 = vunpack.c.l.b16 %v131
  %v435 = vunpack.c.l.b16 %v132
  %v436 = vunpack.c.l.b16 %v133
  %v437 = vunpack.c.l.b16 %v134
  %v438 = vunpack.c.l.b16 %v135
  %v439 = vunpack.c.l.b16 %v136
  %v440 = vunpack.c.l.b16 %v137
  %v441 = vunpack.c.l.b16 %v138
  %v442 = vunpack.c.l.b16 %v139
  %v443 = vunpack.c.l.b16 %v140
  %v444 = vunpack.c.l.b16 %v141
  %v445 = vunpack.c.l.b16 %v142
  %v446 = vunpack.c.l.b16 %v143
  %v447 = vunpack.c.l.b16 %v144
  %v448 = vunpack.c.l.b16 %v145
  %v449 = vunpack.c.l.b16 %v146
  %v450 = vunpack.c.l.b16 %v147
  %v451 = vunpack.c.l.b16 %v148
  %v452 = vunpack.c.l.b16 %v149
  %v453 = vunpack.c.l.b16 %v150
  %v454 = vpack.c.b16 %v327, %v326
  %v455 = vpack.c.b16 %v329, %v328
  %v456 = vpack.c.b16 %v331, %v330
  %v457 = vpack.c.b16 %v333, %v332
  %v458 = vpack.c.b16 %v335, %v334
  %v459 = vpack.c.b16 %v337, %v336
  %v460 = vpack.c.b16 %v339, %v338
  %v461 = vpack.c.b16 %v341, %v340
  %v462 = vpack.c.b16 %v343, %v342
  %v463 = vpack.c.b16 %v345, %v344
  %v464 = vpack.c.b16 %v347, %v346
  %v465 = vpack.c.b16 %v349, %v348
  %v466 = vpack.c.b16 %v351, %v350
  %v467 = vpack.c.b16 %v353, %v352
  %v468 = vpack.c.b16 %v355, %v354
  %v469 = vpack.c.b16 %v357, %v356
  %v470 = vpack.c.b16 %v359, %v358
  %v471 = vpack.c.b16 %v361, %v360
  %v472 = vpack.c.b16 %v363, %v362
  %v473 = vpack.c.b16 %v365, %v364
  %v474 = vpack.c.b16 %v367, %v366
  %v475 = vpack.c.b16 %v369, %v368
  %v476 = vpack.c.b16 %v371, %v370
  %v477 = vpack.c.b16 %v373, %v372
  %v478 = vpack.c.b16 %v375, %v374
  %v479 = vpack.c.b16 %v377, %v376
  %v480 = vpack.c.b16 %v379, %v378
  %v481 = vpack.c.b16 %v381, %v380
  %v482 = vpack.c.b16 %v383, %v382
  %v483 = vpack.c.b16 %v385, %v384
  %v484 = vpack.c.b16 %v387, %v386
  %v485 = vpack.c.b16 %v389, %v388
  %v486 = vpack.c.b16 %v391, %v390
  %v487 = vpack.c.b16 %v393, %v392
  %v488 = vpack.c.b16 %v395, %v394
  %v489 = vpack.c.b16 %v397, %v396
  %v490 = vpack.c.b16 %v399, %v398
  %v491 = vpack.c.b16 %v401, %v400
  %v492 = vpack.c.b16 %v403, %v402
  %v493 = vpack.c.b16 %v405, %v404
  %v494 = vpack.c.b16 %v407, %v406
  %v495 = vpack.c.b16 %v409, %v408
  %v496 = vpack.c.b16 %v411, %v410
  %v497 = vpack.c.b16 %v413, %v412
  %v498 = vpack.c.b16 %v415, %v414
  %v499 = vpack.c.b16 %v417, %v416
  %v500 = vpack.c.b16 %v419, %v418
  %v501 = vpack.c.b16 %v421, %v420
  %v502 = vpack.c.b16 %v423, %v422
  %v503 = vpack.c.b16 %v425, %v424
  %v504 = vpack.c.b16 %v427, %v426
  %v505 = vpack.c.b16 %v429, %v428
  %v506 = vpack.c.b16 %v431, %v430
  %v507 = vpack.c.b16 %v433, %v432
  %v508 = vpack.c.b16 %v435, %v434
  %v509 = vpack.c.b16 %v437, %v436
  %v510 = vpack.c.b16 %v439, %v438
  %v511 = vpack.c.b16 %v441, %v440
  %v512 = vpack.c.b16 %v443, %v442
  %v513 = vpack.c.b16 %v445, %v444
  %v514 = vpack.c.b16 %v447, %v446
  %v515 = vpack.c.b16 %v449, %v448
  %v516 = vpack.c.b16 %v451, %v450
  %v517 = vpack.c.b16 %v453, %v452
  %582 = vmatprep.subr.bf16.mxu0 0
  %583 = vmatpush1.bf16.msra.mxu0 %v461
  %584 = vmatprep.subr.bf16.mxu0 0
  %585 = vmatpush1.bf16.msra.mxu0 %v460
  %586 = vmatprep.subr.bf16.mxu0 0
  %587 = vmatpush1.bf16.msra.mxu0 %v459
  %588 = vmatprep.subr.bf16.mxu0 0
  %589 = vmatpush1.bf16.msra.mxu0 %v458
  %590 = vmatprep.subr.bf16.mxu0 0
  %591 = vmatpush1.bf16.msra.mxu0 %v457
  %592 = vmatprep.subr.bf16.mxu0 0
  %593 = vmatpush1.bf16.msra.mxu0 %v456
  %594 = vmatprep.subr.bf16.mxu0 0
  %595 = vmatpush1.bf16.msra.mxu0 %v455
  %596 = vmatprep.subr.bf16.mxu0 0
  %597 = vmatpush1.bf16.msra.mxu0 %v454
  %598 = vmatprep.subr.bf16.mxu0 0
  %599 = vmatpush2.bf16.msra.mxu0 %v469
  %600 = vmatprep.subr.bf16.mxu0 0
  %601 = vmatpush2.bf16.msra.mxu0 %v468
  %602 = vmatprep.subr.bf16.mxu0 0
  %603 = vmatpush2.bf16.msra.mxu0 %v467
  %604 = vmatprep.subr.bf16.mxu0 0
  %605 = vmatpush2.bf16.msra.mxu0 %v466
  %606 = vmatprep.subr.bf16.mxu0 0
  %607 = vmatpush2.bf16.msra.mxu0 %v465
  %608 = vmatprep.subr.bf16.mxu0 0
  %609 = vmatpush2.bf16.msra.mxu0 %v464
  %610 = vmatprep.subr.bf16.mxu0 0
  %611 = vmatpush2.bf16.msra.mxu0 %v463
  %612 = vmatprep.subr.bf16.mxu0 0
  %613 = vmatpush2.bf16.msra.mxu0 %v462
  %614 = vmatprep.mubr.bf16.mxu0 %v183
  %615 = vmatmul.mubr.bf16.gmra.mxu0 %v182
  %v616 = vpop.f32.mrf.mxu0
  %v617 = vadd.f32 %v156, %v616
  %v618 = vpop.f32.mrf.mxu0
  %v619 = vpop.f32.mrf.mxu0
  %v620 = vadd.f32 %v156, %v619
  %v621 = vpop.f32.mrf.mxu0
  %622 = vdwg.mxu0
  %623 = vmatprep.subr.bf16.mxu0 0
  %624 = vmatpush1.bf16.msra.mxu0 %v477
  %625 = vmatprep.subr.bf16.mxu0 0
  %626 = vmatpush1.bf16.msra.mxu0 %v476
  %627 = vmatprep.subr.bf16.mxu0 0
  %628 = vmatpush1.bf16.msra.mxu0 %v475
  %629 = vmatprep.subr.bf16.mxu0 0
  %630 = vmatpush1.bf16.msra.mxu0 %v474
  %631 = vmatprep.subr.bf16.mxu0 0
  %632 = vmatpush1.bf16.msra.mxu0 %v473
  %633 = vmatprep.subr.bf16.mxu0 0
  %634 = vmatpush1.bf16.msra.mxu0 %v472
  %635 = vmatprep.subr.bf16.mxu0 0
  %636 = vmatpush1.bf16.msra.mxu0 %v471
  %637 = vmatprep.subr.bf16.mxu0 0
  %638 = vmatpush1.bf16.msra.mxu0 %v470
  %639 = vmatprep.subr.bf16.mxu0 0
  %640 = vmatpush2.bf16.msra.mxu0 %v485
  %641 = vmatprep.subr.bf16.mxu0 0
  %642 = vmatpush2.bf16.msra.mxu0 %v484
  %643 = vmatprep.subr.bf16.mxu0 0
  %644 = vmatpush2.bf16.msra.mxu0 %v483
  %645 = vmatprep.subr.bf16.mxu0 0
  %646 = vmatpush2.bf16.msra.mxu0 %v482
  %647 = vmatprep.subr.bf16.mxu0 0
  %648 = vmatpush2.bf16.msra.mxu0 %v481
  %649 = vmatprep.subr.bf16.mxu0 0
  %650 = vmatpush2.bf16.msra.mxu0 %v480
  %651 = vmatprep.subr.bf16.mxu0 0
  %652 = vmatpush2.bf16.msra.mxu0 %v479
  %653 = vmatprep.subr.bf16.mxu0 0
  %654 = vmatpush2.bf16.msra.mxu0 %v478
  %655 = vmatprep.mubr.bf16.mxu0 %v185
  %656 = vmatmul.mubr.bf16.gmra.mxu0 %v184
  %v657 = vpop.f32.mrf.mxu0
  %v658 = vadd.f32 %v617, %v657
  %v659 = vpop.f32.mrf.mxu0
  %v660 = vpop.f32.mrf.mxu0
  %v661 = vadd.f32 %v620, %v660
  %v662 = vpop.f32.mrf.mxu0
  %663 = vdwg.mxu0
  %664 = vmatprep.subr.bf16.mxu0 0
  %665 = vmatpush1.bf16.msra.mxu0 %v493
  %666 = vmatprep.subr.bf16.mxu0 0
  %667 = vmatpush1.bf16.msra.mxu0 %v492
  %668 = vmatprep.subr.bf16.mxu0 0
  %669 = vmatpush1.bf16.msra.mxu0 %v491
  %670 = vmatprep.subr.bf16.mxu0 0
  %671 = vmatpush1.bf16.msra.mxu0 %v490
  %672 = vmatprep.subr.bf16.mxu0 0
  %673 = vmatpush1.bf16.msra.mxu0 %v489
  %674 = vmatprep.subr.bf16.mxu0 0
  %675 = vmatpush1.bf16.msra.mxu0 %v488
  %676 = vmatprep.subr.bf16.mxu0 0
  %677 = vmatpush1.bf16.msra.mxu0 %v487
  %678 = vmatprep.subr.bf16.mxu0 0
  %679 = vmatpush1.bf16.msra.mxu0 %v486
  %680 = vmatprep.subr.bf16.mxu0 0
  %681 = vmatpush2.bf16.msra.mxu0 %v501
  %682 = vmatprep.subr.bf16.mxu0 0
  %683 = vmatpush2.bf16.msra.mxu0 %v500
  %684 = vmatprep.subr.bf16.mxu0 0
  %685 = vmatpush2.bf16.msra.mxu0 %v499
  %686 = vmatprep.subr.bf16.mxu0 0
  %687 = vmatpush2.bf16.msra.mxu0 %v498
  %688 = vmatprep.subr.bf16.mxu0 0
  %689 = vmatpush2.bf16.msra.mxu0 %v497
  %690 = vmatprep.subr.bf16.mxu0 0
  %691 = vmatpush2.bf16.msra.mxu0 %v496
  %692 = vmatprep.subr.bf16.mxu0 0
  %693 = vmatpush2.bf16.msra.mxu0 %v495
  %694 = vmatprep.subr.bf16.mxu0 0
  %695 = vmatpush2.bf16.msra.mxu0 %v494
  %696 = vmatprep.mubr.bf16.mxu0 %v187
  %697 = vmatmul.mubr.bf16.gmra.mxu0 %v186
  %v698 = vpop.f32.mrf.mxu0
  %v699 = vadd.f32 %v658, %v698
  %v700 = vpop.f32.mrf.mxu0
  %v701 = vpop.f32.mrf.mxu0
  %v702 = vadd.f32 %v661, %v701
  %v703 = vpop.f32.mrf.mxu0
  %704 = vdwg.mxu0
  %705 = vmatprep.subr.bf16.mxu0 0
  %706 = vmatpush1.bf16.msra.mxu0 %v509
  %707 = vmatprep.subr.bf16.mxu0 0
  %708 = vmatpush1.bf16.msra.mxu0 %v508
  %709 = vmatprep.subr.bf16.mxu0 0
  %710 = vmatpush1.bf16.msra.mxu0 %v507
  %711 = vmatprep.subr.bf16.mxu0 0
  %712 = vmatpush1.bf16.msra.mxu0 %v506
  %713 = vmatprep.subr.bf16.mxu0 0
  %714 = vmatpush1.bf16.msra.mxu0 %v505
  %715 = vmatprep.subr.bf16.mxu0 0
  %716 = vmatpush1.bf16.msra.mxu0 %v504
  %717 = vmatprep.subr.bf16.mxu0 0
  %718 = vmatpush1.bf16.msra.mxu0 %v503
  %719 = vmatprep.subr.bf16.mxu0 0
  %720 = vmatpush1.bf16.msra.mxu0 %v502
  %721 = vmatprep.subr.bf16.mxu0 0
  %722 = vmatpush2.bf16.msra.mxu0 %v517
  %723 = vmatprep.subr.bf16.mxu0 0
  %724 = vmatpush2.bf16.msra.mxu0 %v516
  %725 = vmatprep.subr.bf16.mxu0 0
  %726 = vmatpush2.bf16.msra.mxu0 %v515
  %727 = vmatprep.subr.bf16.mxu0 0
  %728 = vmatpush2.bf16.msra.mxu0 %v514
  %729 = vmatprep.subr.bf16.mxu0 0
  %730 = vmatpush2.bf16.msra.mxu0 %v513
  %731 = vmatprep.subr.bf16.mxu0 0
  %732 = vmatpush2.bf16.msra.mxu0 %v512
  %733 = vmatprep.subr.bf16.mxu0 0
  %734 = vmatpush2.bf16.msra.mxu0 %v511
  %735 = vmatprep.subr.bf16.mxu0 0
  %736 = vmatpush2.bf16.msra.mxu0 %v510
  %737 = vmatprep.mubr.bf16.mxu0 %v189
  %738 = vmatmul.mubr.bf16.gmra.mxu0 %v188
  %v739 = vpop.f32.mrf.mxu0
  %v740 = vadd.f32 %v699, %v739
  %v741 = vpop.f32.mrf.mxu0
  %v742 = vpop.f32.mrf.mxu0
  %v743 = vadd.f32 %v702, %v742
  %v744 = vpop.f32.mrf.mxu0
  %745 = vdwg.mxu0
  %746 = vst [vmem:[%s3] sm:$0xff] %v740
  %747 = vst [vmem:[%s3 + $0x8] sm:$0xff] %v743
  // Predicated region
  $region14: #{_lambda_.9} parent=0 // pred_check
    _
  $region15: #{_lambda_.9} parent=0 // pred_check_branch
    %749 = sbr.rel (0) target = $region17
  $region16: #{_lambda_.9} parent=0 // pred_region
    _
  $region17: #{_lambda_.9} parent=0 // pred_fallthru
    _
  // Predicated region
  $region18: #{_lambda_.9} parent=0 // pred_check
    _
  $region19: #{_lambda_.9} parent=0 // pred_check_branch
    %751 = sbr.rel (0) target = $region21
  $region20: #{_lambda_.9} parent=0 // pred_region
    _
  $region21: #{_lambda_.9} parent=0 // pred_fallthru
    _

</llo_original>
